<compile_context>
chip_gen: v6e
topology: v6e:2x2x1
jax: 0.10.0
libtpu: 0.0.40
codegen_flags: <defaults>
</compile_context>

<pallas_src>
import numpy as np
import jax
import jax.numpy as jnp
from jax.experimental import pallas as pl
from jax.experimental.pallas import tpu as pltpu

HEAD_PAD = 128  # lane-dense head output width (sliced back to 5 in the wrapper)


# ----------------------------------------------------------------------------
# Kernel 1: all five GINEConv layers fused (gather + ReLU msg + scatter-sum + MLP)
# ----------------------------------------------------------------------------
def gine_stack_kernel(x_ref, src_ref, dst_ref, eattr_ref,
                      weT_ref, beT_ref, w1T_ref, b1T_ref, w2T_ref, b2T_ref,
                      eps_ref, out_ref):
    # x_ref:   [N, D]      node features
    # src_ref: [E, 1] i32  source node per edge      dst_ref: [1, E] i32 destination
    # eattr_ref: [E, 1]    edge attributes (edge_dim = 1)
    # weT/beT: [5, 1, D]   edge Linear(1, D) weights/bias, pre-transposed
    # w1T/b1T: [5, D, D]/[5, 1, D]  conv MLP Linear1 with BatchNorm folded in
    # w2T/b2T: [5, D, D]/[5, 1, D]  conv MLP Linear2
    # eps_ref: [5] f32 in SMEM
    # out_ref: [5, N, D]   per-layer outputs (the "concat" consumed by the head)
    N, D = x_ref.shape
    E = src_ref.shape[0]

    # Build gather / scatter one-hots ONCE from indices (no O(E*N) HBM traffic).
    node_ids_lane = jax.lax.broadcasted_iota(jnp.int32, (E, N), 1)
    src_oh = (node_ids_lane == src_ref[...]).astype(jnp.float32)       # [E, N]
    node_ids_sub = jax.lax.broadcasted_iota(jnp.int32, (N, E), 0)
    dstT_oh = (node_ids_sub == dst_ref[...]).astype(jnp.float32)       # [N, E]
    # (v6e: cast src_oh/dstT_oh + features to bf16 for 2x MXU rate; v7x: bf16/fp8.)

    eattr = eattr_ref[...]                                             # [E, 1]
    h = x_ref[...]                                                     # resident in VMEM

    for li in range(5):
        # gather x_j = x[src]  (one-hot matmul on the MXU)
        x_j = jnp.dot(src_oh, h, preferred_element_type=jnp.float32)   # [E, D]
        # edge embedding: Linear(1, D)
        e_emb = eattr * weT_ref[li] + beT_ref[li]                      # [E, D]
        msg = jnp.maximum(x_j + e_emb, 0.0)                            # ReLU message
        # scatter-sum to destination nodes
        agg = jnp.dot(dstT_oh, msg, preferred_element_type=jnp.float32)  # [N, D]
        z = (1.0 + eps_ref[li]) * h + agg
        # nn = Linear(+folded BN) -> ReLU -> Linear -> ReLU
        t = jnp.dot(z, w1T_ref[li], preferred_element_type=jnp.float32) + b1T_ref[li]
        t = jnp.maximum(t, 0.0)
        t = jnp.dot(t, w2T_ref[li], preferred_element_type=jnp.float32) + b2T_ref[li]
        h = jnp.maximum(t, 0.0)
        out_ref[li] = h                                                # layer li slab


# ----------------------------------------------------------------------------
# Kernel 2: vectorized global_max_pool per graph + lin1 -> ReLU -> (dropout) -> lin2
# ----------------------------------------------------------------------------
def head_kernel(hcat_ref, bias_ref, wl1T_ref, bl1_ref, wl2T_ref, bl2_ref, out_ref):
    # hcat_ref: [5, N, D];  bias_ref: [G, N, 1] additive mask (0 in-graph, -inf off-graph)
    # wl1T_ref: [5, D, 4D] (lin1 weight split per layer block); bl1: [1, 4D]
    # wl2T_ref: [4D, 128] zero-padded;  bl2: [1, 128] zero-padded;  out_ref: [G, 128]
    n_layers = hcat_ref.shape[0]
    bias = bias_ref[...]                                               # [G, N, 1]
    acc = None
    for l in range(n_layers):
        h_l = hcat_ref[l]                                              # [N, D]
        # vectorized masked max pool over nodes for ALL graphs at once
        pooled = jnp.max(h_l[None, :, :] + bias, axis=1)               # [G, D]
        part = jnp.dot(pooled, wl1T_ref[l], preferred_element_type=jnp.float32)
        acc = part if acc is None else acc + part
    z = jnp.maximum(acc + bl1_ref[...], 0.0)                           # lin1 + ReLU
    # TODO(synk): dropout(p=0.5) is identity (inference); training-mode stochastic
    # dropout via pltpu.prng_* intentionally omitted.
    out_ref[...] = jnp.dot(z, wl2T_ref[...], preferred_element_type=jnp.float32) + bl2_ref[...]


# ----------------------------------------------------------------------------
# Parameter preparation (done once, outside the kernels): BN folding, transposes,
# per-layer stacking, lane-dense padding of the head output projection.
# ----------------------------------------------------------------------------
def prepare_params(params, dim_h):
    convs = params["convs"]
    weT = jnp.stack([c["we"].T for c in convs])                        # [5, 1, D]
    beT = jnp.stack([c["be"][None, :] for c in convs])                 # [5, 1, D]
    eps = jnp.stack([c["eps"] for c in convs]).astype(jnp.float32)     # [5]
    w1T_l, b1T_l, w2T_l, b2T_l = [], [], [], []
    for c in convs:
        scale = c["gamma"] * jax.lax.rsqrt(c["var"] + 1e-5)            # BN (eval) fold
        w1T_l.append(c["w1"].T * scale[None, :])
        b1T_l.append(((c["b1"] - c["mean"]) * scale + c["beta"])[None, :])
        w2T_l.append(c["w2"].T)
        b2T_l.append(c["b2"][None, :])
    w1T = jnp.stack(w1T_l)                                             # [5, D, D]
    b1T = jnp.stack(b1T_l)                                             # [5, 1, D]
    w2T = jnp.stack(w2T_l)                                             # [5, D, D]
    b2T = jnp.stack(b2T_l)                                             # [5, 1, D]
    wl1T = params["wl1"].T.reshape(5, dim_h, 4 * dim_h)                # [5, D, 4D]
    bl1 = params["bl1"][None, :]                                       # [1, 4D]
    wl2T = params["wl2"].T                                             # [4D, 5]
    pad = HEAD_PAD - wl2T.shape[1]
    wl2T_pad = jnp.pad(wl2T, ((0, 0), (0, pad)))                       # [4D, 128]
    bl2_pad = jnp.pad(params["bl2"], (0, pad))[None, :]                # [1, 128]
    return dict(weT=weT, beT=beT, eps=eps, w1T=w1T, b1T=b1T, w2T=w2T, b2T=b2T,
                wl1T=wl1T, bl1=bl1, wl2T_pad=wl2T_pad, bl2_pad=bl2_pad)


# ----------------------------------------------------------------------------
# Full model
# ----------------------------------------------------------------------------
def gine_forward(x, edge_index, edge_attr, batch, prep, num_graphs):
    N, D = x.shape
    E = edge_attr.shape[0]
    src_col = edge_index[0].astype(jnp.int32).reshape(E, 1)
    dst_row = edge_index[1].astype(jnp.int32).reshape(1, E)

    vspec = pl.BlockSpec(memory_space=pltpu.MemorySpace.VMEM)
    sspec = pl.BlockSpec(memory_space=pltpu.MemorySpace.SMEM)

    # --- fused 5-layer GINEConv stack ---
    hstack = pl.pallas_call(
        gine_stack_kernel,
        out_shape=jax.ShapeDtypeStruct((5, N, D), jnp.float32),
        in_specs=[vspec] * 10 + [sspec],
        out_specs=vspec,
    )(x, src_col, dst_row, edge_attr,
      prep["weT"], prep["beT"], prep["w1T"], prep["b1T"],
      prep["w2T"], prep["b2T"], prep["eps"])

    # --- pooling bias (0 for own graph, -inf otherwise); built once in the wrapper ---
    # NOTE: a graph with zero nodes would pool to -inf (same caveat as PyG).
    member = batch[None, :] == jnp.arange(num_graphs, dtype=batch.dtype)[:, None]  # [G, N]
    pool_bias = jnp.where(member, 0.0, -jnp.inf).astype(jnp.float32)[:, :, None]   # [G, N, 1]

    # --- pooled head (lane-dense padded output, sliced to 5 classes) ---
    out_pad = pl.pallas_call(
        head_kernel,
        out_shape=jax.ShapeDtypeStruct((num_graphs, HEAD_PAD), jnp.float32),
        in_specs=[vspec] * 6,
        out_specs=vspec,
    )(hstack, pool_bias, prep["wl1T"], prep["bl1"], prep["wl2T_pad"], prep["bl2_pad"])
    return out_pad[:, :5]


gine_forward_jit = jax.jit(gine_forward, static_argnums=(5,))


# ----------------------------------------------------------------------------
# Pure-JAX reference (unfused, BN not folded) for the correctness check
# ----------------------------------------------------------------------------
def gine_conv_ref(x, src, dst, eattr, p):
    x_j = x[src]
    e_emb = eattr @ p["we"].T + p["be"]
    msg = jnp.maximum(x_j + e_emb, 0.0)
    agg = jnp.zeros_like(x).at[dst].add(msg)
    z = (1.0 + p["eps"]) * x + agg
    h = z @ p["w1"].T + p["b1"]
    h = (h - p["mean"]) / jnp.sqrt(p["var"] + 1e-5) * p["gamma"] + p["beta"]
    h = jnp.maximum(h, 0.0)
    return jnp.maximum(h @ p["w2"].T + p["b2"], 0.0)


def gine_forward_ref(x, edge_index, edge_attr, batch, params, num_graphs):
    src, dst = edge_index[0], edge_index[1]
    h = x
    hs = []
    for li in range(5):
        h = gine_conv_ref(h, src, dst, edge_attr, params["convs"][li])
        hs.append(h)
    mask = batch[:, None] == jnp.arange(num_graphs)[None, :]              # [N, G]
    pooled = []
    for hh in hs:
        m = jnp.where(mask.T[:, :, None], hh[None, :, :], -jnp.inf)       # [G, N, D]
        pooled.append(jnp.max(m, axis=1))
    hcat = jnp.concatenate(pooled, axis=1)
    z = jnp.maximum(hcat @ params["wl1"].T + params["bl1"], 0.0)
    return z @ params["wl2"].T + params["bl2"]


# ----------------------------------------------------------------------------
# Deterministic parameter init (matches the PyTorch module structure)
# ----------------------------------------------------------------------------
def init_params(key, dim_h):
    keys = jax.random.split(key, 64)
    ki = iter(range(64))

    def lin(out_f, in_f):
        w = 0.1 * jax.random.normal(keys[next(ki)], (out_f, in_f), jnp.float32)
        b = 0.05 * jax.random.normal(keys[next(ki)], (out_f,), jnp.float32)
        return w, b

    convs = []
    for _ in range(5):
        we, be = lin(dim_h, 1)          # GINEConv edge Linear(edge_dim=1, dim_h)
        w1, b1 = lin(dim_h, dim_h)      # nn Linear 1
        w2, b2 = lin(dim_h, dim_h)      # nn Linear 2
        convs.append(dict(
            we=we, be=be, eps=jnp.float32(0.0),          # train_eps=True, init 0
            w1=w1, b1=b1,
            gamma=jnp.ones((dim_h,), jnp.float32),       # BatchNorm1d running stats
            beta=jnp.zeros((dim_h,), jnp.float32),
            mean=jnp.zeros((dim_h,), jnp.float32),
            var=jnp.ones((dim_h,), jnp.float32),
            w2=w2, b2=b2))
    wl1, bl1 = lin(dim_h * 4, dim_h * 5)
    wl2, bl2 = lin(5, dim_h * 4)
    return dict(convs=convs, wl1=wl1, bl1=bl1, wl2=wl2, bl2=bl2)


if __name__ == "__main__":
    dim_h = 32
    N = 16          # nodes
    E = 32          # edges
    G = 2           # graphs in the batch

    key = jax.random.PRNGKey(0)
    k_x, k_ei, k_ea, k_p = jax.random.split(key, 4)

    x = jax.random.normal(k_x, (N, dim_h), jnp.float32)
    edge_index = jax.random.randint(k_ei, (2, E), 0, N, jnp.int32)
    edge_attr = jax.random.normal(k_ea, (E, 1), jnp.float32)
    batch = jnp.concatenate([jnp.zeros((N // 2,), jnp.int32),
                             jnp.ones((N - N // 2,), jnp.int32)])

    params = init_params(k_p, dim_h)
    prep = prepare_params(params, dim_h)     # BN fold / transpose / stack, done once

    out = gine_forward_jit(x, edge_index, edge_attr, batch, prep, G)
    out = jax.block_until_ready(out)

    ref = gine_forward_ref(x, edge_index, edge_attr, batch, params, G)
    np.testing.assert_allclose(np.asarray(out), np.asarray(ref), rtol=1e-2, atol=1e-2)

    assert out.shape == (G, 5)
    print("KERNEL_OK")
</pallas_src>

<mosaic_0001>
module attributes {stable_mosaic.version = 11 : i64} {
  func.func @gine_stack_kernel(%arg0: memref<16x32xf32, #tpu.memory_space<vmem>>, %arg1: memref<32x1xi32, #tpu.memory_space<vmem>>, %arg2: memref<1x32xi32, #tpu.memory_space<vmem>>, %arg3: memref<32x1xf32, #tpu.memory_space<vmem>>, %arg4: memref<5x1x32xf32, #tpu.memory_space<vmem>>, %arg5: memref<5x1x32xf32, #tpu.memory_space<vmem>>, %arg6: memref<5x32x32xf32, #tpu.memory_space<vmem>>, %arg7: memref<5x1x32xf32, #tpu.memory_space<vmem>>, %arg8: memref<5x32x32xf32, #tpu.memory_space<vmem>>, %arg9: memref<5x1x32xf32, #tpu.memory_space<vmem>>, %arg10: memref<5xf32, #tpu.memory_space<smem>>, %arg11: memref<5x16x32xf32, #tpu.memory_space<vmem>>) attributes {dimension_semantics = [], scalar_prefetch = 0 : i64, scratch_operands = 0 : i64, tpu.core_type = #tpu.core_type<tc>} {
    %0 = tpu.iota {dimensions = array<i32: 1>} : vector<32x16xi32>
    %c0 = arith.constant 0 : index
    %c0_0 = arith.constant 0 : index
    %1 = vector.load %arg1[%c0, %c0_0] : memref<32x1xi32, #tpu.memory_space<vmem>>, vector<32x1xi32>
    %2 = vector.broadcast %1 : vector<32x1xi32> to vector<32x16xi32>
    %3 = arith.cmpi eq, %0, %2 : vector<32x16xi32>
    %4 = arith.extui %3 : vector<32x16xi1> to vector<32x16xi32>
    %5 = arith.sitofp %4 : vector<32x16xi32> to vector<32x16xf32>
    %6 = tpu.iota {dimensions = array<i32: 0>} : vector<16x32xi32>
    %c0_1 = arith.constant 0 : index
    %c0_2 = arith.constant 0 : index
    %7 = vector.load %arg2[%c0_1, %c0_2] : memref<1x32xi32, #tpu.memory_space<vmem>>, vector<1x32xi32>
    %8 = vector.broadcast %7 : vector<1x32xi32> to vector<16x32xi32>
    %9 = arith.cmpi eq, %6, %8 : vector<16x32xi32>
    %10 = arith.extui %9 : vector<16x32xi1> to vector<16x32xi32>
    %11 = arith.sitofp %10 : vector<16x32xi32> to vector<16x32xf32>
    %c0_3 = arith.constant 0 : index
    %c0_4 = arith.constant 0 : index
    %12 = vector.load %arg3[%c0_3, %c0_4] : memref<32x1xf32, #tpu.memory_space<vmem>>, vector<32x1xf32>
    %c0_5 = arith.constant 0 : index
    %c0_6 = arith.constant 0 : index
    %13 = vector.load %arg0[%c0_5, %c0_6] : memref<16x32xf32, #tpu.memory_space<vmem>>, vector<16x32xf32>
    %cst = arith.constant dense<0.000000e+00> : vector<32x32xf32>
    %14 = tpu.matmul %5, %13, %cst {dimension_numbers = #tpu.dot_dimension_numbers<[1], [0], [0], [1], [0, 0, 1, 1], [], []>} : vector<32x16xf32>, vector<16x32xf32>, vector<32x32xf32> -> vector<32x32xf32>
    %c0_7 = arith.constant 0 : index
    %c0_8 = arith.constant 0 : index
    %c0_9 = arith.constant 0 : index
    %15 = vector.load %arg4[%c0_7, %c0_8, %c0_9] : memref<5x1x32xf32, #tpu.memory_space<vmem>>, vector<1x1x32xf32>
    %16 = vector.shape_cast %15 : vector<1x1x32xf32> to vector<1x32xf32>
    %17 = vector.broadcast %12 : vector<32x1xf32> to vector<32x32xf32>
    %18 = vector.broadcast %16 : vector<1x32xf32> to vector<32x32xf32>
    %19 = arith.mulf %17, %18 : vector<32x32xf32>
    %c0_10 = arith.constant 0 : index
    %c0_11 = arith.constant 0 : index
    %c0_12 = arith.constant 0 : index
    %20 = vector.load %arg5[%c0_10, %c0_11, %c0_12] : memref<5x1x32xf32, #tpu.memory_space<vmem>>, vector<1x1x32xf32>
    %21 = vector.shape_cast %20 : vector<1x1x32xf32> to vector<1x32xf32>
    %22 = vector.broadcast %21 : vector<1x32xf32> to vector<32x32xf32>
    %23 = arith.addf %19, %22 : vector<32x32xf32>
    %24 = arith.addf %14, %23 : vector<32x32xf32>
    %cst_13 = arith.constant 0.000000e+00 : f32
    %25 = vector.broadcast %cst_13 : f32 to vector<32x32xf32>
    %26 = arith.maximumf %24, %25 : vector<32x32xf32>
    %cst_14 = arith.constant dense<0.000000e+00> : vector<16x32xf32>
    %27 = tpu.matmul %11, %26, %cst_14 {dimension_numbers = #tpu.dot_dimension_numbers<[1], [0], [0], [1], [0, 0, 1, 1], [], []>} : vector<16x32xf32>, vector<32x32xf32>, vector<16x32xf32> -> vector<16x32xf32>
    %c0_15 = arith.constant 0 : index
    %28 = memref.load %arg10[%c0_15] : memref<5xf32, #tpu.memory_space<smem>>
    %cst_16 = arith.constant 1.000000e+00 : f32
    %29 = arith.addf %cst_16, %28 : f32
    %30 = vector.broadcast %29 : f32 to vector<16x32xf32>
    %31 = arith.mulf %30, %13 : vector<16x32xf32>
    %32 = arith.addf %31, %27 : vector<16x32xf32>
    %c0_17 = arith.constant 0 : index
    %c0_18 = arith.constant 0 : index
    %c0_19 = arith.constant 0 : index
    %33 = vector.load %arg6[%c0_17, %c0_18, %c0_19] : memref<5x32x32xf32, #tpu.memory_space<vmem>>, vector<1x32x32xf32>
    %34 = vector.shape_cast %33 : vector<1x32x32xf32> to vector<32x32xf32>
    %cst_20 = arith.constant dense<0.000000e+00> : vector<16x32xf32>
    %35 = tpu.matmul %32, %34, %cst_20 {dimension_numbers = #tpu.dot_dimension_numbers<[1], [0], [0], [1], [0, 0, 1, 1], [], []>} : vector<16x32xf32>, vector<32x32xf32>, vector<16x32xf32> -> vector<16x32xf32>
    %c0_21 = arith.constant 0 : index
    %c0_22 = arith.constant 0 : index
    %c0_23 = arith.constant 0 : index
    %36 = vector.load %arg7[%c0_21, %c0_22, %c0_23] : memref<5x1x32xf32, #tpu.memory_space<vmem>>, vector<1x1x32xf32>
    %37 = vector.shape_cast %36 : vector<1x1x32xf32> to vector<1x32xf32>
    %38 = vector.broadcast %37 : vector<1x32xf32> to vector<16x32xf32>
    %39 = arith.addf %35, %38 : vector<16x32xf32>
    %cst_24 = arith.constant 0.000000e+00 : f32
    %40 = vector.broadcast %cst_24 : f32 to vector<16x32xf32>
    %41 = arith.maximumf %39, %40 : vector<16x32xf32>
    %c0_25 = arith.constant 0 : index
    %c0_26 = arith.constant 0 : index
    %c0_27 = arith.constant 0 : index
    %42 = vector.load %arg8[%c0_25, %c0_26, %c0_27] : memref<5x32x32xf32, #tpu.memory_space<vmem>>, vector<1x32x32xf32>
    %43 = vector.shape_cast %42 : vector<1x32x32xf32> to vector<32x32xf32>
    %cst_28 = arith.constant dense<0.000000e+00> : vector<16x32xf32>
    %44 = tpu.matmul %41, %43, %cst_28 {dimension_numbers = #tpu.dot_dimension_numbers<[1], [0], [0], [1], [0, 0, 1, 1], [], []>} : vector<16x32xf32>, vector<32x32xf32>, vector<16x32xf32> -> vector<16x32xf32>
    %c0_29 = arith.constant 0 : index
    %c0_30 = arith.constant 0 : index
    %c0_31 = arith.constant 0 : index
    %45 = vector.load %arg9[%c0_29, %c0_30, %c0_31] : memref<5x1x32xf32, #tpu.memory_space<vmem>>, vector<1x1x32xf32>
    %46 = vector.shape_cast %45 : vector<1x1x32xf32> to vector<1x32xf32>
    %47 = vector.broadcast %46 : vector<1x32xf32> to vector<16x32xf32>
    %48 = arith.addf %44, %47 : vector<16x32xf32>
    %cst_32 = arith.constant 0.000000e+00 : f32
    %49 = vector.broadcast %cst_32 : f32 to vector<16x32xf32>
    %50 = arith.maximumf %48, %49 : vector<16x32xf32>
    %c0_33 = arith.constant 0 : index
    %c0_34 = arith.constant 0 : index
    %c0_35 = arith.constant 0 : index
    %51 = vector.load %arg11[%c0_33, %c0_34, %c0_35] : memref<5x16x32xf32, #tpu.memory_space<vmem>>, vector<1x16x32xf32>
    %52 = vector.shape_cast %51 : vector<1x16x32xf32> to vector<16x32xf32>
    %53 = vector.shape_cast %50 : vector<16x32xf32> to vector<1x16x32xf32>
    tpu.vector_store %arg11[%c0_33, %c0_34, %c0_35], %53 {strides = array<i32>} : memref<5x16x32xf32, #tpu.memory_space<vmem>>, vector<1x16x32xf32>,
    %cst_36 = arith.constant dense<0.000000e+00> : vector<32x32xf32>
    %54 = tpu.matmul %5, %50, %cst_36 {dimension_numbers = #tpu.dot_dimension_numbers<[1], [0], [0], [1], [0, 0, 1, 1], [], []>} : vector<32x16xf32>, vector<16x32xf32>, vector<32x32xf32> -> vector<32x32xf32>
    %c1 = arith.constant 1 : index
    %c0_37 = arith.constant 0 : index
    %c0_38 = arith.constant 0 : index
    %55 = vector.load %arg4[%c1, %c0_37, %c0_38] : memref<5x1x32xf32, #tpu.memory_space<vmem>>, vector<1x1x32xf32>
    %56 = vector.shape_cast %55 : vector<1x1x32xf32> to vector<1x32xf32>
    %57 = vector.broadcast %12 : vector<32x1xf32> to vector<32x32xf32>
    %58 = vector.broadcast %56 : vector<1x32xf32> to vector<32x32xf32>
    %59 = arith.mulf %57, %58 : vector<32x32xf32>
    %c1_39 = arith.constant 1 : index
    %c0_40 = arith.constant 0 : index
    %c0_41 = arith.constant 0 : index
    %60 = vector.load %arg5[%c1_39, %c0_40, %c0_41] : memref<5x1x32xf32, #tpu.memory_space<vmem>>, vector<1x1x32xf32>
    %61 = vector.shape_cast %60 : vector<1x1x32xf32> to vector<1x32xf32>
    %62 = vector.broadcast %61 : vector<1x32xf32> to vector<32x32xf32>
    %63 = arith.addf %59, %62 : vector<32x32xf32>
    %64 = arith.addf %54, %63 : vector<32x32xf32>
    %cst_42 = arith.constant 0.000000e+00 : f32
    %65 = vector.broadcast %cst_42 : f32 to vector<32x32xf32>
    %66 = arith.maximumf %64, %65 : vector<32x32xf32>
    %cst_43 = arith.constant dense<0.000000e+00> : vector<16x32xf32>
    %67 = tpu.matmul %11, %66, %cst_43 {dimension_numbers = #tpu.dot_dimension_numbers<[1], [0], [0], [1], [0, 0, 1, 1], [], []>} : vector<16x32xf32>, vector<32x32xf32>, vector<16x32xf32> -> vector<16x32xf32>
    %c1_44 = arith.constant 1 : index
    %68 = memref.load %arg10[%c1_44] : memref<5xf32, #tpu.memory_space<smem>>
    %cst_45 = arith.constant 1.000000e+00 : f32
    %69 = arith.addf %cst_45, %68 : f32
    %70 = vector.broadcast %69 : f32 to vector<16x32xf32>
    %71 = arith.mulf %70, %50 : vector<16x32xf32>
    %72 = arith.addf %71, %67 : vector<16x32xf32>
    %c1_46 = arith.constant 1 : index
    %c0_47 = arith.constant 0 : index
    %c0_48 = arith.constant 0 : index
    %73 = vector.load %arg6[%c1_46, %c0_47, %c0_48] : memref<5x32x32xf32, #tpu.memory_space<vmem>>, vector<1x32x32xf32>
    %74 = vector.shape_cast %73 : vector<1x32x32xf32> to vector<32x32xf32>
    %cst_49 = arith.constant dense<0.000000e+00> : vector<16x32xf32>
    %75 = tpu.matmul %72, %74, %cst_49 {dimension_numbers = #tpu.dot_dimension_numbers<[1], [0], [0], [1], [0, 0, 1, 1], [], []>} : vector<16x32xf32>, vector<32x32xf32>, vector<16x32xf32> -> vector<16x32xf32>
    %c1_50 = arith.constant 1 : index
    %c0_51 = arith.constant 0 : index
    %c0_52 = arith.constant 0 : index
    %76 = vector.load %arg7[%c1_50, %c0_51, %c0_52] : memref<5x1x32xf32, #tpu.memory_space<vmem>>, vector<1x1x32xf32>
    %77 = vector.shape_cast %76 : vector<1x1x32xf32> to vector<1x32xf32>
    %78 = vector.broadcast %77 : vector<1x32xf32> to vector<16x32xf32>
    %79 = arith.addf %75, %78 : vector<16x32xf32>
    %cst_53 = arith.constant 0.000000e+00 : f32
    %80 = vector.broadcast %cst_53 : f32 to vector<16x32xf32>
    %81 = arith.maximumf %79, %80 : vector<16x32xf32>
    %c1_54 = arith.constant 1 : index
    %c0_55 = arith.constant 0 : index
    %c0_56 = arith.constant 0 : index
    %82 = vector.load %arg8[%c1_54, %c0_55, %c0_56] : memref<5x32x32xf32, #tpu.memory_space<vmem>>, vector<1x32x32xf32>
    %83 = vector.shape_cast %82 : vector<1x32x32xf32> to vector<32x32xf32>
    %cst_57 = arith.constant dense<0.000000e+00> : vector<16x32xf32>
    %84 = tpu.matmul %81, %83, %cst_57 {dimension_numbers = #tpu.dot_dimension_numbers<[1], [0], [0], [1], [0, 0, 1, 1], [], []>} : vector<16x32xf32>, vector<32x32xf32>, vector<16x32xf32> -> vector<16x32xf32>
    %c1_58 = arith.constant 1 : index
    %c0_59 = arith.constant 0 : index
    %c0_60 = arith.constant 0 : index
    %85 = vector.load %arg9[%c1_58, %c0_59, %c0_60] : memref<5x1x32xf32, #tpu.memory_space<vmem>>, vector<1x1x32xf32>
    %86 = vector.shape_cast %85 : vector<1x1x32xf32> to vector<1x32xf32>
    %87 = vector.broadcast %86 : vector<1x32xf32> to vector<16x32xf32>
    %88 = arith.addf %84, %87 : vector<16x32xf32>
    %cst_61 = arith.constant 0.000000e+00 : f32
    %89 = vector.broadcast %cst_61 : f32 to vector<16x32xf32>
    %90 = arith.maximumf %88, %89 : vector<16x32xf32>
    %c1_62 = arith.constant 1 : index
    %c0_63 = arith.constant 0 : index
    %c0_64 = arith.constant 0 : index
    %91 = vector.load %arg11[%c1_62, %c0_63, %c0_64] : memref<5x16x32xf32, #tpu.memory_space<vmem>>, vector<1x16x32xf32>
    %92 = vector.shape_cast %91 : vector<1x16x32xf32> to vector<16x32xf32>
    %93 = vector.shape_cast %90 : vector<16x32xf32> to vector<1x16x32xf32>
    tpu.vector_store %arg11[%c1_62, %c0_63, %c0_64], %93 {strides = array<i32>} : memref<5x16x32xf32, #tpu.memory_space<vmem>>, vector<1x16x32xf32>,
    %cst_65 = arith.constant dense<0.000000e+00> : vector<32x32xf32>
    %94 = tpu.matmul %5, %90, %cst_65 {dimension_numbers = #tpu.dot_dimension_numbers<[1], [0], [0], [1], [0, 0, 1, 1], [], []>} : vector<32x16xf32>, vector<16x32xf32>, vector<32x32xf32> -> vector<32x32xf32>
    %c2 = arith.constant 2 : index
    %c0_66 = arith.constant 0 : index
    %c0_67 = arith.constant 0 : index
    %95 = vector.load %arg4[%c2, %c0_66, %c0_67] : memref<5x1x32xf32, #tpu.memory_space<vmem>>, vector<1x1x32xf32>
    %96 = vector.shape_cast %95 : vector<1x1x32xf32> to vector<1x32xf32>
    %97 = vector.broadcast %12 : vector<32x1xf32> to vector<32x32xf32>
    %98 = vector.broadcast %96 : vector<1x32xf32> to vector<32x32xf32>
    %99 = arith.mulf %97, %98 : vector<32x32xf32>
    %c2_68 = arith.constant 2 : index
    %c0_69 = arith.constant 0 : index
    %c0_70 = arith.constant 0 : index
    %100 = vector.load %arg5[%c2_68, %c0_69, %c0_70] : memref<5x1x32xf32, #tpu.memory_space<vmem>>, vector<1x1x32xf32>
    %101 = vector.shape_cast %100 : vector<1x1x32xf32> to vector<1x32xf32>
    %102 = vector.broadcast %101 : vector<1x32xf32> to vector<32x32xf32>
    %103 = arith.addf %99, %102 : vector<32x32xf32>
    %104 = arith.addf %94, %103 : vector<32x32xf32>
    %cst_71 = arith.constant 0.000000e+00 : f32
    %105 = vector.broadcast %cst_71 : f32 to vector<32x32xf32>
    %106 = arith.maximumf %104, %105 : vector<32x32xf32>
    %cst_72 = arith.constant dense<0.000000e+00> : vector<16x32xf32>
    %107 = tpu.matmul %11, %106, %cst_72 {dimension_numbers = #tpu.dot_dimension_numbers<[1], [0], [0], [1], [0, 0, 1, 1], [], []>} : vector<16x32xf32>, vector<32x32xf32>, vector<16x32xf32> -> vector<16x32xf32>
    %c2_73 = arith.constant 2 : index
    %108 = memref.load %arg10[%c2_73] : memref<5xf32, #tpu.memory_space<smem>>
    %cst_74 = arith.constant 1.000000e+00 : f32
    %109 = arith.addf %cst_74, %108 : f32
    %110 = vector.broadcast %109 : f32 to vector<16x32xf32>
    %111 = arith.mulf %110, %90 : vector<16x32xf32>
    %112 = arith.addf %111, %107 : vector<16x32xf32>
    %c2_75 = arith.constant 2 : index
    %c0_76 = arith.constant 0 : index
    %c0_77 = arith.constant 0 : index
    %113 = vector.load %arg6[%c2_75, %c0_76, %c0_77] : memref<5x32x32xf32, #tpu.memory_space<vmem>>, vector<1x32x32xf32>
    %114 = vector.shape_cast %113 : vector<1x32x32xf32> to vector<32x32xf32>
    %cst_78 = arith.constant dense<0.000000e+00> : vector<16x32xf32>
    %115 = tpu.matmul %112, %114, %cst_78 {dimension_numbers = #tpu.dot_dimension_numbers<[1], [0], [0], [1], [0, 0, 1, 1], [], []>} : vector<16x32xf32>, vector<32x32xf32>, vector<16x32xf32> -> vector<16x32xf32>
    %c2_79 = arith.constant 2 : index
    %c0_80 = arith.constant 0 : index
    %c0_81 = arith.constant 0 : index
    %116 = vector.load %arg7[%c2_79, %c0_80, %c0_81] : memref<5x1x32xf32, #tpu.memory_space<vmem>>, vector<1x1x32xf32>
    %117 = vector.shape_cast %116 : vector<1x1x32xf32> to vector<1x32xf32>
    %118 = vector.broadcast %117 : vector<1x32xf32> to vector<16x32xf32>
    %119 = arith.addf %115, %118 : vector<16x32xf32>
    %cst_82 = arith.constant 0.000000e+00 : f32
    %120 = vector.broadcast %cst_82 : f32 to vector<16x32xf32>
    %121 = arith.maximumf %119, %120 : vector<16x32xf32>
    %c2_83 = arith.constant 2 : index
    %c0_84 = arith.constant 0 : index
    %c0_85 = arith.constant 0 : index
    %122 = vector.load %arg8[%c2_83, %c0_84, %c0_85] : memref<5x32x32xf32, #tpu.memory_space<vmem>>, vector<1x32x32xf32>
    %123 = vector.shape_cast %122 : vector<1x32x32xf32> to vector<32x32xf32>
    %cst_86 = arith.constant dense<0.000000e+00> : vector<16x32xf32>
    %124 = tpu.matmul %121, %123, %cst_86 {dimension_numbers = #tpu.dot_dimension_numbers<[1], [0], [0], [1], [0, 0, 1, 1], [], []>} : vector<16x32xf32>, vector<32x32xf32>, vector<16x32xf32> -> vector<16x32xf32>
    %c2_87 = arith.constant 2 : index
    %c0_88 = arith.constant 0 : index
    %c0_89 = arith.constant 0 : index
    %125 = vector.load %arg9[%c2_87, %c0_88, %c0_89] : memref<5x1x32xf32, #tpu.memory_space<vmem>>, vector<1x1x32xf32>
    %126 = vector.shape_cast %125 : vector<1x1x32xf32> to vector<1x32xf32>
    %127 = vector.broadcast %126 : vector<1x32xf32> to vector<16x32xf32>
    %128 = arith.addf %124, %127 : vector<16x32xf32>
    %cst_90 = arith.constant 0.000000e+00 : f32
    %129 = vector.broadcast %cst_90 : f32 to vector<16x32xf32>
    %130 = arith.maximumf %128, %129 : vector<16x32xf32>
    %c2_91 = arith.constant 2 : index
    %c0_92 = arith.constant 0 : index
    %c0_93 = arith.constant 0 : index
    %131 = vector.load %arg11[%c2_91, %c0_92, %c0_93] : memref<5x16x32xf32, #tpu.memory_space<vmem>>, vector<1x16x32xf32>
    %132 = vector.shape_cast %131 : vector<1x16x32xf32> to vector<16x32xf32>
    %133 = vector.shape_cast %130 : vector<16x32xf32> to vector<1x16x32xf32>
    tpu.vector_store %arg11[%c2_91, %c0_92, %c0_93], %133 {strides = array<i32>} : memref<5x16x32xf32, #tpu.memory_space<vmem>>, vector<1x16x32xf32>,
    %cst_94 = arith.constant dense<0.000000e+00> : vector<32x32xf32>
    %134 = tpu.matmul %5, %130, %cst_94 {dimension_numbers = #tpu.dot_dimension_numbers<[1], [0], [0], [1], [0, 0, 1, 1], [], []>} : vector<32x16xf32>, vector<16x32xf32>, vector<32x32xf32> -> vector<32x32xf32>
    %c3 = arith.constant 3 : index
    %c0_95 = arith.constant 0 : index
    %c0_96 = arith.constant 0 : index
    %135 = vector.load %arg4[%c3, %c0_95, %c0_96] : memref<5x1x32xf32, #tpu.memory_space<vmem>>, vector<1x1x32xf32>
    %136 = vector.shape_cast %135 : vector<1x1x32xf32> to vector<1x32xf32>
    %137 = vector.broadcast %12 : vector<32x1xf32> to vector<32x32xf32>
    %138 = vector.broadcast %136 : vector<1x32xf32> to vector<32x32xf32>
    %139 = arith.mulf %137, %138 : vector<32x32xf32>
    %c3_97 = arith.constant 3 : index
    %c0_98 = arith.constant 0 : index
    %c0_99 = arith.constant 0 : index
    %140 = vector.load %arg5[%c3_97, %c0_98, %c0_99] : memref<5x1x32xf32, #tpu.memory_space<vmem>>, vector<1x1x32xf32>
    %141 = vector.shape_cast %140 : vector<1x1x32xf32> to vector<1x32xf32>
    %142 = vector.broadcast %141 : vector<1x32xf32> to vector<32x32xf32>
    %143 = arith.addf %139, %142 : vector<32x32xf32>
    %144 = arith.addf %134, %143 : vector<32x32xf32>
    %cst_100 = arith.constant 0.000000e+00 : f32
    %145 = vector.broadcast %cst_100 : f32 to vector<32x32xf32>
    %146 = arith.maximumf %144, %145 : vector<32x32xf32>
    %cst_101 = arith.constant dense<0.000000e+00> : vector<16x32xf32>
    %147 = tpu.matmul %11, %146, %cst_101 {dimension_numbers = #tpu.dot_dimension_numbers<[1], [0], [0], [1], [0, 0, 1, 1], [], []>} : vector<16x32xf32>, vector<32x32xf32>, vector<16x32xf32> -> vector<16x32xf32>
    %c3_102 = arith.constant 3 : index
    %148 = memref.load %arg10[%c3_102] : memref<5xf32, #tpu.memory_space<smem>>
    %cst_103 = arith.constant 1.000000e+00 : f32
    %149 = arith.addf %cst_103, %148 : f32
    %150 = vector.broadcast %149 : f32 to vector<16x32xf32>
    %151 = arith.mulf %150, %130 : vector<16x32xf32>
    %152 = arith.addf %151, %147 : vector<16x32xf32>
    %c3_104 = arith.constant 3 : index
    %c0_105 = arith.constant 0 : index
    %c0_106 = arith.constant 0 : index
    %153 = vector.load %arg6[%c3_104, %c0_105, %c0_106] : memref<5x32x32xf32, #tpu.memory_space<vmem>>, vector<1x32x32xf32>
    %154 = vector.shape_cast %153 : vector<1x32x32xf32> to vector<32x32xf32>
    %cst_107 = arith.constant dense<0.000000e+00> : vector<16x32xf32>
    %155 = tpu.matmul %152, %154, %cst_107 {dimension_numbers = #tpu.dot_dimension_numbers<[1], [0], [0], [1], [0, 0, 1, 1], [], []>} : vector<16x32xf32>, vector<32x32xf32>, vector<16x32xf32> -> vector<16x32xf32>
    %c3_108 = arith.constant 3 : index
    %c0_109 = arith.constant 0 : index
    %c0_110 = arith.constant 0 : index
    %156 = vector.load %arg7[%c3_108, %c0_109, %c0_110] : memref<5x1x32xf32, #tpu.memory_space<vmem>>, vector<1x1x32xf32>
    %157 = vector.shape_cast %156 : vector<1x1x32xf32> to vector<1x32xf32>
    %158 = vector.broadcast %157 : vector<1x32xf32> to vector<16x32xf32>
    %159 = arith.addf %155, %158 : vector<16x32xf32>
    %cst_111 = arith.constant 0.000000e+00 : f32
    %160 = vector.broadcast %cst_111 : f32 to vector<16x32xf32>
    %161 = arith.maximumf %159, %160 : vector<16x32xf32>
    %c3_112 = arith.constant 3 : index
    %c0_113 = arith.constant 0 : index
    %c0_114 = arith.constant 0 : index
    %162 = vector.load %arg8[%c3_112, %c0_113, %c0_114] : memref<5x32x32xf32, #tpu.memory_space<vmem>>, vector<1x32x32xf32>
    %163 = vector.shape_cast %162 : vector<1x32x32xf32> to vector<32x32xf32>
    %cst_115 = arith.constant dense<0.000000e+00> : vector<16x32xf32>
    %164 = tpu.matmul %161, %163, %cst_115 {dimension_numbers = #tpu.dot_dimension_numbers<[1], [0], [0], [1], [0, 0, 1, 1], [], []>} : vector<16x32xf32>, vector<32x32xf32>, vector<16x32xf32> -> vector<16x32xf32>
    %c3_116 = arith.constant 3 : index
    %c0_117 = arith.constant 0 : index
    %c0_118 = arith.constant 0 : index
    %165 = vector.load %arg9[%c3_116, %c0_117, %c0_118] : memref<5x1x32xf32, #tpu.memory_space<vmem>>, vector<1x1x32xf32>
    %166 = vector.shape_cast %165 : vector<1x1x32xf32> to vector<1x32xf32>
    %167 = vector.broadcast %166 : vector<1x32xf32> to vector<16x32xf32>
    %168 = arith.addf %164, %167 : vector<16x32xf32>
    %cst_119 = arith.constant 0.000000e+00 : f32
    %169 = vector.broadcast %cst_119 : f32 to vector<16x32xf32>
    %170 = arith.maximumf %168, %169 : vector<16x32xf32>
    %c3_120 = arith.constant 3 : index
    %c0_121 = arith.constant 0 : index
    %c0_122 = arith.constant 0 : index
    %171 = vector.load %arg11[%c3_120, %c0_121, %c0_122] : memref<5x16x32xf32, #tpu.memory_space<vmem>>, vector<1x16x32xf32>
    %172 = vector.shape_cast %171 : vector<1x16x32xf32> to vector<16x32xf32>
    %173 = vector.shape_cast %170 : vector<16x32xf32> to vector<1x16x32xf32>
    tpu.vector_store %arg11[%c3_120, %c0_121, %c0_122], %173 {strides = array<i32>} : memref<5x16x32xf32, #tpu.memory_space<vmem>>, vector<1x16x32xf32>,
    %cst_123 = arith.constant dense<0.000000e+00> : vector<32x32xf32>
    %174 = tpu.matmul %5, %170, %cst_123 {dimension_numbers = #tpu.dot_dimension_numbers<[1], [0], [0], [1], [0, 0, 1, 1], [], []>} : vector<32x16xf32>, vector<16x32xf32>, vector<32x32xf32> -> vector<32x32xf32>
    %c4 = arith.constant 4 : index
    %c0_124 = arith.constant 0 : index
    %c0_125 = arith.constant 0 : index
    %175 = vector.load %arg4[%c4, %c0_124, %c0_125] : memref<5x1x32xf32, #tpu.memory_space<vmem>>, vector<1x1x32xf32>
    %176 = vector.shape_cast %175 : vector<1x1x32xf32> to vector<1x32xf32>
    %177 = vector.broadcast %12 : vector<32x1xf32> to vector<32x32xf32>
    %178 = vector.broadcast %176 : vector<1x32xf32> to vector<32x32xf32>
    %179 = arith.mulf %177, %178 : vector<32x32xf32>
    %c4_126 = arith.constant 4 : index
    %c0_127 = arith.constant 0 : index
    %c0_128 = arith.constant 0 : index
    %180 = vector.load %arg5[%c4_126, %c0_127, %c0_128] : memref<5x1x32xf32, #tpu.memory_space<vmem>>, vector<1x1x32xf32>
    %181 = vector.shape_cast %180 : vector<1x1x32xf32> to vector<1x32xf32>
    %182 = vector.broadcast %181 : vector<1x32xf32> to vector<32x32xf32>
    %183 = arith.addf %179, %182 : vector<32x32xf32>
    %184 = arith.addf %174, %183 : vector<32x32xf32>
    %cst_129 = arith.constant 0.000000e+00 : f32
    %185 = vector.broadcast %cst_129 : f32 to vector<32x32xf32>
    %186 = arith.maximumf %184, %185 : vector<32x32xf32>
    %cst_130 = arith.constant dense<0.000000e+00> : vector<16x32xf32>
    %187 = tpu.matmul %11, %186, %cst_130 {dimension_numbers = #tpu.dot_dimension_numbers<[1], [0], [0], [1], [0, 0, 1, 1], [], []>} : vector<16x32xf32>, vector<32x32xf32>, vector<16x32xf32> -> vector<16x32xf32>
    %c4_131 = arith.constant 4 : index
    %188 = memref.load %arg10[%c4_131] : memref<5xf32, #tpu.memory_space<smem>>
    %cst_132 = arith.constant 1.000000e+00 : f32
    %189 = arith.addf %cst_132, %188 : f32
    %190 = vector.broadcast %189 : f32 to vector<16x32xf32>
    %191 = arith.mulf %190, %170 : vector<16x32xf32>
    %192 = arith.addf %191, %187 : vector<16x32xf32>
    %c4_133 = arith.constant 4 : index
    %c0_134 = arith.constant 0 : index
    %c0_135 = arith.constant 0 : index
    %193 = vector.load %arg6[%c4_133, %c0_134, %c0_135] : memref<5x32x32xf32, #tpu.memory_space<vmem>>, vector<1x32x32xf32>
    %194 = vector.shape_cast %193 : vector<1x32x32xf32> to vector<32x32xf32>
    %cst_136 = arith.constant dense<0.000000e+00> : vector<16x32xf32>
    %195 = tpu.matmul %192, %194, %cst_136 {dimension_numbers = #tpu.dot_dimension_numbers<[1], [0], [0], [1], [0, 0, 1, 1], [], []>} : vector<16x32xf32>, vector<32x32xf32>, vector<16x32xf32> -> vector<16x32xf32>
    %c4_137 = arith.constant 4 : index
    %c0_138 = arith.constant 0 : index
    %c0_139 = arith.constant 0 : index
    %196 = vector.load %arg7[%c4_137, %c0_138, %c0_139] : memref<5x1x32xf32, #tpu.memory_space<vmem>>, vector<1x1x32xf32>
    %197 = vector.shape_cast %196 : vector<1x1x32xf32> to vector<1x32xf32>
    %198 = vector.broadcast %197 : vector<1x32xf32> to vector<16x32xf32>
    %199 = arith.addf %195, %198 : vector<16x32xf32>
    %cst_140 = arith.constant 0.000000e+00 : f32
    %200 = vector.broadcast %cst_140 : f32 to vector<16x32xf32>
    %201 = arith.maximumf %199, %200 : vector<16x32xf32>
    %c4_141 = arith.constant 4 : index
    %c0_142 = arith.constant 0 : index
    %c0_143 = arith.constant 0 : index
    %202 = vector.load %arg8[%c4_141, %c0_142, %c0_143] : memref<5x32x32xf32, #tpu.memory_space<vmem>>, vector<1x32x32xf32>
    %203 = vector.shape_cast %202 : vector<1x32x32xf32> to vector<32x32xf32>
    %cst_144 = arith.constant dense<0.000000e+00> : vector<16x32xf32>
    %204 = tpu.matmul %201, %203, %cst_144 {dimension_numbers = #tpu.dot_dimension_numbers<[1], [0], [0], [1], [0, 0, 1, 1], [], []>} : vector<16x32xf32>, vector<32x32xf32>, vector<16x32xf32> -> vector<16x32xf32>
    %c4_145 = arith.constant 4 : index
    %c0_146 = arith.constant 0 : index
    %c0_147 = arith.constant 0 : index
    %205 = vector.load %arg9[%c4_145, %c0_146, %c0_147] : memref<5x1x32xf32, #tpu.memory_space<vmem>>, vector<1x1x32xf32>
    %206 = vector.shape_cast %205 : vector<1x1x32xf32> to vector<1x32xf32>
    %207 = vector.broadcast %206 : vector<1x32xf32> to vector<16x32xf32>
    %208 = arith.addf %204, %207 : vector<16x32xf32>
    %cst_148 = arith.constant 0.000000e+00 : f32
    %209 = vector.broadcast %cst_148 : f32 to vector<16x32xf32>
    %210 = arith.maximumf %208, %209 : vector<16x32xf32>
    %c4_149 = arith.constant 4 : index
    %c0_150 = arith.constant 0 : index
    %c0_151 = arith.constant 0 : index
    %211 = vector.load %arg11[%c4_149, %c0_150, %c0_151] : memref<5x16x32xf32, #tpu.memory_space<vmem>>, vector<1x16x32xf32>
    %212 = vector.shape_cast %211 : vector<1x16x32xf32> to vector<16x32xf32>
    %213 = vector.shape_cast %210 : vector<16x32xf32> to vector<1x16x32xf32>
    tpu.vector_store %arg11[%c4_149, %c0_150, %c0_151], %213 {strides = array<i32>} : memref<5x16x32xf32, #tpu.memory_space<vmem>>, vector<1x16x32xf32>,
    return
  }
}

module attributes {stable_mosaic.version = 11 : i64} {
  func.func @head_kernel(%arg0: memref<5x16x32xf32, #tpu.memory_space<vmem>>, %arg1: memref<2x16x1xf32, #tpu.memory_space<vmem>>, %arg2: memref<5x32x128xf32, #tpu.memory_space<vmem>>, %arg3: memref<1x128xf32, #tpu.memory_space<vmem>>, %arg4: memref<128x128xf32, #tpu.memory_space<vmem>>, %arg5: memref<1x128xf32, #tpu.memory_space<vmem>>, %arg6: memref<2x128xf32, #tpu.memory_space<vmem>>) attributes {dimension_semantics = [], scalar_prefetch = 0 : i64, scratch_operands = 0 : i64, tpu.core_type = #tpu.core_type<tc>} {
    %c0 = arith.constant 0 : index
    %c0_0 = arith.constant 0 : index
    %c0_1 = arith.constant 0 : index
    %0 = vector.load %arg1[%c0, %c0_0, %c0_1] : memref<2x16x1xf32, #tpu.memory_space<vmem>>, vector<2x16x1xf32>
    %c0_2 = arith.constant 0 : index
    %c0_3 = arith.constant 0 : index
    %c0_4 = arith.constant 0 : index
    %1 = vector.load %arg0[%c0_2, %c0_3, %c0_4] : memref<5x16x32xf32, #tpu.memory_space<vmem>>, vector<1x16x32xf32>
    %2 = vector.shape_cast %1 : vector<1x16x32xf32> to vector<16x32xf32>
    %3 = vector.shape_cast %2 : vector<16x32xf32> to vector<1x16x32xf32>
    %4 = vector.broadcast %3 : vector<1x16x32xf32> to vector<2x16x32xf32>
    %5 = vector.broadcast %0 : vector<2x16x1xf32> to vector<2x16x32xf32>
    %6 = arith.addf %4, %5 : vector<2x16x32xf32>
    %cst = arith.constant dense<0xFF800000> : vector<2x32xf32>
    %7 = vector.multi_reduction <maximumf>, %6, %cst [1] : vector<2x16x32xf32> to vector<2x32xf32>
    %c0_5 = arith.constant 0 : index
    %c0_6 = arith.constant 0 : index
    %c0_7 = arith.constant 0 : index
    %8 = vector.load %arg2[%c0_5, %c0_6, %c0_7] : memref<5x32x128xf32, #tpu.memory_space<vmem>>, vector<1x32x128xf32>
    %9 = vector.shape_cast %8 : vector<1x32x128xf32> to vector<32x128xf32>
    %cst_8 = arith.constant dense<0.000000e+00> : vector<2x128xf32>
    %10 = tpu.matmul %7, %9, %cst_8 {dimension_numbers = #tpu.dot_dimension_numbers<[1], [0], [0], [1], [0, 0, 1, 1], [], []>} : vector<2x32xf32>, vector<32x128xf32>, vector<2x128xf32> -> vector<2x128xf32>
    %c1 = arith.constant 1 : index
    %c0_9 = arith.constant 0 : index
    %c0_10 = arith.constant 0 : index
    %11 = vector.load %arg0[%c1, %c0_9, %c0_10] : memref<5x16x32xf32, #tpu.memory_space<vmem>>, vector<1x16x32xf32>
    %12 = vector.shape_cast %11 : vector<1x16x32xf32> to vector<16x32xf32>
    %13 = vector.shape_cast %12 : vector<16x32xf32> to vector<1x16x32xf32>
    %14 = vector.broadcast %13 : vector<1x16x32xf32> to vector<2x16x32xf32>
    %15 = vector.broadcast %0 : vector<2x16x1xf32> to vector<2x16x32xf32>
    %16 = arith.addf %14, %15 : vector<2x16x32xf32>
    %cst_11 = arith.constant dense<0xFF800000> : vector<2x32xf32>
    %17 = vector.multi_reduction <maximumf>, %16, %cst_11 [1] : vector<2x16x32xf32> to vector<2x32xf32>
    %c1_12 = arith.constant 1 : index
    %c0_13 = arith.constant 0 : index
    %c0_14 = arith.constant 0 : index
    %18 = vector.load %arg2[%c1_12, %c0_13, %c0_14] : memref<5x32x128xf32, #tpu.memory_space<vmem>>, vector<1x32x128xf32>
    %19 = vector.shape_cast %18 : vector<1x32x128xf32> to vector<32x128xf32>
    %cst_15 = arith.constant dense<0.000000e+00> : vector<2x128xf32>
    %20 = tpu.matmul %17, %19, %cst_15 {dimension_numbers = #tpu.dot_dimension_numbers<[1], [0], [0], [1], [0, 0, 1, 1], [], []>} : vector<2x32xf32>, vector<32x128xf32>, vector<2x128xf32> -> vector<2x128xf32>
    %21 = arith.addf %10, %20 : vector<2x128xf32>
    %c2 = arith.constant 2 : index
    %c0_16 = arith.constant 0 : index
    %c0_17 = arith.constant 0 : index
    %22 = vector.load %arg0[%c2, %c0_16, %c0_17] : memref<5x16x32xf32, #tpu.memory_space<vmem>>, vector<1x16x32xf32>
    %23 = vector.shape_cast %22 : vector<1x16x32xf32> to vector<16x32xf32>
    %24 = vector.shape_cast %23 : vector<16x32xf32> to vector<1x16x32xf32>
    %25 = vector.broadcast %24 : vector<1x16x32xf32> to vector<2x16x32xf32>
    %26 = vector.broadcast %0 : vector<2x16x1xf32> to vector<2x16x32xf32>
    %27 = arith.addf %25, %26 : vector<2x16x32xf32>
    %cst_18 = arith.constant dense<0xFF800000> : vector<2x32xf32>
    %28 = vector.multi_reduction <maximumf>, %27, %cst_18 [1] : vector<2x16x32xf32> to vector<2x32xf32>
    %c2_19 = arith.constant 2 : index
    %c0_20 = arith.constant 0 : index
    %c0_21 = arith.constant 0 : index
    %29 = vector.load %arg2[%c2_19, %c0_20, %c0_21] : memref<5x32x128xf32, #tpu.memory_space<vmem>>, vector<1x32x128xf32>
    %30 = vector.shape_cast %29 : vector<1x32x128xf32> to vector<32x128xf32>
    %cst_22 = arith.constant dense<0.000000e+00> : vector<2x128xf32>
    %31 = tpu.matmul %28, %30, %cst_22 {dimension_numbers = #tpu.dot_dimension_numbers<[1], [0], [0], [1], [0, 0, 1, 1], [], []>} : vector<2x32xf32>, vector<32x128xf32>, vector<2x128xf32> -> vector<2x128xf32>
    %32 = arith.addf %21, %31 : vector<2x128xf32>
    %c3 = arith.constant 3 : index
    %c0_23 = arith.constant 0 : index
    %c0_24 = arith.constant 0 : index
    %33 = vector.load %arg0[%c3, %c0_23, %c0_24] : memref<5x16x32xf32, #tpu.memory_space<vmem>>, vector<1x16x32xf32>
    %34 = vector.shape_cast %33 : vector<1x16x32xf32> to vector<16x32xf32>
    %35 = vector.shape_cast %34 : vector<16x32xf32> to vector<1x16x32xf32>
    %36 = vector.broadcast %35 : vector<1x16x32xf32> to vector<2x16x32xf32>
    %37 = vector.broadcast %0 : vector<2x16x1xf32> to vector<2x16x32xf32>
    %38 = arith.addf %36, %37 : vector<2x16x32xf32>
    %cst_25 = arith.constant dense<0xFF800000> : vector<2x32xf32>
    %39 = vector.multi_reduction <maximumf>, %38, %cst_25 [1] : vector<2x16x32xf32> to vector<2x32xf32>
    %c3_26 = arith.constant 3 : index
    %c0_27 = arith.constant 0 : index
    %c0_28 = arith.constant 0 : index
    %40 = vector.load %arg2[%c3_26, %c0_27, %c0_28] : memref<5x32x128xf32, #tpu.memory_space<vmem>>, vector<1x32x128xf32>
    %41 = vector.shape_cast %40 : vector<1x32x128xf32> to vector<32x128xf32>
    %cst_29 = arith.constant dense<0.000000e+00> : vector<2x128xf32>
    %42 = tpu.matmul %39, %41, %cst_29 {dimension_numbers = #tpu.dot_dimension_numbers<[1], [0], [0], [1], [0, 0, 1, 1], [], []>} : vector<2x32xf32>, vector<32x128xf32>, vector<2x128xf32> -> vector<2x128xf32>
    %43 = arith.addf %32, %42 : vector<2x128xf32>
    %c4 = arith.constant 4 : index
    %c0_30 = arith.constant 0 : index
    %c0_31 = arith.constant 0 : index
    %44 = vector.load %arg0[%c4, %c0_30, %c0_31] : memref<5x16x32xf32, #tpu.memory_space<vmem>>, vector<1x16x32xf32>
    %45 = vector.shape_cast %44 : vector<1x16x32xf32> to vector<16x32xf32>
    %46 = vector.shape_cast %45 : vector<16x32xf32> to vector<1x16x32xf32>
    %47 = vector.broadcast %46 : vector<1x16x32xf32> to vector<2x16x32xf32>
    %48 = vector.broadcast %0 : vector<2x16x1xf32> to vector<2x16x32xf32>
    %49 = arith.addf %47, %48 : vector<2x16x32xf32>
    %cst_32 = arith.constant dense<0xFF800000> : vector<2x32xf32>
    %50 = vector.multi_reduction <maximumf>, %49, %cst_32 [1] : vector<2x16x32xf32> to vector<2x32xf32>
    %c4_33 = arith.constant 4 : index
    %c0_34 = arith.constant 0 : index
    %c0_35 = arith.constant 0 : index
    %51 = vector.load %arg2[%c4_33, %c0_34, %c0_35] : memref<5x32x128xf32, #tpu.memory_space<vmem>>, vector<1x32x128xf32>
    %52 = vector.shape_cast %51 : vector<1x32x128xf32> to vector<32x128xf32>
    %cst_36 = arith.constant dense<0.000000e+00> : vector<2x128xf32>
    %53 = tpu.matmul %50, %52, %cst_36 {dimension_numbers = #tpu.dot_dimension_numbers<[1], [0], [0], [1], [0, 0, 1, 1], [], []>} : vector<2x32xf32>, vector<32x128xf32>, vector<2x128xf32> -> vector<2x128xf32>
    %54 = arith.addf %43, %53 : vector<2x128xf32>
    %c0_37 = arith.constant 0 : index
    %c0_38 = arith.constant 0 : index
    %55 = vector.load %arg3[%c0_37, %c0_38] : memref<1x128xf32, #tpu.memory_space<vmem>>, vector<1x128xf32>
    %56 = vector.broadcast %55 : vector<1x128xf32> to vector<2x128xf32>
    %57 = arith.addf %54, %56 : vector<2x128xf32>
    %cst_39 = arith.constant 0.000000e+00 : f32
    %58 = vector.broadcast %cst_39 : f32 to vector<2x128xf32>
    %59 = arith.maximumf %57, %58 : vector<2x128xf32>
    %c0_40 = arith.constant 0 : index
    %c0_41 = arith.constant 0 : index
    %60 = vector.load %arg4[%c0_40, %c0_41] : memref<128x128xf32, #tpu.memory_space<vmem>>, vector<128x128xf32>
    %cst_42 = arith.constant dense<0.000000e+00> : vector<2x128xf32>
    %61 = tpu.matmul %59, %60, %cst_42 {dimension_numbers = #tpu.dot_dimension_numbers<[1], [0], [0], [1], [0, 0, 1, 1], [], []>} : vector<2x128xf32>, vector<128x128xf32>, vector<2x128xf32> -> vector<2x128xf32>
    %c0_43 = arith.constant 0 : index
    %c0_44 = arith.constant 0 : index
    %62 = vector.load %arg5[%c0_43, %c0_44] : memref<1x128xf32, #tpu.memory_space<vmem>>, vector<1x128xf32>
    %63 = vector.broadcast %62 : vector<1x128xf32> to vector<2x128xf32>
    %64 = arith.addf %61, %63 : vector<2x128xf32>
    %c0_45 = arith.constant 0 : index
    %c0_46 = arith.constant 0 : index
    %65 = vector.load %arg6[%c0_45, %c0_46] : memref<2x128xf32, #tpu.memory_space<vmem>>, vector<2x128xf32>
    tpu.vector_store %arg6[%c0_45, %c0_46], %64 {strides = array<i32>} : memref<2x128xf32, #tpu.memory_space<vmem>>, vector<2x128xf32>,
    return
  }
}

</mosaic_0001>

<llo_original>
// kernel: gine_forward.3
$region0: #{gine_forward.3}
  #allocation0 [shape = 'u32[]', space=smem, size = 0x4, offset = 0x4, fixed_abs, tag = 'smem constant byte address 0x4 - core index']
  #allocation1 [shape = 'u32[144,128]{1,0:T(1,128)}', space=vmem, size = 0x12000, scoped, tag = 'internal scratch']
  %s0 = inlined_call_operand.vmem [shape: f32[5,16,32], index: 0, kind: input, shape index: {}]
  %s1 = inlined_call_operand.vmem [shape: f32[2,16,1], index: 1, kind: input, shape index: {}]
  %s2 = inlined_call_operand.vmem [shape: f32[5,32,128], index: 2, kind: input, shape index: {}]
  %s3 = inlined_call_operand.vmem [shape: f32[1,128], index: 3, kind: input, shape index: {}]
  %s4 = inlined_call_operand.vmem [shape: f32[128,128], index: 4, kind: input, shape index: {}]
  %s5 = inlined_call_operand.vmem [shape: f32[1,128], index: 5, kind: input, shape index: {}]
  %s6 = inlined_call_operand.hbm [shape: f32[2,128], index: 6, kind: output, shape index: {}]
  %s7 = sld [smem:[#allocation0]]
  $region34: #{gine_forward.3} parent=0
    _
  %s9 = ssub.s32 1, %s7
  %s10 = scalar_select 0, %s9, %s7
  $region1: #{gine_forward.3} parent=0
    #allocation2 [shape = 'u8[1024]{0}', space=vmem, size = 0x400, scoped, tag = 'output window, operand 0, single buffered']
    #allocation3 [shape = 's32[1]{0}', space=sflag, size = 0x4, scoped, tag = 'scoped memory for gine_forward.3']
    %11 = vsyncpa [#allocation3], 0
    // Predicated region
    $region2: #{gine_forward.3} parent=1 // pred_check
      _
    $region3: #{gine_forward.3} parent=1 // pred_check_branch
      %13 = sbr.rel (0) target = $region5
    $region4: #{gine_forward.3} parent=1 // pred_region
      _
    $region5: #{gine_forward.3} parent=1 // pred_fallthru
      _
    // Predicated region
    $region6: #{gine_forward.3} parent=1 // pred_check
      _
    $region7: #{gine_forward.3} parent=1 // pred_check_branch
      %15 = sbr.rel (0) target = $region9
    $region8: #{gine_forward.3} parent=1 // pred_region
      _
    $region9: #{gine_forward.3} parent=1 // pred_fallthru
      _
    // Predicated region
    $region10: #{gine_forward.3} parent=1 // pred_check
      _
    $region11: #{gine_forward.3} parent=1 // pred_check_branch
      %17 = sbr.rel (0) target = $region13
    $region12: #{gine_forward.3} parent=1 // pred_region
      _
    $region13: #{gine_forward.3} parent=1 // pred_fallthru
      _
    // Predicated region
    $region14: #{gine_forward.3} parent=1 // pred_check
      _
    $region15: #{gine_forward.3} parent=1 // pred_check_branch
      %19 = sbr.rel (0) target = $region17
    $region16: #{gine_forward.3} parent=1 // pred_region
      _
    $region17: #{gine_forward.3} parent=1 // pred_fallthru
      _
    // Predicated region
    $region18: #{gine_forward.3} parent=1 // pred_check
      _
    $region19: #{gine_forward.3} parent=1 // pred_check_branch
      %21 = sbr.rel (0) target = $region21
    $region20: #{gine_forward.3} parent=1 // pred_region
      _
    $region21: #{gine_forward.3} parent=1 // pred_fallthru
      _
    // Predicated region
    $region22: #{gine_forward.3} parent=1 // pred_check
      _
    $region23: #{gine_forward.3} parent=1 // pred_check_branch
      %23 = sbr.rel (0) target = $region25
    $region24: #{gine_forward.3} parent=1 // pred_region
      _
    $region25: #{gine_forward.3} parent=1 // pred_fallthru
      _
    %v24 = vld [vmem:[%s1] sm:$0xff]
    %v25 = vld [vmem:[%s1 + $0x8] sm:$0xff]
    %v26 = vld [vmem:[%s1 + $0x10] sm:$0xff]
    %v27 = vld [vmem:[%s1 + $0x18] sm:$0xff]
    %v28 = vld [vmem:[%s0] sm:$0xff]
    %v29 = vld [vmem:[%s0 + $0x8] sm:$0xff]
    %31 = vset.pattern.permute.xlu0 0
    %32 = vperm.xlu0 %31, %v24
    %v33 = vpop.permute.xlu0 %32
    %36 = vset.pattern.permute.xlu0 0
    %37 = vperm.xlu0 %36, %v25
    %v38 = vpop.permute.xlu0 %37
    %41 = vset.pattern.permute.xlu0 0
    %42 = vperm.xlu0 %41, %v26
    %v43 = vpop.permute.xlu0 %42
    %46 = vset.pattern.permute.xlu0 0
    %47 = vperm.xlu0 %46, %v27
    %v48 = vpop.permute.xlu0 %47
    %v50 = vadd.f32 %v28, %v33
    %v51 = vadd.f32 %v29, %v38
    %v52 = vadd.f32 %v28, %v43
    %v53 = vadd.f32 %v29, %v48
    %vm54 = vcmask 261120
    %v55 = vsel %vm54, %v50, -inf
    %v56 = vsel %vm54, %v51, -inf
    %v57 = vmax.f32 %v55, %v56
    %v58 = vrot.slane %v57, 4
    %v59 = vmax.f32 %v57, %v58
    %v60 = vrot.slane %v59, 2
    %v61 = vmax.f32 %v59, %v60
    %v62 = vrot.slane %v61, 1
    %v63 = vmax.f32 %v61, %v62
    %v64 = vsel %vm54, %v52, -inf
    %v65 = vsel %vm54, %v53, -inf
    %v66 = vmax.f32 %v64, %v65
    %v67 = vrot.slane %v66, 4
    %v68 = vmax.f32 %v66, %v67
    %v69 = vrot.slane %v68, 2
    %v70 = vmax.f32 %v68, %v69
    %v71 = vrot.slane %v70, 1
    %v72 = vmax.f32 %v70, %v71
    %v73 = vld [vmem:[%s2] sm:$0xff]
    %v74 = vld [vmem:[%s2 + $0x8] sm:$0xff]
    %v75 = vld [vmem:[%s2 + $0x10] sm:$0xff]
    %v76 = vld [vmem:[%s2 + $0x18] sm:$0xff]
    %s77 = scalar_lea.vmem %s0, 16
    %v78 = vld [vmem:[%s77] sm:$0xff]
    %v79 = vld [vmem:[%s77 + $0x8] sm:$0xff]
    %v80 = vadd.f32 %v78, %v33
    %v81 = vadd.f32 %v79, %v38
    %v82 = vadd.f32 %v78, %v43
    %v83 = vadd.f32 %v79, %v48
    %v84 = vsel %vm54, %v80, -inf
    %v85 = vsel %vm54, %v81, -inf
    %v86 = vmax.f32 %v84, %v85
    %v87 = vrot.slane %v86, 4
    %v88 = vmax.f32 %v86, %v87
    %v89 = vrot.slane %v88, 2
    %v90 = vmax.f32 %v88, %v89
    %v91 = vrot.slane %v90, 1
    %v92 = vmax.f32 %v90, %v91
    %v93 = vsel %vm54, %v82, -inf
    %v94 = vsel %vm54, %v83, -inf
    %v95 = vmax.f32 %v93, %v94
    %v96 = vrot.slane %v95, 4
    %v97 = vmax.f32 %v95, %v96
    %v98 = vrot.slane %v97, 2
    %v99 = vmax.f32 %v97, %v98
    %v100 = vrot.slane %v99, 1
    %v101 = vmax.f32 %v99, %v100
    %s102 = scalar_lea.vmem %s2, 32
    %v103 = vld [vmem:[%s102] sm:$0xff]
    %v104 = vld [vmem:[%s102 + $0x8] sm:$0xff]
    %v105 = vld [vmem:[%s102 + $0x10] sm:$0xff]
    %v106 = vld [vmem:[%s102 + $0x18] sm:$0xff]
    %vm109 = vcmask 1041409
    %v110 = vsel %vm109, %v101, %v92
    %v111 = vsel %vm54, %v110, 0
    %113 = vmatprep.subr.mxu0 0.0
    %114 = vmatpush1.msra.mxu0 0.0
    %115 = vmatprep.subr.mxu0 0.0
    %116 = vmatpush1.msra.mxu0 0.0
    %117 = vmatprep.subr.mxu0 0.0
    %118 = vmatpush1.msra.mxu0 0.0
    %119 = vmatprep.subr.mxu0 0.0
    %120 = vmatpush1.msra.mxu0 0.0
    %121 = vmatprep.subr.mxu0 0.0
    %122 = vmatpush1.msra.mxu0 0.0
    %123 = vmatprep.subr.mxu0 0.0
    %124 = vmatpush1.msra.mxu0 0.0
    %125 = vmatprep.subr.mxu0 0.0
    %126 = vmatpush1.msra.mxu0 0.0
    %127 = vmatprep.subr.mxu0 0.0
    %128 = vmatpush1.msra.mxu0 0.0
    %129 = vmatprep.subr.mxu0 0.0
    %130 = vmatpush1.msra.mxu0 0.0
    %131 = vmatprep.subr.mxu0 0.0
    %132 = vmatpush1.msra.mxu0 0.0
    %133 = vmatprep.subr.mxu0 0.0
    %134 = vmatpush1.msra.mxu0 0.0
    %135 = vmatprep.subr.mxu0 0.0
    %136 = vmatpush1.msra.mxu0 0.0
    %137 = vmatprep.subr.mxu0 0.0
    %138 = vmatpush1.msra.mxu0 %v106
    %139 = vmatprep.subr.mxu0 0.0
    %140 = vmatpush1.msra.mxu0 %v105
    %141 = vmatprep.subr.mxu0 0.0
    %142 = vmatpush1.msra.mxu0 %v104
    %143 = vmatprep.subr.mxu0 0.0
    %144 = vmatpush1.msra.mxu0 %v103
    %145 = vmatprep.subr.mxu0 0.0
    %146 = vmatpush2.msra.mxu0 0.0
    %147 = vmatprep.subr.mxu0 0.0
    %148 = vmatpush2.msra.mxu0 0.0
    %149 = vmatprep.subr.mxu0 0.0
    %150 = vmatpush2.msra.mxu0 0.0
    %151 = vmatprep.subr.mxu0 0.0
    %152 = vmatpush2.msra.mxu0 0.0
    %153 = vmatprep.subr.mxu0 0.0
    %154 = vmatpush2.msra.mxu0 0.0
    %155 = vmatprep.subr.mxu0 0.0
    %156 = vmatpush2.msra.mxu0 0.0
    %157 = vmatprep.subr.mxu0 0.0
    %158 = vmatpush2.msra.mxu0 0.0
    %159 = vmatprep.subr.mxu0 0.0
    %160 = vmatpush2.msra.mxu0 0.0
    %161 = vmatprep.subr.mxu0 0.0
    %162 = vmatpush2.msra.mxu0 0.0
    %163 = vmatprep.subr.mxu0 0.0
    %164 = vmatpush2.msra.mxu0 0.0
    %165 = vmatprep.subr.mxu0 0.0
    %166 = vmatpush2.msra.mxu0 0.0
    %167 = vmatprep.subr.mxu0 0.0
    %168 = vmatpush2.msra.mxu0 0.0
    %169 = vmatprep.subr.mxu0 0.0
    %170 = vmatpush2.msra.mxu0 0.0
    %171 = vmatprep.subr.mxu0 0.0
    %172 = vmatpush2.msra.mxu0 0.0
    %173 = vmatprep.subr.mxu0 0.0
    %174 = vmatpush2.msra.mxu0 0.0
    %175 = vmatprep.subr.mxu0 0.0
    %176 = vmatpush2.msra.mxu0 0.0
    %177 = vmatprep.mubr.f32.mxu0 0.0
    %178 = vmatmul.mubr.f32.gmra.mxu0 %v111
    %v179 = vpop.f32.mrf.mxu0
    %v180 = vadd.f32 0.0, %v179
    %v181 = vpop.f32.mrf.mxu0
    %182 = vdwg.mxu0
    %v185 = vsel %vm109, %v72, %v63
    %v186 = vsel %vm54, %v185, 0
    %188 = vmatprep.subr.mxu0 0.0
    %189 = vmatpush1.msra.mxu0 0.0
    %190 = vmatprep.subr.mxu0 0.0
    %191 = vmatpush1.msra.mxu0 0.0
    %192 = vmatprep.subr.mxu0 0.0
    %193 = vmatpush1.msra.mxu0 0.0
    %194 = vmatprep.subr.mxu0 0.0
    %195 = vmatpush1.msra.mxu0 0.0
    %196 = vmatprep.subr.mxu0 0.0
    %197 = vmatpush1.msra.mxu0 0.0
    %198 = vmatprep.subr.mxu0 0.0
    %199 = vmatpush1.msra.mxu0 0.0
    %200 = vmatprep.subr.mxu0 0.0
    %201 = vmatpush1.msra.mxu0 0.0
    %202 = vmatprep.subr.mxu0 0.0
    %203 = vmatpush1.msra.mxu0 0.0
    %204 = vmatprep.subr.mxu0 0.0
    %205 = vmatpush1.msra.mxu0 0.0
    %206 = vmatprep.subr.mxu0 0.0
    %207 = vmatpush1.msra.mxu0 0.0
    %208 = vmatprep.subr.mxu0 0.0
    %209 = vmatpush1.msra.mxu0 0.0
    %210 = vmatprep.subr.mxu0 0.0
    %211 = vmatpush1.msra.mxu0 0.0
    %212 = vmatprep.subr.mxu0 0.0
    %213 = vmatpush1.msra.mxu0 %v76
    %214 = vmatprep.subr.mxu0 0.0
    %215 = vmatpush1.msra.mxu0 %v75
    %216 = vmatprep.subr.mxu0 0.0
    %217 = vmatpush1.msra.mxu0 %v74
    %218 = vmatprep.subr.mxu0 0.0
    %219 = vmatpush1.msra.mxu0 %v73
    %220 = vmatprep.subr.mxu0 0.0
    %221 = vmatpush2.msra.mxu0 0.0
    %222 = vmatprep.subr.mxu0 0.0
    %223 = vmatpush2.msra.mxu0 0.0
    %224 = vmatprep.subr.mxu0 0.0
    %225 = vmatpush2.msra.mxu0 0.0
    %226 = vmatprep.subr.mxu0 0.0
    %227 = vmatpush2.msra.mxu0 0.0
    %228 = vmatprep.subr.mxu0 0.0
    %229 = vmatpush2.msra.mxu0 0.0
    %230 = vmatprep.subr.mxu0 0.0
    %231 = vmatpush2.msra.mxu0 0.0
    %232 = vmatprep.subr.mxu0 0.0
    %233 = vmatpush2.msra.mxu0 0.0
    %234 = vmatprep.subr.mxu0 0.0
    %235 = vmatpush2.msra.mxu0 0.0
    %236 = vmatprep.subr.mxu0 0.0
    %237 = vmatpush2.msra.mxu0 0.0
    %238 = vmatprep.subr.mxu0 0.0
    %239 = vmatpush2.msra.mxu0 0.0
    %240 = vmatprep.subr.mxu0 0.0
    %241 = vmatpush2.msra.mxu0 0.0
    %242 = vmatprep.subr.mxu0 0.0
    %243 = vmatpush2.msra.mxu0 0.0
    %244 = vmatprep.subr.mxu0 0.0
    %245 = vmatpush2.msra.mxu0 0.0
    %246 = vmatprep.subr.mxu0 0.0
    %247 = vmatpush2.msra.mxu0 0.0
    %248 = vmatprep.subr.mxu0 0.0
    %249 = vmatpush2.msra.mxu0 0.0
    %250 = vmatprep.subr.mxu0 0.0
    %251 = vmatpush2.msra.mxu0 0.0
    %252 = vmatprep.mubr.f32.mxu0 0.0
    %253 = vmatmul.mubr.f32.gmra.mxu0 %v186
    %v254 = vpop.f32.mrf.mxu0
    %v255 = vadd.f32 %v180, %v254
    %v256 = vpop.f32.mrf.mxu0
    %257 = vdwg.mxu0
    %s258 = scalar_lea.vmem %s0, 32
    %v259 = vld [vmem:[%s258] sm:$0xff]
    %v260 = vld [vmem:[%s258 + $0x8] sm:$0xff]
    %v261 = vadd.f32 %v259, %v33
    %v262 = vadd.f32 %v260, %v38
    %v263 = vadd.f32 %v259, %v43
    %v264 = vadd.f32 %v260, %v48
    %v265 = vsel %vm54, %v261, -inf
    %v266 = vsel %vm54, %v262, -inf
    %v267 = vmax.f32 %v265, %v266
    %v268 = vrot.slane %v267, 4
    %v269 = vmax.f32 %v267, %v268
    %v270 = vrot.slane %v269, 2
    %v271 = vmax.f32 %v269, %v270
    %v272 = vrot.slane %v271, 1
    %v273 = vmax.f32 %v271, %v272
    %v274 = vsel %vm54, %v263, -inf
    %v275 = vsel %vm54, %v264, -inf
    %v276 = vmax.f32 %v274, %v275
    %v277 = vrot.slane %v276, 4
    %v278 = vmax.f32 %v276, %v277
    %v279 = vrot.slane %v278, 2
    %v280 = vmax.f32 %v278, %v279
    %v281 = vrot.slane %v280, 1
    %v282 = vmax.f32 %v280, %v281
    %s283 = scalar_lea.vmem %s2, 64
    %v284 = vld [vmem:[%s283] sm:$0xff]
    %v285 = vld [vmem:[%s283 + $0x8] sm:$0xff]
    %v286 = vld [vmem:[%s283 + $0x10] sm:$0xff]
    %v287 = vld [vmem:[%s283 + $0x18] sm:$0xff]
    %v290 = vsel %vm109, %v282, %v273
    %v291 = vsel %vm54, %v290, 0
    %293 = vmatprep.subr.mxu0 0.0
    %294 = vmatpush1.msra.mxu0 0.0
    %295 = vmatprep.subr.mxu0 0.0
    %296 = vmatpush1.msra.mxu0 0.0
    %297 = vmatprep.subr.mxu0 0.0
    %298 = vmatpush1.msra.mxu0 0.0
    %299 = vmatprep.subr.mxu0 0.0
    %300 = vmatpush1.msra.mxu0 0.0
    %301 = vmatprep.subr.mxu0 0.0
    %302 = vmatpush1.msra.mxu0 0.0
    %303 = vmatprep.subr.mxu0 0.0
    %304 = vmatpush1.msra.mxu0 0.0
    %305 = vmatprep.subr.mxu0 0.0
    %306 = vmatpush1.msra.mxu0 0.0
    %307 = vmatprep.subr.mxu0 0.0
    %308 = vmatpush1.msra.mxu0 0.0
    %309 = vmatprep.subr.mxu0 0.0
    %310 = vmatpush1.msra.mxu0 0.0
    %311 = vmatprep.subr.mxu0 0.0
    %312 = vmatpush1.msra.mxu0 0.0
    %313 = vmatprep.subr.mxu0 0.0
    %314 = vmatpush1.msra.mxu0 0.0
    %315 = vmatprep.subr.mxu0 0.0
    %316 = vmatpush1.msra.mxu0 0.0
    %317 = vmatprep.subr.mxu0 0.0
    %318 = vmatpush1.msra.mxu0 %v287
    %319 = vmatprep.subr.mxu0 0.0
    %320 = vmatpush1.msra.mxu0 %v286
    %321 = vmatprep.subr.mxu0 0.0
    %322 = vmatpush1.msra.mxu0 %v285
    %323 = vmatprep.subr.mxu0 0.0
    %324 = vmatpush1.msra.mxu0 %v284
    %325 = vmatprep.subr.mxu0 0.0
    %326 = vmatpush2.msra.mxu0 0.0
    %327 = vmatprep.subr.mxu0 0.0
    %328 = vmatpush2.msra.mxu0 0.0
    %329 = vmatprep.subr.mxu0 0.0
    %330 = vmatpush2.msra.mxu0 0.0
    %331 = vmatprep.subr.mxu0 0.0
    %332 = vmatpush2.msra.mxu0 0.0
    %333 = vmatprep.subr.mxu0 0.0
    %334 = vmatpush2.msra.mxu0 0.0
    %335 = vmatprep.subr.mxu0 0.0
    %336 = vmatpush2.msra.mxu0 0.0
    %337 = vmatprep.subr.mxu0 0.0
    %338 = vmatpush2.msra.mxu0 0.0
    %339 = vmatprep.subr.mxu0 0.0
    %340 = vmatpush2.msra.mxu0 0.0
    %341 = vmatprep.subr.mxu0 0.0
    %342 = vmatpush2.msra.mxu0 0.0
    %343 = vmatprep.subr.mxu0 0.0
    %344 = vmatpush2.msra.mxu0 0.0
    %345 = vmatprep.subr.mxu0 0.0
    %346 = vmatpush2.msra.mxu0 0.0
    %347 = vmatprep.subr.mxu0 0.0
    %348 = vmatpush2.msra.mxu0 0.0
    %349 = vmatprep.subr.mxu0 0.0
    %350 = vmatpush2.msra.mxu0 0.0
    %351 = vmatprep.subr.mxu0 0.0
    %352 = vmatpush2.msra.mxu0 0.0
    %353 = vmatprep.subr.mxu0 0.0
    %354 = vmatpush2.msra.mxu0 0.0
    %355 = vmatprep.subr.mxu0 0.0
    %356 = vmatpush2.msra.mxu0 0.0
    %357 = vmatprep.mubr.f32.mxu0 0.0
    %358 = vmatmul.mubr.f32.gmra.mxu0 %v291
    %v359 = vpop.f32.mrf.mxu0
    %v360 = vadd.f32 0.0, %v359
    %v361 = vpop.f32.mrf.mxu0
    %362 = vdwg.mxu0
    %v363 = vadd.f32 %v255, %v360
    %s364 = scalar_lea.vmem %s0, 48
    %v365 = vld [vmem:[%s364] sm:$0xff]
    %v366 = vld [vmem:[%s364 + $0x8] sm:$0xff]
    %v367 = vadd.f32 %v365, %v33
    %v368 = vadd.f32 %v366, %v38
    %v369 = vadd.f32 %v365, %v43
    %v370 = vadd.f32 %v366, %v48
    %v371 = vsel %vm54, %v367, -inf
    %v372 = vsel %vm54, %v368, -inf
    %v373 = vmax.f32 %v371, %v372
    %v374 = vrot.slane %v373, 4
    %v375 = vmax.f32 %v373, %v374
    %v376 = vrot.slane %v375, 2
    %v377 = vmax.f32 %v375, %v376
    %v378 = vrot.slane %v377, 1
    %v379 = vmax.f32 %v377, %v378
    %v380 = vsel %vm54, %v369, -inf
    %v381 = vsel %vm54, %v370, -inf
    %v382 = vmax.f32 %v380, %v381
    %v383 = vrot.slane %v382, 4
    %v384 = vmax.f32 %v382, %v383
    %v385 = vrot.slane %v384, 2
    %v386 = vmax.f32 %v384, %v385
    %v387 = vrot.slane %v386, 1
    %v388 = vmax.f32 %v386, %v387
    %s389 = scalar_lea.vmem %s2, 96
    %v390 = vld [vmem:[%s389] sm:$0xff]
    %v391 = vld [vmem:[%s389 + $0x8] sm:$0xff]
    %v392 = vld [vmem:[%s389 + $0x10] sm:$0xff]
    %v393 = vld [vmem:[%s389 + $0x18] sm:$0xff]
    %v396 = vsel %vm109, %v388, %v379
    %v397 = vsel %vm54, %v396, 0
    %399 = vmatprep.subr.mxu0 0.0
    %400 = vmatpush1.msra.mxu0 0.0
    %401 = vmatprep.subr.mxu0 0.0
    %402 = vmatpush1.msra.mxu0 0.0
    %403 = vmatprep.subr.mxu0 0.0
    %404 = vmatpush1.msra.mxu0 0.0
    %405 = vmatprep.subr.mxu0 0.0
    %406 = vmatpush1.msra.mxu0 0.0
    %407 = vmatprep.subr.mxu0 0.0
    %408 = vmatpush1.msra.mxu0 0.0
    %409 = vmatprep.subr.mxu0 0.0
    %410 = vmatpush1.msra.mxu0 0.0
    %411 = vmatprep.subr.mxu0 0.0
    %412 = vmatpush1.msra.mxu0 0.0
    %413 = vmatprep.subr.mxu0 0.0
    %414 = vmatpush1.msra.mxu0 0.0
    %415 = vmatprep.subr.mxu0 0.0
    %416 = vmatpush1.msra.mxu0 0.0
    %417 = vmatprep.subr.mxu0 0.0
    %418 = vmatpush1.msra.mxu0 0.0
    %419 = vmatprep.subr.mxu0 0.0
    %420 = vmatpush1.msra.mxu0 0.0
    %421 = vmatprep.subr.mxu0 0.0
    %422 = vmatpush1.msra.mxu0 0.0
    %423 = vmatprep.subr.mxu0 0.0
    %424 = vmatpush1.msra.mxu0 %v393
    %425 = vmatprep.subr.mxu0 0.0
    %426 = vmatpush1.msra.mxu0 %v392
    %427 = vmatprep.subr.mxu0 0.0
    %428 = vmatpush1.msra.mxu0 %v391
    %429 = vmatprep.subr.mxu0 0.0
    %430 = vmatpush1.msra.mxu0 %v390
    %431 = vmatprep.subr.mxu0 0.0
    %432 = vmatpush2.msra.mxu0 0.0
    %433 = vmatprep.subr.mxu0 0.0
    %434 = vmatpush2.msra.mxu0 0.0
    %435 = vmatprep.subr.mxu0 0.0
    %436 = vmatpush2.msra.mxu0 0.0
    %437 = vmatprep.subr.mxu0 0.0
    %438 = vmatpush2.msra.mxu0 0.0
    %439 = vmatprep.subr.mxu0 0.0
    %440 = vmatpush2.msra.mxu0 0.0
    %441 = vmatprep.subr.mxu0 0.0
    %442 = vmatpush2.msra.mxu0 0.0
    %443 = vmatprep.subr.mxu0 0.0
    %444 = vmatpush2.msra.mxu0 0.0
    %445 = vmatprep.subr.mxu0 0.0
    %446 = vmatpush2.msra.mxu0 0.0
    %447 = vmatprep.subr.mxu0 0.0
    %448 = vmatpush2.msra.mxu0 0.0
    %449 = vmatprep.subr.mxu0 0.0
    %450 = vmatpush2.msra.mxu0 0.0
    %451 = vmatprep.subr.mxu0 0.0
    %452 = vmatpush2.msra.mxu0 0.0
    %453 = vmatprep.subr.mxu0 0.0
    %454 = vmatpush2.msra.mxu0 0.0
    %455 = vmatprep.subr.mxu0 0.0
    %456 = vmatpush2.msra.mxu0 0.0
    %457 = vmatprep.subr.mxu0 0.0
    %458 = vmatpush2.msra.mxu0 0.0
    %459 = vmatprep.subr.mxu0 0.0
    %460 = vmatpush2.msra.mxu0 0.0
    %461 = vmatprep.subr.mxu0 0.0
    %462 = vmatpush2.msra.mxu0 0.0
    %463 = vmatprep.mubr.f32.mxu0 0.0
    %464 = vmatmul.mubr.f32.gmra.mxu0 %v397
    %v465 = vpop.f32.mrf.mxu0
    %v466 = vadd.f32 0.0, %v465
    %v467 = vpop.f32.mrf.mxu0
    %468 = vdwg.mxu0
    %v469 = vadd.f32 %v363, %v466
    %s470 = scalar_lea.vmem %s0, 64
    %v471 = vld [vmem:[%s470] sm:$0xff]
    %v472 = vld [vmem:[%s470 + $0x8] sm:$0xff]
    %v473 = vadd.f32 %v471, %v33
    %v474 = vadd.f32 %v472, %v38
    %v475 = vadd.f32 %v471, %v43
    %v476 = vadd.f32 %v472, %v48
    %v477 = vsel %vm54, %v473, -inf
    %v478 = vsel %vm54, %v474, -inf
    %v479 = vmax.f32 %v477, %v478
    %v480 = vrot.slane %v479, 4
    %v481 = vmax.f32 %v479, %v480
    %v482 = vrot.slane %v481, 2
    %v483 = vmax.f32 %v481, %v482
    %v484 = vrot.slane %v483, 1
    %v485 = vmax.f32 %v483, %v484
    %v486 = vsel %vm54, %v475, -inf
    %v487 = vsel %vm54, %v476, -inf
    %v488 = vmax.f32 %v486, %v487
    %v489 = vrot.slane %v488, 4
    %v490 = vmax.f32 %v488, %v489
    %v491 = vrot.slane %v490, 2
    %v492 = vmax.f32 %v490, %v491
    %v493 = vrot.slane %v492, 1
    %v494 = vmax.f32 %v492, %v493
    %s495 = scalar_lea.vmem %s2, 128
    %v496 = vld [vmem:[%s495] sm:$0xff]
    %v497 = vld [vmem:[%s495 + $0x8] sm:$0xff]
    %v498 = vld [vmem:[%s495 + $0x10] sm:$0xff]
    %v499 = vld [vmem:[%s495 + $0x18] sm:$0xff]
    %v502 = vsel %vm109, %v494, %v485
    %v503 = vsel %vm54, %v502, 0
    %505 = vmatprep.subr.mxu0 0.0
    %506 = vmatpush1.msra.mxu0 0.0
    %507 = vmatprep.subr.mxu0 0.0
    %508 = vmatpush1.msra.mxu0 0.0
    %509 = vmatprep.subr.mxu0 0.0
    %510 = vmatpush1.msra.mxu0 0.0
    %511 = vmatprep.subr.mxu0 0.0
    %512 = vmatpush1.msra.mxu0 0.0
    %513 = vmatprep.subr.mxu0 0.0
    %514 = vmatpush1.msra.mxu0 0.0
    %515 = vmatprep.subr.mxu0 0.0
    %516 = vmatpush1.msra.mxu0 0.0
    %517 = vmatprep.subr.mxu0 0.0
    %518 = vmatpush1.msra.mxu0 0.0
    %519 = vmatprep.subr.mxu0 0.0
    %520 = vmatpush1.msra.mxu0 0.0
    %521 = vmatprep.subr.mxu0 0.0
    %522 = vmatpush1.msra.mxu0 0.0
    %523 = vmatprep.subr.mxu0 0.0
    %524 = vmatpush1.msra.mxu0 0.0
    %525 = vmatprep.subr.mxu0 0.0
    %526 = vmatpush1.msra.mxu0 0.0
    %527 = vmatprep.subr.mxu0 0.0
    %528 = vmatpush1.msra.mxu0 0.0
    %529 = vmatprep.subr.mxu0 0.0
    %530 = vmatpush1.msra.mxu0 %v499
    %531 = vmatprep.subr.mxu0 0.0
    %532 = vmatpush1.msra.mxu0 %v498
    %533 = vmatprep.subr.mxu0 0.0
    %534 = vmatpush1.msra.mxu0 %v497
    %535 = vmatprep.subr.mxu0 0.0
    %536 = vmatpush1.msra.mxu0 %v496
    %537 = vmatprep.subr.mxu0 0.0
    %538 = vmatpush2.msra.mxu0 0.0
    %539 = vmatprep.subr.mxu0 0.0
    %540 = vmatpush2.msra.mxu0 0.0
    %541 = vmatprep.subr.mxu0 0.0
    %542 = vmatpush2.msra.mxu0 0.0
    %543 = vmatprep.subr.mxu0 0.0
    %544 = vmatpush2.msra.mxu0 0.0
    %545 = vmatprep.subr.mxu0 0.0
    %546 = vmatpush2.msra.mxu0 0.0
    %547 = vmatprep.subr.mxu0 0.0
    %548 = vmatpush2.msra.mxu0 0.0
    %549 = vmatprep.subr.mxu0 0.0
    %550 = vmatpush2.msra.mxu0 0.0
    %551 = vmatprep.subr.mxu0 0.0
    %552 = vmatpush2.msra.mxu0 0.0
    %553 = vmatprep.subr.mxu0 0.0
    %554 = vmatpush2.msra.mxu0 0.0
    %555 = vmatprep.subr.mxu0 0.0
    %556 = vmatpush2.msra.mxu0 0.0
    %557 = vmatprep.subr.mxu0 0.0
    %558 = vmatpush2.msra.mxu0 0.0
    %559 = vmatprep.subr.mxu0 0.0
    %560 = vmatpush2.msra.mxu0 0.0
    %561 = vmatprep.subr.mxu0 0.0
    %562 = vmatpush2.msra.mxu0 0.0
    %563 = vmatprep.subr.mxu0 0.0
    %564 = vmatpush2.msra.mxu0 0.0
    %565 = vmatprep.subr.mxu0 0.0
    %566 = vmatpush2.msra.mxu0 0.0
    %567 = vmatprep.subr.mxu0 0.0
    %568 = vmatpush2.msra.mxu0 0.0
    %569 = vmatprep.mubr.f32.mxu0 0.0
    %570 = vmatmul.mubr.f32.gmra.mxu0 %v503
    %v571 = vpop.f32.mrf.mxu0
    %v572 = vadd.f32 0.0, %v571
    %v573 = vpop.f32.mrf.mxu0
    %574 = vdwg.mxu0
    %v575 = vadd.f32 %v469, %v572
    %v576 = vld [vmem:[%s3] sm:$0x1]
    %v578 = vlaneseq
    %v579 = vshrl.u32 %v578, 7
    %v580 = vsub.s32 0, %v579
    %v581 = vrot.slane %v576, %v580
    %v583 = vadd.f32 %v575, %v581
    %v584 = vmax.f32 %v583, 0.0
    %v585 = vld [vmem:[%s4] sm:$0xff]
    %v586 = vld [vmem:[%s4 + $0x8] sm:$0xff]
    %v587 = vld [vmem:[%s4 + $0x10] sm:$0xff]
    %v588 = vld [vmem:[%s4 + $0x18] sm:$0xff]
    %v589 = vld [vmem:[%s4 + $0x20] sm:$0xff]
    %v590 = vld [vmem:[%s4 + $0x28] sm:$0xff]
    %v591 = vld [vmem:[%s4 + $0x30] sm:$0xff]
    %v592 = vld [vmem:[%s4 + $0x38] sm:$0xff]
    %v593 = vld [vmem:[%s4 + $0x40] sm:$0xff]
    %v594 = vld [vmem:[%s4 + $0x48] sm:$0xff]
    %v595 = vld [vmem:[%s4 + $0x50] sm:$0xff]
    %v596 = vld [vmem:[%s4 + $0x58] sm:$0xff]
    %v597 = vld [vmem:[%s4 + $0x60] sm:$0xff]
    %v598 = vld [vmem:[%s4 + $0x68] sm:$0xff]
    %v599 = vld [vmem:[%s4 + $0x70] sm:$0xff]
    %v600 = vld [vmem:[%s4 + $0x78] sm:$0xff]
    %v601 = vld [vmem:[%s5] sm:$0x1]
    %v603 = vlaneseq
    %v604 = vshrl.u32 %v603, 7
    %v605 = vsub.s32 0, %v604
    %v606 = vrot.slane %v601, %v605
    %608 = vmatprep.subr.mxu0 0.0
    %609 = vmatpush1.msra.mxu0 %v600
    %610 = vmatprep.subr.mxu0 0.0
    %611 = vmatpush1.msra.mxu0 %v599
    %612 = vmatprep.subr.mxu0 0.0
    %613 = vmatpush1.msra.mxu0 %v598
    %614 = vmatprep.subr.mxu0 0.0
    %615 = vmatpush1.msra.mxu0 %v597
    %616 = vmatprep.subr.mxu0 0.0
    %617 = vmatpush1.msra.mxu0 %v596
    %618 = vmatprep.subr.mxu0 0.0
    %619 = vmatpush1.msra.mxu0 %v595
    %620 = vmatprep.subr.mxu0 0.0
    %621 = vmatpush1.msra.mxu0 %v594
    %622 = vmatprep.subr.mxu0 0.0
    %623 = vmatpush1.msra.mxu0 %v593
    %624 = vmatprep.subr.mxu0 0.0
    %625 = vmatpush1.msra.mxu0 %v592
    %626 = vmatprep.subr.mxu0 0.0
    %627 = vmatpush1.msra.mxu0 %v591
    %628 = vmatprep.subr.mxu0 0.0
    %629 = vmatpush1.msra.mxu0 %v590
    %630 = vmatprep.subr.mxu0 0.0
    %631 = vmatpush1.msra.mxu0 %v589
    %632 = vmatprep.subr.mxu0 0.0
    %633 = vmatpush1.msra.mxu0 %v588
    %634 = vmatprep.subr.mxu0 0.0
    %635 = vmatpush1.msra.mxu0 %v587
    %636 = vmatprep.subr.mxu0 0.0
    %637 = vmatpush1.msra.mxu0 %v586
    %638 = vmatprep.subr.mxu0 0.0
    %639 = vmatpush1.msra.mxu0 %v585
    %640 = vmatprep.subr.mxu0 0.0
    %641 = vmatpush2.msra.mxu0 0.0
    %642 = vmatprep.subr.mxu0 0.0
    %643 = vmatpush2.msra.mxu0 0.0
    %644 = vmatprep.subr.mxu0 0.0
    %645 = vmatpush2.msra.mxu0 0.0
    %646 = vmatprep.subr.mxu0 0.0
    %647 = vmatpush2.msra.mxu0 0.0
    %648 = vmatprep.subr.mxu0 0.0
    %649 = vmatpush2.msra.mxu0 0.0
    %650 = vmatprep.subr.mxu0 0.0
    %651 = vmatpush2.msra.mxu0 0.0
    %652 = vmatprep.subr.mxu0 0.0
    %653 = vmatpush2.msra.mxu0 0.0
    %654 = vmatprep.subr.mxu0 0.0
    %655 = vmatpush2.msra.mxu0 0.0
    %656 = vmatprep.subr.mxu0 0.0
    %657 = vmatpush2.msra.mxu0 0.0
    %658 = vmatprep.subr.mxu0 0.0
    %659 = vmatpush2.msra.mxu0 0.0
    %660 = vmatprep.subr.mxu0 0.0
    %661 = vmatpush2.msra.mxu0 0.0
    %662 = vmatprep.subr.mxu0 0.0
    %663 = vmatpush2.msra.mxu0 0.0
    %664 = vmatprep.subr.mxu0 0.0
    %665 = vmatpush2.msra.mxu0 0.0
    %666 = vmatprep.subr.mxu0 0.0
    %667 = vmatpush2.msra.mxu0 0.0
    %668 = vmatprep.subr.mxu0 0.0
    %669 = vmatpush2.msra.mxu0 0.0
    %670 = vmatprep.subr.mxu0 0.0
    %671 = vmatpush2.msra.mxu0 0.0
    %672 = vmatprep.mubr.f32.mxu0 0.0
    %673 = vmatmul.mubr.f32.gmra.mxu0 %v584
    %v674 = vpop.f32.mrf.mxu0
    %v675 = vadd.f32 %v606, %v674
    %v676 = vpop.f32.mrf.mxu0
    %677 = vdwg.mxu0
    %678 = vst [vmem:[#allocation2] sm:$0x3] %v675
    // Predicated region
    $region26: #{gine_forward.3} parent=1 // pred_check
      _
    $region27: #{gine_forward.3} parent=1 // pred_check_branch
      %680 = sbr.rel (0) target = $region29
    $region28: #{gine_forward.3} parent=1 // pred_region
      %s682 = ssub.s32 32, 32
      %683 = vsyncadd [#allocation3], %s682
      %s685 = sshll.u32 [#allocation2], 4
      %s686 = int_to_ptr.vmem [resolvable:$true] %s685
      %688 = dma.vmem_to_hbm [thread:$0]  %s686, 32, %s6, [#allocation3]
    $region29: #{gine_forward.3} parent=1 // pred_fallthru
      _
    // Predicated region
    $region30: #{gine_forward.3} parent=1 // pred_check
      _
    $region31: #{gine_forward.3} parent=1 // pred_check_branch
      %690 = sbr.rel (0) target = $region33
    $region32: #{gine_forward.3} parent=1 // pred_region
      %691 = dma.done [#allocation3], 32
    $region33: #{gine_forward.3} parent=1 // pred_fallthru
      _
    %692 = vsyncpa [#allocation3], 1

// kernel: gine_forward.2
$region0: #{gine_forward.2}
  #allocation0 [shape = 'u32[]', space=smem, size = 0x4, offset = 0x4, fixed_abs, tag = 'smem constant byte address 0x4 - core index']
  #allocation1 [shape = 'u32[144,128]{1,0:T(1,128)}', space=vmem, size = 0x12000, scoped, tag = 'internal scratch']
  %s0 = inlined_call_operand.vmem [shape: f32[16,32], index: 0, kind: input, shape index: {}]
  %s1 = inlined_call_operand.vmem [shape: s32[32,1], index: 1, kind: input, shape index: {}]
  %s2 = inlined_call_operand.vmem [shape: s32[1,32], index: 2, kind: input, shape index: {}]
  %s3 = inlined_call_operand.vmem [shape: f32[32,1], index: 3, kind: input, shape index: {}]
  %s4 = inlined_call_operand.vmem [shape: f32[5,1,32], index: 4, kind: input, shape index: {}]
  %s5 = inlined_call_operand.vmem [shape: f32[5,1,32], index: 5, kind: input, shape index: {}]
  %s6 = inlined_call_operand.hbm [shape: f32[5,32,32], index: 6, kind: input, shape index: {}]
  %s7 = inlined_call_operand.vmem [shape: f32[5,1,32], index: 7, kind: input, shape index: {}]
  %s8 = inlined_call_operand.hbm [shape: f32[5,32,32], index: 8, kind: input, shape index: {}]
  %s9 = inlined_call_operand.vmem [shape: f32[5,1,32], index: 9, kind: input, shape index: {}]
  %s10 = inlined_call_operand.vmem [shape: f32[5], index: 10, kind: input, shape index: {}]
  %s11 = inlined_call_operand.vmem [shape: f32[5,16,32], index: 11, kind: output, shape index: {}]
  %s12 = sld [smem:[#allocation0]]
  $region66: #{gine_forward.2} parent=0
    _
  %s14 = ssub.s32 1, %s12
  %s15 = scalar_select 0, %s14, %s12
  $region1: #{gine_forward.2} parent=0
    #allocation2 [shape = 'u8[81920]{0}', space=vmem, size = 0x14000, scoped, tag = 'input window, operand 6, single buffered']
    #allocation3 [shape = 's32[1]{0}', space=sflag, size = 0x4, scoped, tag = 'scoped memory for gine_forward.2']
    #allocation4 [shape = 's32[1]{0}', space=sflag, size = 0x4, scoped, tag = 'scoped memory for gine_forward.2']
    #allocation5 [shape = 'u8[81920]{0}', space=vmem, size = 0x14000, scoped, tag = 'input window, operand 8, single buffered']
    #allocation6 [shape = 's32[1]{0}', space=sflag, size = 0x4, scoped, tag = 'scoped memory for gine_forward.2']
    #allocation7 [shape = 'u8[512]{0}', space=smem, size = 0x200, scoped, tag = 'input window, operand 10, single buffered']
    %16 = vsyncpa [#allocation3], 0
    %17 = vsyncpa [#allocation6], 0
    %18 = vsyncpa [#allocation4], 0
    // Predicated region
    $region2: #{gine_forward.2} parent=1 // pred_check
      _
    $region3: #{gine_forward.2} parent=1 // pred_check_branch
      %20 = sbr.rel (0) target = $region5
    $region4: #{gine_forward.2} parent=1 // pred_region
      _
    $region5: #{gine_forward.2} parent=1 // pred_fallthru
      _
    // Predicated region
    $region6: #{gine_forward.2} parent=1 // pred_check
      _
    $region7: #{gine_forward.2} parent=1 // pred_check_branch
      %22 = sbr.rel (0) target = $region9
    $region8: #{gine_forward.2} parent=1 // pred_region
      _
    $region9: #{gine_forward.2} parent=1 // pred_fallthru
      _
    // Predicated region
    $region10: #{gine_forward.2} parent=1 // pred_check
      _
    $region11: #{gine_forward.2} parent=1 // pred_check_branch
      %24 = sbr.rel (0) target = $region13
    $region12: #{gine_forward.2} parent=1 // pred_region
      _
    $region13: #{gine_forward.2} parent=1 // pred_fallthru
      _
    // Predicated region
    $region14: #{gine_forward.2} parent=1 // pred_check
      _
    $region15: #{gine_forward.2} parent=1 // pred_check_branch
      %26 = sbr.rel (0) target = $region17
    $region16: #{gine_forward.2} parent=1 // pred_region
      _
    $region17: #{gine_forward.2} parent=1 // pred_fallthru
      _
    // Predicated region
    $region18: #{gine_forward.2} parent=1 // pred_check
      _
    $region19: #{gine_forward.2} parent=1 // pred_check_branch
      %28 = sbr.rel (0) target = $region21
    $region20: #{gine_forward.2} parent=1 // pred_region
      _
    $region21: #{gine_forward.2} parent=1 // pred_fallthru
      _
    // Predicated region
    $region22: #{gine_forward.2} parent=1 // pred_check
      _
    $region23: #{gine_forward.2} parent=1 // pred_check_branch
      %30 = sbr.rel (0) target = $region25
    $region24: #{gine_forward.2} parent=1 // pred_region
      _
    $region25: #{gine_forward.2} parent=1 // pred_fallthru
      _
    // Predicated region
    $region26: #{gine_forward.2} parent=1 // pred_check
      _
    $region27: #{gine_forward.2} parent=1 // pred_check_branch
      %32 = sbr.rel (0) target = $region29
    $region28: #{gine_forward.2} parent=1 // pred_region
      %s34 = ssub.s32 2560, 2560
      %35 = vsyncadd [#allocation3], %s34
      %s36 = sshll.u32 [#allocation2], 4
      %s37 = int_to_ptr.vmem [resolvable:$true] %s36
      %42 = dma.hbm_to_vmem [thread:$0]  %s6, 2560, %s37, [#allocation3], 128, 128, 8
    $region29: #{gine_forward.2} parent=1 // pred_fallthru
      _
    // Predicated region
    $region30: #{gine_forward.2} parent=1 // pred_check
      _
    $region31: #{gine_forward.2} parent=1 // pred_check_branch
      %44 = sbr.rel (0) target = $region33
    $region32: #{gine_forward.2} parent=1 // pred_region
      _
    $region33: #{gine_forward.2} parent=1 // pred_fallthru
      _
    // Predicated region
    $region34: #{gine_forward.2} parent=1 // pred_check
      _
    $region35: #{gine_forward.2} parent=1 // pred_check_branch
      %46 = sbr.rel (0) target = $region37
    $region36: #{gine_forward.2} parent=1 // pred_region
      %s48 = ssub.s32 2560, 2560
      %49 = vsyncadd [#allocation6], %s48
      %s50 = sshll.u32 [#allocation5], 4
      %s51 = int_to_ptr.vmem [resolvable:$true] %s50
      %56 = dma.hbm_to_vmem [thread:$0]  %s8, 2560, %s51, [#allocation6], 128, 128, 8
    $region37: #{gine_forward.2} parent=1 // pred_fallthru
      _
    // Predicated region
    $region38: #{gine_forward.2} parent=1 // pred_check
      _
    $region39: #{gine_forward.2} parent=1 // pred_check_branch
      %58 = sbr.rel (0) target = $region41
    $region40: #{gine_forward.2} parent=1 // pred_region
      _
    $region41: #{gine_forward.2} parent=1 // pred_fallthru
      _
    // Predicated region
    $region42: #{gine_forward.2} parent=1 // pred_check
      _
    $region43: #{gine_forward.2} parent=1 // pred_check_branch
      %60 = sbr.rel (0) target = $region45
    $region44: #{gine_forward.2} parent=1 // pred_region
      %s62 = ssub.s32 16, 16
      %63 = vsyncadd [#allocation4], %s62
      %s65 = sshll.u32 %s10, 4
      %s66 = int_to_ptr.vmem [resolvable:$true] %s65
      %68 = dma.vmem_to_smem %s66, 16, [#allocation7], [#allocation4]
    $region45: #{gine_forward.2} parent=1 // pred_fallthru
      _
    // Predicated region
    $region46: #{gine_forward.2} parent=1 // pred_check
      _
    $region47: #{gine_forward.2} parent=1 // pred_check_branch
      %70 = sbr.rel (0) target = $region49
    $region48: #{gine_forward.2} parent=1 // pred_region
      %71 = dma.done [#allocation3], 2560
    $region49: #{gine_forward.2} parent=1 // pred_fallthru
      _
    // Predicated region
    $region50: #{gine_forward.2} parent=1 // pred_check
      _
    $region51: #{gine_forward.2} parent=1 // pred_check_branch
      %73 = sbr.rel (0) target = $region53
    $region52: #{gine_forward.2} parent=1 // pred_region
      %74 = dma.done [#allocation6], 2560
    $region53: #{gine_forward.2} parent=1 // pred_fallthru
      _
    // Predicated region
    $region54: #{gine_forward.2} parent=1 // pred_check
      _
    $region55: #{gine_forward.2} parent=1 // pred_check_branch
      %76 = sbr.rel (0) target = $region57
    $region56: #{gine_forward.2} parent=1 // pred_region
      %77 = dma.done [#allocation4], 16
    $region57: #{gine_forward.2} parent=1 // pred_fallthru
      _
    %78 = sfence
    %v79 = vlaneseq
    %v80 = vand.u32 %v79, 127
    %v81 = vld [vmem:[%s1] sm:$0xff]
    %v82 = vld [vmem:[%s1 + $0x8] sm:$0xff]
    %v83 = vld [vmem:[%s1 + $0x10] sm:$0xff]
    %v84 = vld [vmem:[%s1 + $0x18] sm:$0xff]
    %85 = vset.pattern.permute.xlu0 0
    %86 = vperm.xlu0 %85, %v81
    %v87 = vpop.permute.xlu0 %86
    %88 = vset.pattern.permute.xlu0 0
    %89 = vperm.xlu0 %88, %v82
    %v90 = vpop.permute.xlu0 %89
    %91 = vset.pattern.permute.xlu0 0
    %92 = vperm.xlu0 %91, %v83
    %v93 = vpop.permute.xlu0 %92
    %94 = vset.pattern.permute.xlu0 0
    %95 = vperm.xlu0 %94, %v84
    %v96 = vpop.permute.xlu0 %95
    %vm97 = vcmp.eq.s32.totalorder %v80, %v87
    %vm98 = vcmp.eq.s32.totalorder %v80, %v90
    %vm99 = vcmp.eq.s32.totalorder %v80, %v93
    %vm100 = vcmp.eq.s32.totalorder %v80, %v96
    %v101 = vsel %vm97, 1, 0
    %v102 = vsel %vm98, 1, 0
    %v103 = vsel %vm99, 1, 0
    %v104 = vsel %vm100, 1, 0
    %v105 = vcvt.s32.f32 %v101
    %v106 = vcvt.s32.f32 %v102
    %v107 = vcvt.s32.f32 %v103
    %v108 = vcvt.s32.f32 %v104
    %v109 = vlaneseq
    %v110 = vshrl.u32 %v109, 7
    %v111 = vadd.s32 %v110, 8
    %v112 = vld [vmem:[%s2] sm:$0x1]
    %v113 = vlaneseq
    %v114 = vshrl.u32 %v113, 7
    %v115 = vsub.s32 0, %v114
    %v116 = vrot.slane %v112, %v115
    %vm117 = vcmp.eq.s32.totalorder %v110, %v116
    %vm118 = vcmp.eq.s32.totalorder %v111, %v116
    %v119 = vsel %vm117, 1, 0
    %v120 = vsel %vm118, 1, 0
    %v121 = vcvt.s32.f32 %v119
    %v122 = vcvt.s32.f32 %v120
    %v123 = vld [vmem:[%s3] sm:$0xff]
    %v124 = vld [vmem:[%s3 + $0x8] sm:$0xff]
    %v125 = vld [vmem:[%s3 + $0x10] sm:$0xff]
    %v126 = vld [vmem:[%s3 + $0x18] sm:$0xff]
    %v127 = vld [vmem:[%s0] sm:$0xff]
    %v128 = vld [vmem:[%s0 + $0x8] sm:$0xff]
    %v129 = vld [vmem:[%s4] sm:$0x1]
    %131 = vset.pattern.permute.xlu0 0
    %132 = vperm.xlu0 %131, %v123
    %v133 = vpop.permute.xlu0 %132
    %136 = vset.pattern.permute.xlu0 0
    %137 = vperm.xlu0 %136, %v124
    %v138 = vpop.permute.xlu0 %137
    %141 = vset.pattern.permute.xlu0 0
    %142 = vperm.xlu0 %141, %v125
    %v143 = vpop.permute.xlu0 %142
    %146 = vset.pattern.permute.xlu0 0
    %147 = vperm.xlu0 %146, %v126
    %v148 = vpop.permute.xlu0 %147
    %v151 = vlaneseq
    %v152 = vshrl.u32 %v151, 7
    %v153 = vsub.s32 0, %v152
    %v154 = vrot.slane %v129, %v153
    %v156 = vmul.f32 %v133, %v154
    %v157 = vmul.f32 %v138, %v154
    %v158 = vmul.f32 %v143, %v154
    %v159 = vmul.f32 %v148, %v154
    %v160 = vld [vmem:[%s5] sm:$0x1]
    %v162 = vlaneseq
    %v163 = vshrl.u32 %v162, 7
    %v164 = vsub.s32 0, %v163
    %v165 = vrot.slane %v160, %v164
    %v167 = vadd.f32 %v156, %v165
    %v168 = vadd.f32 %v157, %v165
    %v169 = vadd.f32 %v158, %v165
    %v170 = vadd.f32 %v159, %v165
    %vm171 = vcmask 130048
    %v173 = vsel %vm171, %v105, 0
    %v176 = vsel %vm171, %v106, 0
    %v179 = vsel %vm171, %v107, 0
    %v182 = vsel %vm171, %v108, 0
    %184 = vmatprep.subr.mxu0 0.0
    %185 = vmatpush1.msra.mxu0 0.0
    %186 = vmatprep.subr.mxu0 0.0
    %187 = vmatpush1.msra.mxu0 0.0
    %188 = vmatprep.subr.mxu0 0.0
    %189 = vmatpush1.msra.mxu0 0.0
    %190 = vmatprep.subr.mxu0 0.0
    %191 = vmatpush1.msra.mxu0 0.0
    %192 = vmatprep.subr.mxu0 0.0
    %193 = vmatpush1.msra.mxu0 0.0
    %194 = vmatprep.subr.mxu0 0.0
    %195 = vmatpush1.msra.mxu0 0.0
    %196 = vmatprep.subr.mxu0 0.0
    %197 = vmatpush1.msra.mxu0 0.0
    %198 = vmatprep.subr.mxu0 0.0
    %199 = vmatpush1.msra.mxu0 0.0
    %200 = vmatprep.subr.mxu0 0.0
    %201 = vmatpush1.msra.mxu0 0.0
    %202 = vmatprep.subr.mxu0 0.0
    %203 = vmatpush1.msra.mxu0 0.0
    %204 = vmatprep.subr.mxu0 0.0
    %205 = vmatpush1.msra.mxu0 0.0
    %206 = vmatprep.subr.mxu0 0.0
    %207 = vmatpush1.msra.mxu0 0.0
    %208 = vmatprep.subr.mxu0 0.0
    %209 = vmatpush1.msra.mxu0 0.0
    %210 = vmatprep.subr.mxu0 0.0
    %211 = vmatpush1.msra.mxu0 0.0
    %212 = vmatprep.subr.mxu0 0.0
    %213 = vmatpush1.msra.mxu0 %v128
    %214 = vmatprep.subr.mxu0 0.0
    %215 = vmatpush1.msra.mxu0 %v127
    %216 = vmatprep.subr.mxu0 0.0
    %217 = vmatpush2.msra.mxu0 0.0
    %218 = vmatprep.subr.mxu0 0.0
    %219 = vmatpush2.msra.mxu0 0.0
    %220 = vmatprep.subr.mxu0 0.0
    %221 = vmatpush2.msra.mxu0 0.0
    %222 = vmatprep.subr.mxu0 0.0
    %223 = vmatpush2.msra.mxu0 0.0
    %224 = vmatprep.subr.mxu0 0.0
    %225 = vmatpush2.msra.mxu0 0.0
    %226 = vmatprep.subr.mxu0 0.0
    %227 = vmatpush2.msra.mxu0 0.0
    %228 = vmatprep.subr.mxu0 0.0
    %229 = vmatpush2.msra.mxu0 0.0
    %230 = vmatprep.subr.mxu0 0.0
    %231 = vmatpush2.msra.mxu0 0.0
    %232 = vmatprep.subr.mxu0 0.0
    %233 = vmatpush2.msra.mxu0 0.0
    %234 = vmatprep.subr.mxu0 0.0
    %235 = vmatpush2.msra.mxu0 0.0
    %236 = vmatprep.subr.mxu0 0.0
    %237 = vmatpush2.msra.mxu0 0.0
    %238 = vmatprep.subr.mxu0 0.0
    %239 = vmatpush2.msra.mxu0 0.0
    %240 = vmatprep.subr.mxu0 0.0
    %241 = vmatpush2.msra.mxu0 0.0
    %242 = vmatprep.subr.mxu0 0.0
    %243 = vmatpush2.msra.mxu0 0.0
    %244 = vmatprep.subr.mxu0 0.0
    %245 = vmatpush2.msra.mxu0 0.0
    %246 = vmatprep.subr.mxu0 0.0
    %247 = vmatpush2.msra.mxu0 0.0
    %248 = vmatprep.mubr.f32.mxu0 0.0
    %249 = vmatmul.mubr.f32.gmra.mxu0 %v173
    %v250 = vpop.f32.mrf.mxu0
    %v251 = vadd.f32 %v167, %v250
    %v252 = vpop.f32.mrf.mxu0
    %253 = vmatprep.mubr.f32.mxu0 0.0
    %254 = vmatmul.mubr.f32.gmra.mxu0 %v176
    %v255 = vpop.f32.mrf.mxu0
    %v256 = vadd.f32 %v168, %v255
    %v257 = vpop.f32.mrf.mxu0
    %258 = vmatprep.mubr.f32.mxu0 0.0
    %259 = vmatmul.mubr.f32.gmra.mxu0 %v179
    %v260 = vpop.f32.mrf.mxu0
    %v261 = vadd.f32 %v169, %v260
    %v262 = vpop.f32.mrf.mxu0
    %263 = vmatprep.mubr.f32.mxu0 0.0
    %264 = vmatmul.mubr.f32.gmra.mxu0 %v182
    %v265 = vpop.f32.mrf.mxu0
    %v266 = vadd.f32 %v170, %v265
    %v267 = vpop.f32.mrf.mxu0
    %268 = vdwg.mxu0
    %v269 = vmax.f32 %v251, 0.0
    %v270 = vmax.f32 %v256, 0.0
    %v271 = vmax.f32 %v261, 0.0
    %v272 = vmax.f32 %v266, 0.0
    %vm273 = vcmask 261120
    %v275 = vsel %vm273, %v121, 0
    %v278 = vsel %vm273, %v122, 0
    %280 = vmatprep.subr.mxu0 0.0
    %281 = vmatpush1.msra.mxu0 0.0
    %282 = vmatprep.subr.mxu0 0.0
    %283 = vmatpush1.msra.mxu0 0.0
    %284 = vmatprep.subr.mxu0 0.0
    %285 = vmatpush1.msra.mxu0 0.0
    %286 = vmatprep.subr.mxu0 0.0
    %287 = vmatpush1.msra.mxu0 0.0
    %288 = vmatprep.subr.mxu0 0.0
    %289 = vmatpush1.msra.mxu0 0.0
    %290 = vmatprep.subr.mxu0 0.0
    %291 = vmatpush1.msra.mxu0 0.0
    %292 = vmatprep.subr.mxu0 0.0
    %293 = vmatpush1.msra.mxu0 0.0
    %294 = vmatprep.subr.mxu0 0.0
    %295 = vmatpush1.msra.mxu0 0.0
    %296 = vmatprep.subr.mxu0 0.0
    %297 = vmatpush1.msra.mxu0 0.0
    %298 = vmatprep.subr.mxu0 0.0
    %299 = vmatpush1.msra.mxu0 0.0
    %300 = vmatprep.subr.mxu0 0.0
    %301 = vmatpush1.msra.mxu0 0.0
    %302 = vmatprep.subr.mxu0 0.0
    %303 = vmatpush1.msra.mxu0 0.0
    %304 = vmatprep.subr.mxu0 0.0
    %305 = vmatpush1.msra.mxu0 %v272
    %306 = vmatprep.subr.mxu0 0.0
    %307 = vmatpush1.msra.mxu0 %v271
    %308 = vmatprep.subr.mxu0 0.0
    %309 = vmatpush1.msra.mxu0 %v270
    %310 = vmatprep.subr.mxu0 0.0
    %311 = vmatpush1.msra.mxu0 %v269
    %312 = vmatprep.subr.mxu0 0.0
    %313 = vmatpush2.msra.mxu0 0.0
    %314 = vmatprep.subr.mxu0 0.0
    %315 = vmatpush2.msra.mxu0 0.0
    %316 = vmatprep.subr.mxu0 0.0
    %317 = vmatpush2.msra.mxu0 0.0
    %318 = vmatprep.subr.mxu0 0.0
    %319 = vmatpush2.msra.mxu0 0.0
    %320 = vmatprep.subr.mxu0 0.0
    %321 = vmatpush2.msra.mxu0 0.0
    %322 = vmatprep.subr.mxu0 0.0
    %323 = vmatpush2.msra.mxu0 0.0
    %324 = vmatprep.subr.mxu0 0.0
    %325 = vmatpush2.msra.mxu0 0.0
    %326 = vmatprep.subr.mxu0 0.0
    %327 = vmatpush2.msra.mxu0 0.0
    %328 = vmatprep.subr.mxu0 0.0
    %329 = vmatpush2.msra.mxu0 0.0
    %330 = vmatprep.subr.mxu0 0.0
    %331 = vmatpush2.msra.mxu0 0.0
    %332 = vmatprep.subr.mxu0 0.0
    %333 = vmatpush2.msra.mxu0 0.0
    %334 = vmatprep.subr.mxu0 0.0
    %335 = vmatpush2.msra.mxu0 0.0
    %336 = vmatprep.subr.mxu0 0.0
    %337 = vmatpush2.msra.mxu0 0.0
    %338 = vmatprep.subr.mxu0 0.0
    %339 = vmatpush2.msra.mxu0 0.0
    %340 = vmatprep.subr.mxu0 0.0
    %341 = vmatpush2.msra.mxu0 0.0
    %342 = vmatprep.subr.mxu0 0.0
    %343 = vmatpush2.msra.mxu0 0.0
    %344 = vmatprep.mubr.f32.mxu0 0.0
    %345 = vmatmul.mubr.f32.gmra.mxu0 %v275
    %v346 = vpop.f32.mrf.mxu0
    %v347 = vadd.f32 0.0, %v346
    %v348 = vpop.f32.mrf.mxu0
    %349 = vmatprep.mubr.f32.mxu0 0.0
    %350 = vmatmul.mubr.f32.gmra.mxu0 %v278
    %v351 = vpop.f32.mrf.mxu0
    %v352 = vadd.f32 0.0, %v351
    %v353 = vpop.f32.mrf.mxu0
    %354 = vdwg.mxu0
    %s355 = sld [smem:[#allocation7]]
    %s356 = sadd.f32 %s355, 1.0
    %v357 = vstv %s356
    %v358 = vmul.f32 %v357, %v127
    %v359 = vmul.f32 %v357, %v128
    %v360 = vadd.f32 %v358, %v347
    %v361 = vadd.f32 %v359, %v352
    %v362 = vld [vmem:[#allocation2] sm:$0xff]
    %v363 = vld [vmem:[#allocation2 + $0x8] sm:$0xff]
    %v364 = vld [vmem:[#allocation2 + $0x10] sm:$0xff]
    %v365 = vld [vmem:[#allocation2 + $0x18] sm:$0xff]
    %v366 = vld [vmem:[%s7] sm:$0x1]
    %v368 = vlaneseq
    %v369 = vshrl.u32 %v368, 7
    %v370 = vsub.s32 0, %v369
    %v371 = vrot.slane %v366, %v370
    %v374 = vsel %vm273, %v360, 0
    %v377 = vsel %vm273, %v361, 0
    %379 = vmatprep.subr.mxu0 0.0
    %380 = vmatpush1.msra.mxu0 0.0
    %381 = vmatprep.subr.mxu0 0.0
    %382 = vmatpush1.msra.mxu0 0.0
    %383 = vmatprep.subr.mxu0 0.0
    %384 = vmatpush1.msra.mxu0 0.0
    %385 = vmatprep.subr.mxu0 0.0
    %386 = vmatpush1.msra.mxu0 0.0
    %387 = vmatprep.subr.mxu0 0.0
    %388 = vmatpush1.msra.mxu0 0.0
    %389 = vmatprep.subr.mxu0 0.0
    %390 = vmatpush1.msra.mxu0 0.0
    %391 = vmatprep.subr.mxu0 0.0
    %392 = vmatpush1.msra.mxu0 0.0
    %393 = vmatprep.subr.mxu0 0.0
    %394 = vmatpush1.msra.mxu0 0.0
    %395 = vmatprep.subr.mxu0 0.0
    %396 = vmatpush1.msra.mxu0 0.0
    %397 = vmatprep.subr.mxu0 0.0
    %398 = vmatpush1.msra.mxu0 0.0
    %399 = vmatprep.subr.mxu0 0.0
    %400 = vmatpush1.msra.mxu0 0.0
    %401 = vmatprep.subr.mxu0 0.0
    %402 = vmatpush1.msra.mxu0 0.0
    %403 = vmatprep.subr.mxu0 0.0
    %404 = vmatpush1.msra.mxu0 %v365
    %405 = vmatprep.subr.mxu0 0.0
    %406 = vmatpush1.msra.mxu0 %v364
    %407 = vmatprep.subr.mxu0 0.0
    %408 = vmatpush1.msra.mxu0 %v363
    %409 = vmatprep.subr.mxu0 0.0
    %410 = vmatpush1.msra.mxu0 %v362
    %411 = vmatprep.subr.mxu0 0.0
    %412 = vmatpush2.msra.mxu0 0.0
    %413 = vmatprep.subr.mxu0 0.0
    %414 = vmatpush2.msra.mxu0 0.0
    %415 = vmatprep.subr.mxu0 0.0
    %416 = vmatpush2.msra.mxu0 0.0
    %417 = vmatprep.subr.mxu0 0.0
    %418 = vmatpush2.msra.mxu0 0.0
    %419 = vmatprep.subr.mxu0 0.0
    %420 = vmatpush2.msra.mxu0 0.0
    %421 = vmatprep.subr.mxu0 0.0
    %422 = vmatpush2.msra.mxu0 0.0
    %423 = vmatprep.subr.mxu0 0.0
    %424 = vmatpush2.msra.mxu0 0.0
    %425 = vmatprep.subr.mxu0 0.0
    %426 = vmatpush2.msra.mxu0 0.0
    %427 = vmatprep.subr.mxu0 0.0
    %428 = vmatpush2.msra.mxu0 0.0
    %429 = vmatprep.subr.mxu0 0.0
    %430 = vmatpush2.msra.mxu0 0.0
    %431 = vmatprep.subr.mxu0 0.0
    %432 = vmatpush2.msra.mxu0 0.0
    %433 = vmatprep.subr.mxu0 0.0
    %434 = vmatpush2.msra.mxu0 0.0
    %435 = vmatprep.subr.mxu0 0.0
    %436 = vmatpush2.msra.mxu0 0.0
    %437 = vmatprep.subr.mxu0 0.0
    %438 = vmatpush2.msra.mxu0 0.0
    %439 = vmatprep.subr.mxu0 0.0
    %440 = vmatpush2.msra.mxu0 0.0
    %441 = vmatprep.subr.mxu0 0.0
    %442 = vmatpush2.msra.mxu0 0.0
    %443 = vmatprep.mubr.f32.mxu0 0.0
    %444 = vmatmul.mubr.f32.gmra.mxu0 %v374
    %v445 = vpop.f32.mrf.mxu0
    %v446 = vadd.f32 %v371, %v445
    %v447 = vpop.f32.mrf.mxu0
    %448 = vmatprep.mubr.f32.mxu0 0.0
    %449 = vmatmul.mubr.f32.gmra.mxu0 %v377
    %v450 = vpop.f32.mrf.mxu0
    %v451 = vadd.f32 %v371, %v450
    %v452 = vpop.f32.mrf.mxu0
    %453 = vdwg.mxu0
    %v454 = vmax.f32 %v446, 0.0
    %v455 = vmax.f32 %v451, 0.0
    %v456 = vld [vmem:[#allocation5] sm:$0xff]
    %v457 = vld [vmem:[#allocation5 + $0x8] sm:$0xff]
    %v458 = vld [vmem:[#allocation5 + $0x10] sm:$0xff]
    %v459 = vld [vmem:[#allocation5 + $0x18] sm:$0xff]
    %v460 = vld [vmem:[%s9] sm:$0x1]
    %v462 = vlaneseq
    %v463 = vshrl.u32 %v462, 7
    %v464 = vsub.s32 0, %v463
    %v465 = vrot.slane %v460, %v464
    %v468 = vsel %vm273, %v454, 0
    %v471 = vsel %vm273, %v455, 0
    %473 = vmatprep.subr.mxu0 0.0
    %474 = vmatpush1.msra.mxu0 0.0
    %475 = vmatprep.subr.mxu0 0.0
    %476 = vmatpush1.msra.mxu0 0.0
    %477 = vmatprep.subr.mxu0 0.0
    %478 = vmatpush1.msra.mxu0 0.0
    %479 = vmatprep.subr.mxu0 0.0
    %480 = vmatpush1.msra.mxu0 0.0
    %481 = vmatprep.subr.mxu0 0.0
    %482 = vmatpush1.msra.mxu0 0.0
    %483 = vmatprep.subr.mxu0 0.0
    %484 = vmatpush1.msra.mxu0 0.0
    %485 = vmatprep.subr.mxu0 0.0
    %486 = vmatpush1.msra.mxu0 0.0
    %487 = vmatprep.subr.mxu0 0.0
    %488 = vmatpush1.msra.mxu0 0.0
    %489 = vmatprep.subr.mxu0 0.0
    %490 = vmatpush1.msra.mxu0 0.0
    %491 = vmatprep.subr.mxu0 0.0
    %492 = vmatpush1.msra.mxu0 0.0
    %493 = vmatprep.subr.mxu0 0.0
    %494 = vmatpush1.msra.mxu0 0.0
    %495 = vmatprep.subr.mxu0 0.0
    %496 = vmatpush1.msra.mxu0 0.0
    %497 = vmatprep.subr.mxu0 0.0
    %498 = vmatpush1.msra.mxu0 %v459
    %499 = vmatprep.subr.mxu0 0.0
    %500 = vmatpush1.msra.mxu0 %v458
    %501 = vmatprep.subr.mxu0 0.0
    %502 = vmatpush1.msra.mxu0 %v457
    %503 = vmatprep.subr.mxu0 0.0
    %504 = vmatpush1.msra.mxu0 %v456
    %505 = vmatprep.subr.mxu0 0.0
    %506 = vmatpush2.msra.mxu0 0.0
    %507 = vmatprep.subr.mxu0 0.0
    %508 = vmatpush2.msra.mxu0 0.0
    %509 = vmatprep.subr.mxu0 0.0
    %510 = vmatpush2.msra.mxu0 0.0
    %511 = vmatprep.subr.mxu0 0.0
    %512 = vmatpush2.msra.mxu0 0.0
    %513 = vmatprep.subr.mxu0 0.0
    %514 = vmatpush2.msra.mxu0 0.0
    %515 = vmatprep.subr.mxu0 0.0
    %516 = vmatpush2.msra.mxu0 0.0
    %517 = vmatprep.subr.mxu0 0.0
    %518 = vmatpush2.msra.mxu0 0.0
    %519 = vmatprep.subr.mxu0 0.0
    %520 = vmatpush2.msra.mxu0 0.0
    %521 = vmatprep.subr.mxu0 0.0
    %522 = vmatpush2.msra.mxu0 0.0
    %523 = vmatprep.subr.mxu0 0.0
    %524 = vmatpush2.msra.mxu0 0.0
    %525 = vmatprep.subr.mxu0 0.0
    %526 = vmatpush2.msra.mxu0 0.0
    %527 = vmatprep.subr.mxu0 0.0
    %528 = vmatpush2.msra.mxu0 0.0
    %529 = vmatprep.subr.mxu0 0.0
    %530 = vmatpush2.msra.mxu0 0.0
    %531 = vmatprep.subr.mxu0 0.0
    %532 = vmatpush2.msra.mxu0 0.0
    %533 = vmatprep.subr.mxu0 0.0
    %534 = vmatpush2.msra.mxu0 0.0
    %535 = vmatprep.subr.mxu0 0.0
    %536 = vmatpush2.msra.mxu0 0.0
    %537 = vmatprep.mubr.f32.mxu0 0.0
    %538 = vmatmul.mubr.f32.gmra.mxu0 %v468
    %v539 = vpop.f32.mrf.mxu0
    %v540 = vadd.f32 %v465, %v539
    %v541 = vpop.f32.mrf.mxu0
    %542 = vmatprep.mubr.f32.mxu0 0.0
    %543 = vmatmul.mubr.f32.gmra.mxu0 %v471
    %v544 = vpop.f32.mrf.mxu0
    %v545 = vadd.f32 %v465, %v544
    %v546 = vpop.f32.mrf.mxu0
    %547 = vdwg.mxu0
    %v548 = vmax.f32 %v540, 0.0
    %v549 = vmax.f32 %v545, 0.0
    %550 = vst.msk [vmem:[%s11] sm:$0xff] %vm273, %v548
    %551 = vst.msk [vmem:[%s11 + $0x8] sm:$0xff] %vm273, %v549
    %s552 = scalar_lea.vmem %s4, 1
    %v553 = vld [vmem:[%s552] sm:$0x1]
    %v555 = vlaneseq
    %v556 = vshrl.u32 %v555, 7
    %v557 = vsub.s32 0, %v556
    %v558 = vrot.slane %v553, %v557
    %v560 = vmul.f32 %v133, %v558
    %v561 = vmul.f32 %v138, %v558
    %v562 = vmul.f32 %v143, %v558
    %v563 = vmul.f32 %v148, %v558
    %s564 = scalar_lea.vmem %s5, 1
    %v565 = vld [vmem:[%s564] sm:$0x1]
    %v567 = vlaneseq
    %v568 = vshrl.u32 %v567, 7
    %v569 = vsub.s32 0, %v568
    %v570 = vrot.slane %v565, %v569
    %v572 = vadd.f32 %v560, %v570
    %v573 = vadd.f32 %v561, %v570
    %v574 = vadd.f32 %v562, %v570
    %v575 = vadd.f32 %v563, %v570
    %576 = vmatprep.subr.mxu0 0.0
    %577 = vmatpush1.msra.mxu0 0.0
    %578 = vmatprep.subr.mxu0 0.0
    %579 = vmatpush1.msra.mxu0 0.0
    %580 = vmatprep.subr.mxu0 0.0
    %581 = vmatpush1.msra.mxu0 0.0
    %582 = vmatprep.subr.mxu0 0.0
    %583 = vmatpush1.msra.mxu0 0.0
    %584 = vmatprep.subr.mxu0 0.0
    %585 = vmatpush1.msra.mxu0 0.0
    %586 = vmatprep.subr.mxu0 0.0
    %587 = vmatpush1.msra.mxu0 0.0
    %588 = vmatprep.subr.mxu0 0.0
    %589 = vmatpush1.msra.mxu0 0.0
    %590 = vmatprep.subr.mxu0 0.0
    %591 = vmatpush1.msra.mxu0 0.0
    %592 = vmatprep.subr.mxu0 0.0
    %593 = vmatpush1.msra.mxu0 0.0
    %594 = vmatprep.subr.mxu0 0.0
    %595 = vmatpush1.msra.mxu0 0.0
    %596 = vmatprep.subr.mxu0 0.0
    %597 = vmatpush1.msra.mxu0 0.0
    %598 = vmatprep.subr.mxu0 0.0
    %599 = vmatpush1.msra.mxu0 0.0
    %600 = vmatprep.subr.mxu0 0.0
    %601 = vmatpush1.msra.mxu0 0.0
    %602 = vmatprep.subr.mxu0 0.0
    %603 = vmatpush1.msra.mxu0 0.0
    %604 = vmatprep.subr.mxu0 0.0
    %605 = vmatpush1.msra.mxu0 %v549
    %606 = vmatprep.subr.mxu0 0.0
    %607 = vmatpush1.msra.mxu0 %v548
    %608 = vmatprep.subr.mxu0 0.0
    %609 = vmatpush2.msra.mxu0 0.0
    %610 = vmatprep.subr.mxu0 0.0
    %611 = vmatpush2.msra.mxu0 0.0
    %612 = vmatprep.subr.mxu0 0.0
    %613 = vmatpush2.msra.mxu0 0.0
    %614 = vmatprep.subr.mxu0 0.0
    %615 = vmatpush2.msra.mxu0 0.0
    %616 = vmatprep.subr.mxu0 0.0
    %617 = vmatpush2.msra.mxu0 0.0
    %618 = vmatprep.subr.mxu0 0.0
    %619 = vmatpush2.msra.mxu0 0.0
    %620 = vmatprep.subr.mxu0 0.0
    %621 = vmatpush2.msra.mxu0 0.0
    %622 = vmatprep.subr.mxu0 0.0
    %623 = vmatpush2.msra.mxu0 0.0
    %624 = vmatprep.subr.mxu0 0.0
    %625 = vmatpush2.msra.mxu0 0.0
    %626 = vmatprep.subr.mxu0 0.0
    %627 = vmatpush2.msra.mxu0 0.0
    %628 = vmatprep.subr.mxu0 0.0
    %629 = vmatpush2.msra.mxu0 0.0
    %630 = vmatprep.subr.mxu0 0.0
    %631 = vmatpush2.msra.mxu0 0.0
    %632 = vmatprep.subr.mxu0 0.0
    %633 = vmatpush2.msra.mxu0 0.0
    %634 = vmatprep.subr.mxu0 0.0
    %635 = vmatpush2.msra.mxu0 0.0
    %636 = vmatprep.subr.mxu0 0.0
    %637 = vmatpush2.msra.mxu0 0.0
    %638 = vmatprep.subr.mxu0 0.0
    %639 = vmatpush2.msra.mxu0 0.0
    %640 = vmatprep.mubr.f32.mxu0 0.0
    %641 = vmatmul.mubr.f32.gmra.mxu0 %v173
    %v642 = vpop.f32.mrf.mxu0
    %v643 = vadd.f32 %v572, %v642
    %v644 = vpop.f32.mrf.mxu0
    %645 = vmatprep.mubr.f32.mxu0 0.0
    %646 = vmatmul.mubr.f32.gmra.mxu0 %v176
    %v647 = vpop.f32.mrf.mxu0
    %v648 = vadd.f32 %v573, %v647
    %v649 = vpop.f32.mrf.mxu0
    %650 = vmatprep.mubr.f32.mxu0 0.0
    %651 = vmatmul.mubr.f32.gmra.mxu0 %v179
    %v652 = vpop.f32.mrf.mxu0
    %v653 = vadd.f32 %v574, %v652
    %v654 = vpop.f32.mrf.mxu0
    %655 = vmatprep.mubr.f32.mxu0 0.0
    %656 = vmatmul.mubr.f32.gmra.mxu0 %v182
    %v657 = vpop.f32.mrf.mxu0
    %v658 = vadd.f32 %v575, %v657
    %v659 = vpop.f32.mrf.mxu0
    %660 = vdwg.mxu0
    %v661 = vmax.f32 %v643, 0.0
    %v662 = vmax.f32 %v648, 0.0
    %v663 = vmax.f32 %v653, 0.0
    %v664 = vmax.f32 %v658, 0.0
    %665 = vmatprep.subr.mxu0 0.0
    %666 = vmatpush1.msra.mxu0 0.0
    %667 = vmatprep.subr.mxu0 0.0
    %668 = vmatpush1.msra.mxu0 0.0
    %669 = vmatprep.subr.mxu0 0.0
    %670 = vmatpush1.msra.mxu0 0.0
    %671 = vmatprep.subr.mxu0 0.0
    %672 = vmatpush1.msra.mxu0 0.0
    %673 = vmatprep.subr.mxu0 0.0
    %674 = vmatpush1.msra.mxu0 0.0
    %675 = vmatprep.subr.mxu0 0.0
    %676 = vmatpush1.msra.mxu0 0.0
    %677 = vmatprep.subr.mxu0 0.0
    %678 = vmatpush1.msra.mxu0 0.0
    %679 = vmatprep.subr.mxu0 0.0
    %680 = vmatpush1.msra.mxu0 0.0
    %681 = vmatprep.subr.mxu0 0.0
    %682 = vmatpush1.msra.mxu0 0.0
    %683 = vmatprep.subr.mxu0 0.0
    %684 = vmatpush1.msra.mxu0 0.0
    %685 = vmatprep.subr.mxu0 0.0
    %686 = vmatpush1.msra.mxu0 0.0
    %687 = vmatprep.subr.mxu0 0.0
    %688 = vmatpush1.msra.mxu0 0.0
    %689 = vmatprep.subr.mxu0 0.0
    %690 = vmatpush1.msra.mxu0 %v664
    %691 = vmatprep.subr.mxu0 0.0
    %692 = vmatpush1.msra.mxu0 %v663
    %693 = vmatprep.subr.mxu0 0.0
    %694 = vmatpush1.msra.mxu0 %v662
    %695 = vmatprep.subr.mxu0 0.0
    %696 = vmatpush1.msra.mxu0 %v661
    %697 = vmatprep.subr.mxu0 0.0
    %698 = vmatpush2.msra.mxu0 0.0
    %699 = vmatprep.subr.mxu0 0.0
    %700 = vmatpush2.msra.mxu0 0.0
    %701 = vmatprep.subr.mxu0 0.0
    %702 = vmatpush2.msra.mxu0 0.0
    %703 = vmatprep.subr.mxu0 0.0
    %704 = vmatpush2.msra.mxu0 0.0
    %705 = vmatprep.subr.mxu0 0.0
    %706 = vmatpush2.msra.mxu0 0.0
    %707 = vmatprep.subr.mxu0 0.0
    %708 = vmatpush2.msra.mxu0 0.0
    %709 = vmatprep.subr.mxu0 0.0
    %710 = vmatpush2.msra.mxu0 0.0
    %711 = vmatprep.subr.mxu0 0.0
    %712 = vmatpush2.msra.mxu0 0.0
    %713 = vmatprep.subr.mxu0 0.0
    %714 = vmatpush2.msra.mxu0 0.0
    %715 = vmatprep.subr.mxu0 0.0
    %716 = vmatpush2.msra.mxu0 0.0
    %717 = vmatprep.subr.mxu0 0.0
    %718 = vmatpush2.msra.mxu0 0.0
    %719 = vmatprep.subr.mxu0 0.0
    %720 = vmatpush2.msra.mxu0 0.0
    %721 = vmatprep.subr.mxu0 0.0
    %722 = vmatpush2.msra.mxu0 0.0
    %723 = vmatprep.subr.mxu0 0.0
    %724 = vmatpush2.msra.mxu0 0.0
    %725 = vmatprep.subr.mxu0 0.0
    %726 = vmatpush2.msra.mxu0 0.0
    %727 = vmatprep.subr.mxu0 0.0
    %728 = vmatpush2.msra.mxu0 0.0
    %729 = vmatprep.mubr.f32.mxu0 0.0
    %730 = vmatmul.mubr.f32.gmra.mxu0 %v275
    %v731 = vpop.f32.mrf.mxu0
    %v732 = vadd.f32 0.0, %v731
    %v733 = vpop.f32.mrf.mxu0
    %734 = vmatprep.mubr.f32.mxu0 0.0
    %735 = vmatmul.mubr.f32.gmra.mxu0 %v278
    %v736 = vpop.f32.mrf.mxu0
    %v737 = vadd.f32 0.0, %v736
    %v738 = vpop.f32.mrf.mxu0
    %739 = vdwg.mxu0
    %s740 = sld [smem:[#allocation7 + $0x1]]
    %s741 = sadd.f32 %s740, 1.0
    %v742 = vstv %s741
    %v743 = vmul.f32 %v742, %v548
    %v744 = vmul.f32 %v742, %v549
    %v745 = vadd.f32 %v743, %v732
    %v746 = vadd.f32 %v744, %v737
    %s747 = scalar_lea.vmem [#allocation2], 32
    %v748 = vld [vmem:[%s747] sm:$0xff]
    %v749 = vld [vmem:[%s747 + $0x8] sm:$0xff]
    %v750 = vld [vmem:[%s747 + $0x10] sm:$0xff]
    %v751 = vld [vmem:[%s747 + $0x18] sm:$0xff]
    %s752 = scalar_lea.vmem %s7, 1
    %v753 = vld [vmem:[%s752] sm:$0x1]
    %v755 = vlaneseq
    %v756 = vshrl.u32 %v755, 7
    %v757 = vsub.s32 0, %v756
    %v758 = vrot.slane %v753, %v757
    %v761 = vsel %vm273, %v745, 0
    %v764 = vsel %vm273, %v746, 0
    %766 = vmatprep.subr.mxu0 0.0
    %767 = vmatpush1.msra.mxu0 0.0
    %768 = vmatprep.subr.mxu0 0.0
    %769 = vmatpush1.msra.mxu0 0.0
    %770 = vmatprep.subr.mxu0 0.0
    %771 = vmatpush1.msra.mxu0 0.0
    %772 = vmatprep.subr.mxu0 0.0
    %773 = vmatpush1.msra.mxu0 0.0
    %774 = vmatprep.subr.mxu0 0.0
    %775 = vmatpush1.msra.mxu0 0.0
    %776 = vmatprep.subr.mxu0 0.0
    %777 = vmatpush1.msra.mxu0 0.0
    %778 = vmatprep.subr.mxu0 0.0
    %779 = vmatpush1.msra.mxu0 0.0
    %780 = vmatprep.subr.mxu0 0.0
    %781 = vmatpush1.msra.mxu0 0.0
    %782 = vmatprep.subr.mxu0 0.0
    %783 = vmatpush1.msra.mxu0 0.0
    %784 = vmatprep.subr.mxu0 0.0
    %785 = vmatpush1.msra.mxu0 0.0
    %786 = vmatprep.subr.mxu0 0.0
    %787 = vmatpush1.msra.mxu0 0.0
    %788 = vmatprep.subr.mxu0 0.0
    %789 = vmatpush1.msra.mxu0 0.0
    %790 = vmatprep.subr.mxu0 0.0
    %791 = vmatpush1.msra.mxu0 %v751
    %792 = vmatprep.subr.mxu0 0.0
    %793 = vmatpush1.msra.mxu0 %v750
    %794 = vmatprep.subr.mxu0 0.0
    %795 = vmatpush1.msra.mxu0 %v749
    %796 = vmatprep.subr.mxu0 0.0
    %797 = vmatpush1.msra.mxu0 %v748
    %798 = vmatprep.subr.mxu0 0.0
    %799 = vmatpush2.msra.mxu0 0.0
    %800 = vmatprep.subr.mxu0 0.0
    %801 = vmatpush2.msra.mxu0 0.0
    %802 = vmatprep.subr.mxu0 0.0
    %803 = vmatpush2.msra.mxu0 0.0
    %804 = vmatprep.subr.mxu0 0.0
    %805 = vmatpush2.msra.mxu0 0.0
    %806 = vmatprep.subr.mxu0 0.0
    %807 = vmatpush2.msra.mxu0 0.0
    %808 = vmatprep.subr.mxu0 0.0
    %809 = vmatpush2.msra.mxu0 0.0
    %810 = vmatprep.subr.mxu0 0.0
    %811 = vmatpush2.msra.mxu0 0.0
    %812 = vmatprep.subr.mxu0 0.0
    %813 = vmatpush2.msra.mxu0 0.0
    %814 = vmatprep.subr.mxu0 0.0
    %815 = vmatpush2.msra.mxu0 0.0
    %816 = vmatprep.subr.mxu0 0.0
    %817 = vmatpush2.msra.mxu0 0.0
    %818 = vmatprep.subr.mxu0 0.0
    %819 = vmatpush2.msra.mxu0 0.0
    %820 = vmatprep.subr.mxu0 0.0
    %821 = vmatpush2.msra.mxu0 0.0
    %822 = vmatprep.subr.mxu0 0.0
    %823 = vmatpush2.msra.mxu0 0.0
    %824 = vmatprep.subr.mxu0 0.0
    %825 = vmatpush2.msra.mxu0 0.0
    %826 = vmatprep.subr.mxu0 0.0
    %827 = vmatpush2.msra.mxu0 0.0
    %828 = vmatprep.subr.mxu0 0.0
    %829 = vmatpush2.msra.mxu0 0.0
    %830 = vmatprep.mubr.f32.mxu0 0.0
    %831 = vmatmul.mubr.f32.gmra.mxu0 %v761
    %v832 = vpop.f32.mrf.mxu0
    %v833 = vadd.f32 %v758, %v832
    %v834 = vpop.f32.mrf.mxu0
    %835 = vmatprep.mubr.f32.mxu0 0.0
    %836 = vmatmul.mubr.f32.gmra.mxu0 %v764
    %v837 = vpop.f32.mrf.mxu0
    %v838 = vadd.f32 %v758, %v837
    %v839 = vpop.f32.mrf.mxu0
    %840 = vdwg.mxu0
    %v841 = vmax.f32 %v833, 0.0
    %v842 = vmax.f32 %v838, 0.0
    %s843 = scalar_lea.vmem [#allocation5], 32
    %v844 = vld [vmem:[%s843] sm:$0xff]
    %v845 = vld [vmem:[%s843 + $0x8] sm:$0xff]
    %v846 = vld [vmem:[%s843 + $0x10] sm:$0xff]
    %v847 = vld [vmem:[%s843 + $0x18] sm:$0xff]
    %s848 = scalar_lea.vmem %s9, 1
    %v849 = vld [vmem:[%s848] sm:$0x1]
    %v851 = vlaneseq
    %v852 = vshrl.u32 %v851, 7
    %v853 = vsub.s32 0, %v852
    %v854 = vrot.slane %v849, %v853
    %v857 = vsel %vm273, %v841, 0
    %v860 = vsel %vm273, %v842, 0
    %862 = vmatprep.subr.mxu0 0.0
    %863 = vmatpush1.msra.mxu0 0.0
    %864 = vmatprep.subr.mxu0 0.0
    %865 = vmatpush1.msra.mxu0 0.0
    %866 = vmatprep.subr.mxu0 0.0
    %867 = vmatpush1.msra.mxu0 0.0
    %868 = vmatprep.subr.mxu0 0.0
    %869 = vmatpush1.msra.mxu0 0.0
    %870 = vmatprep.subr.mxu0 0.0
    %871 = vmatpush1.msra.mxu0 0.0
    %872 = vmatprep.subr.mxu0 0.0
    %873 = vmatpush1.msra.mxu0 0.0
    %874 = vmatprep.subr.mxu0 0.0
    %875 = vmatpush1.msra.mxu0 0.0
    %876 = vmatprep.subr.mxu0 0.0
    %877 = vmatpush1.msra.mxu0 0.0
    %878 = vmatprep.subr.mxu0 0.0
    %879 = vmatpush1.msra.mxu0 0.0
    %880 = vmatprep.subr.mxu0 0.0
    %881 = vmatpush1.msra.mxu0 0.0
    %882 = vmatprep.subr.mxu0 0.0
    %883 = vmatpush1.msra.mxu0 0.0
    %884 = vmatprep.subr.mxu0 0.0
    %885 = vmatpush1.msra.mxu0 0.0
    %886 = vmatprep.subr.mxu0 0.0
    %887 = vmatpush1.msra.mxu0 %v847
    %888 = vmatprep.subr.mxu0 0.0
    %889 = vmatpush1.msra.mxu0 %v846
    %890 = vmatprep.subr.mxu0 0.0
    %891 = vmatpush1.msra.mxu0 %v845
    %892 = vmatprep.subr.mxu0 0.0
    %893 = vmatpush1.msra.mxu0 %v844
    %894 = vmatprep.subr.mxu0 0.0
    %895 = vmatpush2.msra.mxu0 0.0
    %896 = vmatprep.subr.mxu0 0.0
    %897 = vmatpush2.msra.mxu0 0.0
    %898 = vmatprep.subr.mxu0 0.0
    %899 = vmatpush2.msra.mxu0 0.0
    %900 = vmatprep.subr.mxu0 0.0
    %901 = vmatpush2.msra.mxu0 0.0
    %902 = vmatprep.subr.mxu0 0.0
    %903 = vmatpush2.msra.mxu0 0.0
    %904 = vmatprep.subr.mxu0 0.0
    %905 = vmatpush2.msra.mxu0 0.0
    %906 = vmatprep.subr.mxu0 0.0
    %907 = vmatpush2.msra.mxu0 0.0
    %908 = vmatprep.subr.mxu0 0.0
    %909 = vmatpush2.msra.mxu0 0.0
    %910 = vmatprep.subr.mxu0 0.0
    %911 = vmatpush2.msra.mxu0 0.0
    %912 = vmatprep.subr.mxu0 0.0
    %913 = vmatpush2.msra.mxu0 0.0
    %914 = vmatprep.subr.mxu0 0.0
    %915 = vmatpush2.msra.mxu0 0.0
    %916 = vmatprep.subr.mxu0 0.0
    %917 = vmatpush2.msra.mxu0 0.0
    %918 = vmatprep.subr.mxu0 0.0
    %919 = vmatpush2.msra.mxu0 0.0
    %920 = vmatprep.subr.mxu0 0.0
    %921 = vmatpush2.msra.mxu0 0.0
    %922 = vmatprep.subr.mxu0 0.0
    %923 = vmatpush2.msra.mxu0 0.0
    %924 = vmatprep.subr.mxu0 0.0
    %925 = vmatpush2.msra.mxu0 0.0
    %926 = vmatprep.mubr.f32.mxu0 0.0
    %927 = vmatmul.mubr.f32.gmra.mxu0 %v857
    %v928 = vpop.f32.mrf.mxu0
    %v929 = vadd.f32 %v854, %v928
    %v930 = vpop.f32.mrf.mxu0
    %931 = vmatprep.mubr.f32.mxu0 0.0
    %932 = vmatmul.mubr.f32.gmra.mxu0 %v860
    %v933 = vpop.f32.mrf.mxu0
    %v934 = vadd.f32 %v854, %v933
    %v935 = vpop.f32.mrf.mxu0
    %936 = vdwg.mxu0
    %v937 = vmax.f32 %v929, 0.0
    %v938 = vmax.f32 %v934, 0.0
    %s939 = scalar_lea.vmem %s11, 16
    %940 = vst.msk [vmem:[%s939] sm:$0xff] %vm273, %v937
    %941 = vst.msk [vmem:[%s939 + $0x8] sm:$0xff] %vm273, %v938
    %s942 = scalar_lea.vmem %s4, 2
    %v943 = vld [vmem:[%s942] sm:$0x1]
    %v945 = vlaneseq
    %v946 = vshrl.u32 %v945, 7
    %v947 = vsub.s32 0, %v946
    %v948 = vrot.slane %v943, %v947
    %v950 = vmul.f32 %v133, %v948
    %v951 = vmul.f32 %v138, %v948
    %v952 = vmul.f32 %v143, %v948
    %v953 = vmul.f32 %v148, %v948
    %s954 = scalar_lea.vmem %s5, 2
    %v955 = vld [vmem:[%s954] sm:$0x1]
    %v957 = vlaneseq
    %v958 = vshrl.u32 %v957, 7
    %v959 = vsub.s32 0, %v958
    %v960 = vrot.slane %v955, %v959
    %v962 = vadd.f32 %v950, %v960
    %v963 = vadd.f32 %v951, %v960
    %v964 = vadd.f32 %v952, %v960
    %v965 = vadd.f32 %v953, %v960
    %966 = vmatprep.subr.mxu0 0.0
    %967 = vmatpush1.msra.mxu0 0.0
    %968 = vmatprep.subr.mxu0 0.0
    %969 = vmatpush1.msra.mxu0 0.0
    %970 = vmatprep.subr.mxu0 0.0
    %971 = vmatpush1.msra.mxu0 0.0
    %972 = vmatprep.subr.mxu0 0.0
    %973 = vmatpush1.msra.mxu0 0.0
    %974 = vmatprep.subr.mxu0 0.0
    %975 = vmatpush1.msra.mxu0 0.0
    %976 = vmatprep.subr.mxu0 0.0
    %977 = vmatpush1.msra.mxu0 0.0
    %978 = vmatprep.subr.mxu0 0.0
    %979 = vmatpush1.msra.mxu0 0.0
    %980 = vmatprep.subr.mxu0 0.0
    %981 = vmatpush1.msra.mxu0 0.0
    %982 = vmatprep.subr.mxu0 0.0
    %983 = vmatpush1.msra.mxu0 0.0
    %984 = vmatprep.subr.mxu0 0.0
    %985 = vmatpush1.msra.mxu0 0.0
    %986 = vmatprep.subr.mxu0 0.0
    %987 = vmatpush1.msra.mxu0 0.0
    %988 = vmatprep.subr.mxu0 0.0
    %989 = vmatpush1.msra.mxu0 0.0
    %990 = vmatprep.subr.mxu0 0.0
    %991 = vmatpush1.msra.mxu0 0.0
    %992 = vmatprep.subr.mxu0 0.0
    %993 = vmatpush1.msra.mxu0 0.0
    %994 = vmatprep.subr.mxu0 0.0
    %995 = vmatpush1.msra.mxu0 %v938
    %996 = vmatprep.subr.mxu0 0.0
    %997 = vmatpush1.msra.mxu0 %v937
    %998 = vmatprep.subr.mxu0 0.0
    %999 = vmatpush2.msra.mxu0 0.0
    %1000 = vmatprep.subr.mxu0 0.0
    %1001 = vmatpush2.msra.mxu0 0.0
    %1002 = vmatprep.subr.mxu0 0.0
    %1003 = vmatpush2.msra.mxu0 0.0
    %1004 = vmatprep.subr.mxu0 0.0
    %1005 = vmatpush2.msra.mxu0 0.0
    %1006 = vmatprep.subr.mxu0 0.0
    %1007 = vmatpush2.msra.mxu0 0.0
    %1008 = vmatprep.subr.mxu0 0.0
    %1009 = vmatpush2.msra.mxu0 0.0
    %1010 = vmatprep.subr.mxu0 0.0
    %1011 = vmatpush2.msra.mxu0 0.0
    %1012 = vmatprep.subr.mxu0 0.0
    %1013 = vmatpush2.msra.mxu0 0.0
    %1014 = vmatprep.subr.mxu0 0.0
    %1015 = vmatpush2.msra.mxu0 0.0
    %1016 = vmatprep.subr.mxu0 0.0
    %1017 = vmatpush2.msra.mxu0 0.0
    %1018 = vmatprep.subr.mxu0 0.0
    %1019 = vmatpush2.msra.mxu0 0.0
    %1020 = vmatprep.subr.mxu0 0.0
    %1021 = vmatpush2.msra.mxu0 0.0
    %1022 = vmatprep.subr.mxu0 0.0
    %1023 = vmatpush2.msra.mxu0 0.0
    %1024 = vmatprep.subr.mxu0 0.0
    %1025 = vmatpush2.msra.mxu0 0.0
    %1026 = vmatprep.subr.mxu0 0.0
    %1027 = vmatpush2.msra.mxu0 0.0
    %1028 = vmatprep.subr.mxu0 0.0
    %1029 = vmatpush2.msra.mxu0 0.0
    %1030 = vmatprep.mubr.f32.mxu0 0.0
    %1031 = vmatmul.mubr.f32.gmra.mxu0 %v173
    %v1032 = vpop.f32.mrf.mxu0
    %v1033 = vadd.f32 %v962, %v1032
    %v1034 = vpop.f32.mrf.mxu0
    %1035 = vmatprep.mubr.f32.mxu0 0.0
    %1036 = vmatmul.mubr.f32.gmra.mxu0 %v176
    %v1037 = vpop.f32.mrf.mxu0
    %v1038 = vadd.f32 %v963, %v1037
    %v1039 = vpop.f32.mrf.mxu0
    %1040 = vmatprep.mubr.f32.mxu0 0.0
    %1041 = vmatmul.mubr.f32.gmra.mxu0 %v179
    %v1042 = vpop.f32.mrf.mxu0
    %v1043 = vadd.f32 %v964, %v1042
    %v1044 = vpop.f32.mrf.mxu0
    %1045 = vmatprep.mubr.f32.mxu0 0.0
    %1046 = vmatmul.mubr.f32.gmra.mxu0 %v182
    %v1047 = vpop.f32.mrf.mxu0
    %v1048 = vadd.f32 %v965, %v1047
    %v1049 = vpop.f32.mrf.mxu0
    %1050 = vdwg.mxu0
    %v1051 = vmax.f32 %v1033, 0.0
    %v1052 = vmax.f32 %v1038, 0.0
    %v1053 = vmax.f32 %v1043, 0.0
    %v1054 = vmax.f32 %v1048, 0.0
    %1055 = vmatprep.subr.mxu0 0.0
    %1056 = vmatpush1.msra.mxu0 0.0
    %1057 = vmatprep.subr.mxu0 0.0
    %1058 = vmatpush1.msra.mxu0 0.0
    %1059 = vmatprep.subr.mxu0 0.0
    %1060 = vmatpush1.msra.mxu0 0.0
    %1061 = vmatprep.subr.mxu0 0.0
    %1062 = vmatpush1.msra.mxu0 0.0
    %1063 = vmatprep.subr.mxu0 0.0
    %1064 = vmatpush1.msra.mxu0 0.0
    %1065 = vmatprep.subr.mxu0 0.0
    %1066 = vmatpush1.msra.mxu0 0.0
    %1067 = vmatprep.subr.mxu0 0.0
    %1068 = vmatpush1.msra.mxu0 0.0
    %1069 = vmatprep.subr.mxu0 0.0
    %1070 = vmatpush1.msra.mxu0 0.0
    %1071 = vmatprep.subr.mxu0 0.0
    %1072 = vmatpush1.msra.mxu0 0.0
    %1073 = vmatprep.subr.mxu0 0.0
    %1074 = vmatpush1.msra.mxu0 0.0
    %1075 = vmatprep.subr.mxu0 0.0
    %1076 = vmatpush1.msra.mxu0 0.0
    %1077 = vmatprep.subr.mxu0 0.0
    %1078 = vmatpush1.msra.mxu0 0.0
    %1079 = vmatprep.subr.mxu0 0.0
    %1080 = vmatpush1.msra.mxu0 %v1054
    %1081 = vmatprep.subr.mxu0 0.0
    %1082 = vmatpush1.msra.mxu0 %v1053
    %1083 = vmatprep.subr.mxu0 0.0
    %1084 = vmatpush1.msra.mxu0 %v1052
    %1085 = vmatprep.subr.mxu0 0.0
    %1086 = vmatpush1.msra.mxu0 %v1051
    %1087 = vmatprep.subr.mxu0 0.0
    %1088 = vmatpush2.msra.mxu0 0.0
    %1089 = vmatprep.subr.mxu0 0.0
    %1090 = vmatpush2.msra.mxu0 0.0
    %1091 = vmatprep.subr.mxu0 0.0
    %1092 = vmatpush2.msra.mxu0 0.0
    %1093 = vmatprep.subr.mxu0 0.0
    %1094 = vmatpush2.msra.mxu0 0.0
    %1095 = vmatprep.subr.mxu0 0.0
    %1096 = vmatpush2.msra.mxu0 0.0
    %1097 = vmatprep.subr.mxu0 0.0
    %1098 = vmatpush2.msra.mxu0 0.0
    %1099 = vmatprep.subr.mxu0 0.0
    %1100 = vmatpush2.msra.mxu0 0.0
    %1101 = vmatprep.subr.mxu0 0.0
    %1102 = vmatpush2.msra.mxu0 0.0
    %1103 = vmatprep.subr.mxu0 0.0
    %1104 = vmatpush2.msra.mxu0 0.0
    %1105 = vmatprep.subr.mxu0 0.0
    %1106 = vmatpush2.msra.mxu0 0.0
    %1107 = vmatprep.subr.mxu0 0.0
    %1108 = vmatpush2.msra.mxu0 0.0
    %1109 = vmatprep.subr.mxu0 0.0
    %1110 = vmatpush2.msra.mxu0 0.0
    %1111 = vmatprep.subr.mxu0 0.0
    %1112 = vmatpush2.msra.mxu0 0.0
    %1113 = vmatprep.subr.mxu0 0.0
    %1114 = vmatpush2.msra.mxu0 0.0
    %1115 = vmatprep.subr.mxu0 0.0
    %1116 = vmatpush2.msra.mxu0 0.0
    %1117 = vmatprep.subr.mxu0 0.0
    %1118 = vmatpush2.msra.mxu0 0.0
    %1119 = vmatprep.mubr.f32.mxu0 0.0
    %1120 = vmatmul.mubr.f32.gmra.mxu0 %v275
    %v1121 = vpop.f32.mrf.mxu0
    %v1122 = vadd.f32 0.0, %v1121
    %v1123 = vpop.f32.mrf.mxu0
    %1124 = vmatprep.mubr.f32.mxu0 0.0
    %1125 = vmatmul.mubr.f32.gmra.mxu0 %v278
    %v1126 = vpop.f32.mrf.mxu0
    %v1127 = vadd.f32 0.0, %v1126
    %v1128 = vpop.f32.mrf.mxu0
    %1129 = vdwg.mxu0
    %s1130 = sld [smem:[#allocation7 + $0x2]]
    %s1131 = sadd.f32 %s1130, 1.0
    %v1132 = vstv %s1131
    %v1133 = vmul.f32 %v1132, %v937
    %v1134 = vmul.f32 %v1132, %v938
    %v1135 = vadd.f32 %v1133, %v1122
    %v1136 = vadd.f32 %v1134, %v1127
    %s1137 = scalar_lea.vmem [#allocation2], 64
    %v1138 = vld [vmem:[%s1137] sm:$0xff]
    %v1139 = vld [vmem:[%s1137 + $0x8] sm:$0xff]
    %v1140 = vld [vmem:[%s1137 + $0x10] sm:$0xff]
    %v1141 = vld [vmem:[%s1137 + $0x18] sm:$0xff]
    %s1142 = scalar_lea.vmem %s7, 2
    %v1143 = vld [vmem:[%s1142] sm:$0x1]
    %v1145 = vlaneseq
    %v1146 = vshrl.u32 %v1145, 7
    %v1147 = vsub.s32 0, %v1146
    %v1148 = vrot.slane %v1143, %v1147
    %v1151 = vsel %vm273, %v1135, 0
    %v1154 = vsel %vm273, %v1136, 0
    %1156 = vmatprep.subr.mxu0 0.0
    %1157 = vmatpush1.msra.mxu0 0.0
    %1158 = vmatprep.subr.mxu0 0.0
    %1159 = vmatpush1.msra.mxu0 0.0
    %1160 = vmatprep.subr.mxu0 0.0
    %1161 = vmatpush1.msra.mxu0 0.0
    %1162 = vmatprep.subr.mxu0 0.0
    %1163 = vmatpush1.msra.mxu0 0.0
    %1164 = vmatprep.subr.mxu0 0.0
    %1165 = vmatpush1.msra.mxu0 0.0
    %1166 = vmatprep.subr.mxu0 0.0
    %1167 = vmatpush1.msra.mxu0 0.0
    %1168 = vmatprep.subr.mxu0 0.0
    %1169 = vmatpush1.msra.mxu0 0.0
    %1170 = vmatprep.subr.mxu0 0.0
    %1171 = vmatpush1.msra.mxu0 0.0
    %1172 = vmatprep.subr.mxu0 0.0
    %1173 = vmatpush1.msra.mxu0 0.0
    %1174 = vmatprep.subr.mxu0 0.0
    %1175 = vmatpush1.msra.mxu0 0.0
    %1176 = vmatprep.subr.mxu0 0.0
    %1177 = vmatpush1.msra.mxu0 0.0
    %1178 = vmatprep.subr.mxu0 0.0
    %1179 = vmatpush1.msra.mxu0 0.0
    %1180 = vmatprep.subr.mxu0 0.0
    %1181 = vmatpush1.msra.mxu0 %v1141
    %1182 = vmatprep.subr.mxu0 0.0
    %1183 = vmatpush1.msra.mxu0 %v1140
    %1184 = vmatprep.subr.mxu0 0.0
    %1185 = vmatpush1.msra.mxu0 %v1139
    %1186 = vmatprep.subr.mxu0 0.0
    %1187 = vmatpush1.msra.mxu0 %v1138
    %1188 = vmatprep.subr.mxu0 0.0
    %1189 = vmatpush2.msra.mxu0 0.0
    %1190 = vmatprep.subr.mxu0 0.0
    %1191 = vmatpush2.msra.mxu0 0.0
    %1192 = vmatprep.subr.mxu0 0.0
    %1193 = vmatpush2.msra.mxu0 0.0
    %1194 = vmatprep.subr.mxu0 0.0
    %1195 = vmatpush2.msra.mxu0 0.0
    %1196 = vmatprep.subr.mxu0 0.0
    %1197 = vmatpush2.msra.mxu0 0.0
    %1198 = vmatprep.subr.mxu0 0.0
    %1199 = vmatpush2.msra.mxu0 0.0
    %1200 = vmatprep.subr.mxu0 0.0
    %1201 = vmatpush2.msra.mxu0 0.0
    %1202 = vmatprep.subr.mxu0 0.0
    %1203 = vmatpush2.msra.mxu0 0.0
    %1204 = vmatprep.subr.mxu0 0.0
    %1205 = vmatpush2.msra.mxu0 0.0
    %1206 = vmatprep.subr.mxu0 0.0
    %1207 = vmatpush2.msra.mxu0 0.0
    %1208 = vmatprep.subr.mxu0 0.0
    %1209 = vmatpush2.msra.mxu0 0.0
    %1210 = vmatprep.subr.mxu0 0.0
    %1211 = vmatpush2.msra.mxu0 0.0
    %1212 = vmatprep.subr.mxu0 0.0
    %1213 = vmatpush2.msra.mxu0 0.0
    %1214 = vmatprep.subr.mxu0 0.0
    %1215 = vmatpush2.msra.mxu0 0.0
    %1216 = vmatprep.subr.mxu0 0.0
    %1217 = vmatpush2.msra.mxu0 0.0
    %1218 = vmatprep.subr.mxu0 0.0
    %1219 = vmatpush2.msra.mxu0 0.0
    %1220 = vmatprep.mubr.f32.mxu0 0.0
    %1221 = vmatmul.mubr.f32.gmra.mxu0 %v1151
    %v1222 = vpop.f32.mrf.mxu0
    %v1223 = vadd.f32 %v1148, %v1222
    %v1224 = vpop.f32.mrf.mxu0
    %1225 = vmatprep.mubr.f32.mxu0 0.0
    %1226 = vmatmul.mubr.f32.gmra.mxu0 %v1154
    %v1227 = vpop.f32.mrf.mxu0
    %v1228 = vadd.f32 %v1148, %v1227
    %v1229 = vpop.f32.mrf.mxu0
    %1230 = vdwg.mxu0
    %v1231 = vmax.f32 %v1223, 0.0
    %v1232 = vmax.f32 %v1228, 0.0
    %s1233 = scalar_lea.vmem [#allocation5], 64
    %v1234 = vld [vmem:[%s1233] sm:$0xff]
    %v1235 = vld [vmem:[%s1233 + $0x8] sm:$0xff]
    %v1236 = vld [vmem:[%s1233 + $0x10] sm:$0xff]
    %v1237 = vld [vmem:[%s1233 + $0x18] sm:$0xff]
    %s1238 = scalar_lea.vmem %s9, 2
    %v1239 = vld [vmem:[%s1238] sm:$0x1]
    %v1241 = vlaneseq
    %v1242 = vshrl.u32 %v1241, 7
    %v1243 = vsub.s32 0, %v1242
    %v1244 = vrot.slane %v1239, %v1243
    %v1247 = vsel %vm273, %v1231, 0
    %v1250 = vsel %vm273, %v1232, 0
    %1252 = vmatprep.subr.mxu0 0.0
    %1253 = vmatpush1.msra.mxu0 0.0
    %1254 = vmatprep.subr.mxu0 0.0
    %1255 = vmatpush1.msra.mxu0 0.0
    %1256 = vmatprep.subr.mxu0 0.0
    %1257 = vmatpush1.msra.mxu0 0.0
    %1258 = vmatprep.subr.mxu0 0.0
    %1259 = vmatpush1.msra.mxu0 0.0
    %1260 = vmatprep.subr.mxu0 0.0
    %1261 = vmatpush1.msra.mxu0 0.0
    %1262 = vmatprep.subr.mxu0 0.0
    %1263 = vmatpush1.msra.mxu0 0.0
    %1264 = vmatprep.subr.mxu0 0.0
    %1265 = vmatpush1.msra.mxu0 0.0
    %1266 = vmatprep.subr.mxu0 0.0
    %1267 = vmatpush1.msra.mxu0 0.0
    %1268 = vmatprep.subr.mxu0 0.0
    %1269 = vmatpush1.msra.mxu0 0.0
    %1270 = vmatprep.subr.mxu0 0.0
    %1271 = vmatpush1.msra.mxu0 0.0
    %1272 = vmatprep.subr.mxu0 0.0
    %1273 = vmatpush1.msra.mxu0 0.0
    %1274 = vmatprep.subr.mxu0 0.0
    %1275 = vmatpush1.msra.mxu0 0.0
    %1276 = vmatprep.subr.mxu0 0.0
    %1277 = vmatpush1.msra.mxu0 %v1237
    %1278 = vmatprep.subr.mxu0 0.0
    %1279 = vmatpush1.msra.mxu0 %v1236
    %1280 = vmatprep.subr.mxu0 0.0
    %1281 = vmatpush1.msra.mxu0 %v1235
    %1282 = vmatprep.subr.mxu0 0.0
    %1283 = vmatpush1.msra.mxu0 %v1234
    %1284 = vmatprep.subr.mxu0 0.0
    %1285 = vmatpush2.msra.mxu0 0.0
    %1286 = vmatprep.subr.mxu0 0.0
    %1287 = vmatpush2.msra.mxu0 0.0
    %1288 = vmatprep.subr.mxu0 0.0
    %1289 = vmatpush2.msra.mxu0 0.0
    %1290 = vmatprep.subr.mxu0 0.0
    %1291 = vmatpush2.msra.mxu0 0.0
    %1292 = vmatprep.subr.mxu0 0.0
    %1293 = vmatpush2.msra.mxu0 0.0
    %1294 = vmatprep.subr.mxu0 0.0
    %1295 = vmatpush2.msra.mxu0 0.0
    %1296 = vmatprep.subr.mxu0 0.0
    %1297 = vmatpush2.msra.mxu0 0.0
    %1298 = vmatprep.subr.mxu0 0.0
    %1299 = vmatpush2.msra.mxu0 0.0
    %1300 = vmatprep.subr.mxu0 0.0
    %1301 = vmatpush2.msra.mxu0 0.0
    %1302 = vmatprep.subr.mxu0 0.0
    %1303 = vmatpush2.msra.mxu0 0.0
    %1304 = vmatprep.subr.mxu0 0.0
    %1305 = vmatpush2.msra.mxu0 0.0
    %1306 = vmatprep.subr.mxu0 0.0
    %1307 = vmatpush2.msra.mxu0 0.0
    %1308 = vmatprep.subr.mxu0 0.0
    %1309 = vmatpush2.msra.mxu0 0.0
    %1310 = vmatprep.subr.mxu0 0.0
    %1311 = vmatpush2.msra.mxu0 0.0
    %1312 = vmatprep.subr.mxu0 0.0
    %1313 = vmatpush2.msra.mxu0 0.0
    %1314 = vmatprep.subr.mxu0 0.0
    %1315 = vmatpush2.msra.mxu0 0.0
    %1316 = vmatprep.mubr.f32.mxu0 0.0
    %1317 = vmatmul.mubr.f32.gmra.mxu0 %v1247
    %v1318 = vpop.f32.mrf.mxu0
    %v1319 = vadd.f32 %v1244, %v1318
    %v1320 = vpop.f32.mrf.mxu0
    %1321 = vmatprep.mubr.f32.mxu0 0.0
    %1322 = vmatmul.mubr.f32.gmra.mxu0 %v1250
    %v1323 = vpop.f32.mrf.mxu0
    %v1324 = vadd.f32 %v1244, %v1323
    %v1325 = vpop.f32.mrf.mxu0
    %1326 = vdwg.mxu0
    %v1327 = vmax.f32 %v1319, 0.0
    %v1328 = vmax.f32 %v1324, 0.0
    %s1329 = scalar_lea.vmem %s11, 32
    %1330 = vst.msk [vmem:[%s1329] sm:$0xff] %vm273, %v1327
    %1331 = vst.msk [vmem:[%s1329 + $0x8] sm:$0xff] %vm273, %v1328
    %s1332 = scalar_lea.vmem %s4, 3
    %v1333 = vld [vmem:[%s1332] sm:$0x1]
    %v1335 = vlaneseq
    %v1336 = vshrl.u32 %v1335, 7
    %v1337 = vsub.s32 0, %v1336
    %v1338 = vrot.slane %v1333, %v1337
    %v1340 = vmul.f32 %v133, %v1338
    %v1341 = vmul.f32 %v138, %v1338
    %v1342 = vmul.f32 %v143, %v1338
    %v1343 = vmul.f32 %v148, %v1338
    %s1344 = scalar_lea.vmem %s5, 3
    %v1345 = vld [vmem:[%s1344] sm:$0x1]
    %v1347 = vlaneseq
    %v1348 = vshrl.u32 %v1347, 7
    %v1349 = vsub.s32 0, %v1348
    %v1350 = vrot.slane %v1345, %v1349
    %v1352 = vadd.f32 %v1340, %v1350
    %v1353 = vadd.f32 %v1341, %v1350
    %v1354 = vadd.f32 %v1342, %v1350
    %v1355 = vadd.f32 %v1343, %v1350
    %1356 = vmatprep.subr.mxu0 0.0
    %1357 = vmatpush1.msra.mxu0 0.0
    %1358 = vmatprep.subr.mxu0 0.0
    %1359 = vmatpush1.msra.mxu0 0.0
    %1360 = vmatprep.subr.mxu0 0.0
    %1361 = vmatpush1.msra.mxu0 0.0
    %1362 = vmatprep.subr.mxu0 0.0
    %1363 = vmatpush1.msra.mxu0 0.0
    %1364 = vmatprep.subr.mxu0 0.0
    %1365 = vmatpush1.msra.mxu0 0.0
    %1366 = vmatprep.subr.mxu0 0.0
    %1367 = vmatpush1.msra.mxu0 0.0
    %1368 = vmatprep.subr.mxu0 0.0
    %1369 = vmatpush1.msra.mxu0 0.0
    %1370 = vmatprep.subr.mxu0 0.0
    %1371 = vmatpush1.msra.mxu0 0.0
    %1372 = vmatprep.subr.mxu0 0.0
    %1373 = vmatpush1.msra.mxu0 0.0
    %1374 = vmatprep.subr.mxu0 0.0
    %1375 = vmatpush1.msra.mxu0 0.0
    %1376 = vmatprep.subr.mxu0 0.0
    %1377 = vmatpush1.msra.mxu0 0.0
    %1378 = vmatprep.subr.mxu0 0.0
    %1379 = vmatpush1.msra.mxu0 0.0
    %1380 = vmatprep.subr.mxu0 0.0
    %1381 = vmatpush1.msra.mxu0 0.0
    %1382 = vmatprep.subr.mxu0 0.0
    %1383 = vmatpush1.msra.mxu0 0.0
    %1384 = vmatprep.subr.mxu0 0.0
    %1385 = vmatpush1.msra.mxu0 %v1328
    %1386 = vmatprep.subr.mxu0 0.0
    %1387 = vmatpush1.msra.mxu0 %v1327
    %1388 = vmatprep.subr.mxu0 0.0
    %1389 = vmatpush2.msra.mxu0 0.0
    %1390 = vmatprep.subr.mxu0 0.0
    %1391 = vmatpush2.msra.mxu0 0.0
    %1392 = vmatprep.subr.mxu0 0.0
    %1393 = vmatpush2.msra.mxu0 0.0
    %1394 = vmatprep.subr.mxu0 0.0
    %1395 = vmatpush2.msra.mxu0 0.0
    %1396 = vmatprep.subr.mxu0 0.0
    %1397 = vmatpush2.msra.mxu0 0.0
    %1398 = vmatprep.subr.mxu0 0.0
    %1399 = vmatpush2.msra.mxu0 0.0
    %1400 = vmatprep.subr.mxu0 0.0
    %1401 = vmatpush2.msra.mxu0 0.0
    %1402 = vmatprep.subr.mxu0 0.0
    %1403 = vmatpush2.msra.mxu0 0.0
    %1404 = vmatprep.subr.mxu0 0.0
    %1405 = vmatpush2.msra.mxu0 0.0
    %1406 = vmatprep.subr.mxu0 0.0
    %1407 = vmatpush2.msra.mxu0 0.0
    %1408 = vmatprep.subr.mxu0 0.0
    %1409 = vmatpush2.msra.mxu0 0.0
    %1410 = vmatprep.subr.mxu0 0.0
    %1411 = vmatpush2.msra.mxu0 0.0
    %1412 = vmatprep.subr.mxu0 0.0
    %1413 = vmatpush2.msra.mxu0 0.0
    %1414 = vmatprep.subr.mxu0 0.0
    %1415 = vmatpush2.msra.mxu0 0.0
    %1416 = vmatprep.subr.mxu0 0.0
    %1417 = vmatpush2.msra.mxu0 0.0
    %1418 = vmatprep.subr.mxu0 0.0
    %1419 = vmatpush2.msra.mxu0 0.0
    %1420 = vmatprep.mubr.f32.mxu0 0.0
    %1421 = vmatmul.mubr.f32.gmra.mxu0 %v173
    %v1422 = vpop.f32.mrf.mxu0
    %v1423 = vadd.f32 %v1352, %v1422
    %v1424 = vpop.f32.mrf.mxu0
    %1425 = vmatprep.mubr.f32.mxu0 0.0
    %1426 = vmatmul.mubr.f32.gmra.mxu0 %v176
    %v1427 = vpop.f32.mrf.mxu0
    %v1428 = vadd.f32 %v1353, %v1427
    %v1429 = vpop.f32.mrf.mxu0
    %1430 = vmatprep.mubr.f32.mxu0 0.0
    %1431 = vmatmul.mubr.f32.gmra.mxu0 %v179
    %v1432 = vpop.f32.mrf.mxu0
    %v1433 = vadd.f32 %v1354, %v1432
    %v1434 = vpop.f32.mrf.mxu0
    %1435 = vmatprep.mubr.f32.mxu0 0.0
    %1436 = vmatmul.mubr.f32.gmra.mxu0 %v182
    %v1437 = vpop.f32.mrf.mxu0
    %v1438 = vadd.f32 %v1355, %v1437
    %v1439 = vpop.f32.mrf.mxu0
    %1440 = vdwg.mxu0
    %v1441 = vmax.f32 %v1423, 0.0
    %v1442 = vmax.f32 %v1428, 0.0
    %v1443 = vmax.f32 %v1433, 0.0
    %v1444 = vmax.f32 %v1438, 0.0
    %1445 = vmatprep.subr.mxu0 0.0
    %1446 = vmatpush1.msra.mxu0 0.0
    %1447 = vmatprep.subr.mxu0 0.0
    %1448 = vmatpush1.msra.mxu0 0.0
    %1449 = vmatprep.subr.mxu0 0.0
    %1450 = vmatpush1.msra.mxu0 0.0
    %1451 = vmatprep.subr.mxu0 0.0
    %1452 = vmatpush1.msra.mxu0 0.0
    %1453 = vmatprep.subr.mxu0 0.0
    %1454 = vmatpush1.msra.mxu0 0.0
    %1455 = vmatprep.subr.mxu0 0.0
    %1456 = vmatpush1.msra.mxu0 0.0
    %1457 = vmatprep.subr.mxu0 0.0
    %1458 = vmatpush1.msra.mxu0 0.0
    %1459 = vmatprep.subr.mxu0 0.0
    %1460 = vmatpush1.msra.mxu0 0.0
    %1461 = vmatprep.subr.mxu0 0.0
    %1462 = vmatpush1.msra.mxu0 0.0
    %1463 = vmatprep.subr.mxu0 0.0
    %1464 = vmatpush1.msra.mxu0 0.0
    %1465 = vmatprep.subr.mxu0 0.0
    %1466 = vmatpush1.msra.mxu0 0.0
    %1467 = vmatprep.subr.mxu0 0.0
    %1468 = vmatpush1.msra.mxu0 0.0
    %1469 = vmatprep.subr.mxu0 0.0
    %1470 = vmatpush1.msra.mxu0 %v1444
    %1471 = vmatprep.subr.mxu0 0.0
    %1472 = vmatpush1.msra.mxu0 %v1443
    %1473 = vmatprep.subr.mxu0 0.0
    %1474 = vmatpush1.msra.mxu0 %v1442
    %1475 = vmatprep.subr.mxu0 0.0
    %1476 = vmatpush1.msra.mxu0 %v1441
    %1477 = vmatprep.subr.mxu0 0.0
    %1478 = vmatpush2.msra.mxu0 0.0
    %1479 = vmatprep.subr.mxu0 0.0
    %1480 = vmatpush2.msra.mxu0 0.0
    %1481 = vmatprep.subr.mxu0 0.0
    %1482 = vmatpush2.msra.mxu0 0.0
    %1483 = vmatprep.subr.mxu0 0.0
    %1484 = vmatpush2.msra.mxu0 0.0
    %1485 = vmatprep.subr.mxu0 0.0
    %1486 = vmatpush2.msra.mxu0 0.0
    %1487 = vmatprep.subr.mxu0 0.0
    %1488 = vmatpush2.msra.mxu0 0.0
    %1489 = vmatprep.subr.mxu0 0.0
    %1490 = vmatpush2.msra.mxu0 0.0
    %1491 = vmatprep.subr.mxu0 0.0
    %1492 = vmatpush2.msra.mxu0 0.0
    %1493 = vmatprep.subr.mxu0 0.0
    %1494 = vmatpush2.msra.mxu0 0.0
    %1495 = vmatprep.subr.mxu0 0.0
    %1496 = vmatpush2.msra.mxu0 0.0
    %1497 = vmatprep.subr.mxu0 0.0
    %1498 = vmatpush2.msra.mxu0 0.0
    %1499 = vmatprep.subr.mxu0 0.0
    %1500 = vmatpush2.msra.mxu0 0.0
    %1501 = vmatprep.subr.mxu0 0.0
    %1502 = vmatpush2.msra.mxu0 0.0
    %1503 = vmatprep.subr.mxu0 0.0
    %1504 = vmatpush2.msra.mxu0 0.0
    %1505 = vmatprep.subr.mxu0 0.0
    %1506 = vmatpush2.msra.mxu0 0.0
    %1507 = vmatprep.subr.mxu0 0.0
    %1508 = vmatpush2.msra.mxu0 0.0
    %1509 = vmatprep.mubr.f32.mxu0 0.0
    %1510 = vmatmul.mubr.f32.gmra.mxu0 %v275
    %v1511 = vpop.f32.mrf.mxu0
    %v1512 = vadd.f32 0.0, %v1511
    %v1513 = vpop.f32.mrf.mxu0
    %1514 = vmatprep.mubr.f32.mxu0 0.0
    %1515 = vmatmul.mubr.f32.gmra.mxu0 %v278
    %v1516 = vpop.f32.mrf.mxu0
    %v1517 = vadd.f32 0.0, %v1516
    %v1518 = vpop.f32.mrf.mxu0
    %1519 = vdwg.mxu0
    %s1520 = sld [smem:[#allocation7 + $0x3]]
    %s1521 = sadd.f32 %s1520, 1.0
    %v1522 = vstv %s1521
    %v1523 = vmul.f32 %v1522, %v1327
    %v1524 = vmul.f32 %v1522, %v1328
    %v1525 = vadd.f32 %v1523, %v1512
    %v1526 = vadd.f32 %v1524, %v1517
    %s1527 = scalar_lea.vmem [#allocation2], 96
    %v1528 = vld [vmem:[%s1527] sm:$0xff]
    %v1529 = vld [vmem:[%s1527 + $0x8] sm:$0xff]
    %v1530 = vld [vmem:[%s1527 + $0x10] sm:$0xff]
    %v1531 = vld [vmem:[%s1527 + $0x18] sm:$0xff]
    %s1532 = scalar_lea.vmem %s7, 3
    %v1533 = vld [vmem:[%s1532] sm:$0x1]
    %v1535 = vlaneseq
    %v1536 = vshrl.u32 %v1535, 7
    %v1537 = vsub.s32 0, %v1536
    %v1538 = vrot.slane %v1533, %v1537
    %v1541 = vsel %vm273, %v1525, 0
    %v1544 = vsel %vm273, %v1526, 0
    %1546 = vmatprep.subr.mxu0 0.0
    %1547 = vmatpush1.msra.mxu0 0.0
    %1548 = vmatprep.subr.mxu0 0.0
    %1549 = vmatpush1.msra.mxu0 0.0
    %1550 = vmatprep.subr.mxu0 0.0
    %1551 = vmatpush1.msra.mxu0 0.0
    %1552 = vmatprep.subr.mxu0 0.0
    %1553 = vmatpush1.msra.mxu0 0.0
    %1554 = vmatprep.subr.mxu0 0.0
    %1555 = vmatpush1.msra.mxu0 0.0
    %1556 = vmatprep.subr.mxu0 0.0
    %1557 = vmatpush1.msra.mxu0 0.0
    %1558 = vmatprep.subr.mxu0 0.0
    %1559 = vmatpush1.msra.mxu0 0.0
    %1560 = vmatprep.subr.mxu0 0.0
    %1561 = vmatpush1.msra.mxu0 0.0
    %1562 = vmatprep.subr.mxu0 0.0
    %1563 = vmatpush1.msra.mxu0 0.0
    %1564 = vmatprep.subr.mxu0 0.0
    %1565 = vmatpush1.msra.mxu0 0.0
    %1566 = vmatprep.subr.mxu0 0.0
    %1567 = vmatpush1.msra.mxu0 0.0
    %1568 = vmatprep.subr.mxu0 0.0
    %1569 = vmatpush1.msra.mxu0 0.0
    %1570 = vmatprep.subr.mxu0 0.0
    %1571 = vmatpush1.msra.mxu0 %v1531
    %1572 = vmatprep.subr.mxu0 0.0
    %1573 = vmatpush1.msra.mxu0 %v1530
    %1574 = vmatprep.subr.mxu0 0.0
    %1575 = vmatpush1.msra.mxu0 %v1529
    %1576 = vmatprep.subr.mxu0 0.0
    %1577 = vmatpush1.msra.mxu0 %v1528
    %1578 = vmatprep.subr.mxu0 0.0
    %1579 = vmatpush2.msra.mxu0 0.0
    %1580 = vmatprep.subr.mxu0 0.0
    %1581 = vmatpush2.msra.mxu0 0.0
    %1582 = vmatprep.subr.mxu0 0.0
    %1583 = vmatpush2.msra.mxu0 0.0
    %1584 = vmatprep.subr.mxu0 0.0
    %1585 = vmatpush2.msra.mxu0 0.0
    %1586 = vmatprep.subr.mxu0 0.0
    %1587 = vmatpush2.msra.mxu0 0.0
    %1588 = vmatprep.subr.mxu0 0.0
    %1589 = vmatpush2.msra.mxu0 0.0
    %1590 = vmatprep.subr.mxu0 0.0
    %1591 = vmatpush2.msra.mxu0 0.0
    %1592 = vmatprep.subr.mxu0 0.0
    %1593 = vmatpush2.msra.mxu0 0.0
    %1594 = vmatprep.subr.mxu0 0.0
    %1595 = vmatpush2.msra.mxu0 0.0
    %1596 = vmatprep.subr.mxu0 0.0
    %1597 = vmatpush2.msra.mxu0 0.0
    %1598 = vmatprep.subr.mxu0 0.0
    %1599 = vmatpush2.msra.mxu0 0.0
    %1600 = vmatprep.subr.mxu0 0.0
    %1601 = vmatpush2.msra.mxu0 0.0
    %1602 = vmatprep.subr.mxu0 0.0
    %1603 = vmatpush2.msra.mxu0 0.0
    %1604 = vmatprep.subr.mxu0 0.0
    %1605 = vmatpush2.msra.mxu0 0.0
    %1606 = vmatprep.subr.mxu0 0.0
    %1607 = vmatpush2.msra.mxu0 0.0
    %1608 = vmatprep.subr.mxu0 0.0
    %1609 = vmatpush2.msra.mxu0 0.0
    %1610 = vmatprep.mubr.f32.mxu0 0.0
    %1611 = vmatmul.mubr.f32.gmra.mxu0 %v1541
    %v1612 = vpop.f32.mrf.mxu0
    %v1613 = vadd.f32 %v1538, %v1612
    %v1614 = vpop.f32.mrf.mxu0
    %1615 = vmatprep.mubr.f32.mxu0 0.0
    %1616 = vmatmul.mubr.f32.gmra.mxu0 %v1544
    %v1617 = vpop.f32.mrf.mxu0
    %v1618 = vadd.f32 %v1538, %v1617
    %v1619 = vpop.f32.mrf.mxu0
    %1620 = vdwg.mxu0
    %v1621 = vmax.f32 %v1613, 0.0
    %v1622 = vmax.f32 %v1618, 0.0
    %s1623 = scalar_lea.vmem [#allocation5], 96
    %v1624 = vld [vmem:[%s1623] sm:$0xff]
    %v1625 = vld [vmem:[%s1623 + $0x8] sm:$0xff]
    %v1626 = vld [vmem:[%s1623 + $0x10] sm:$0xff]
    %v1627 = vld [vmem:[%s1623 + $0x18] sm:$0xff]
    %s1628 = scalar_lea.vmem %s9, 3
    %v1629 = vld [vmem:[%s1628] sm:$0x1]
    %v1631 = vlaneseq
    %v1632 = vshrl.u32 %v1631, 7
    %v1633 = vsub.s32 0, %v1632
    %v1634 = vrot.slane %v1629, %v1633
    %v1637 = vsel %vm273, %v1621, 0
    %v1640 = vsel %vm273, %v1622, 0
    %1642 = vmatprep.subr.mxu0 0.0
    %1643 = vmatpush1.msra.mxu0 0.0
    %1644 = vmatprep.subr.mxu0 0.0
    %1645 = vmatpush1.msra.mxu0 0.0
    %1646 = vmatprep.subr.mxu0 0.0
    %1647 = vmatpush1.msra.mxu0 0.0
    %1648 = vmatprep.subr.mxu0 0.0
    %1649 = vmatpush1.msra.mxu0 0.0
    %1650 = vmatprep.subr.mxu0 0.0
    %1651 = vmatpush1.msra.mxu0 0.0
    %1652 = vmatprep.subr.mxu0 0.0
    %1653 = vmatpush1.msra.mxu0 0.0
    %1654 = vmatprep.subr.mxu0 0.0
    %1655 = vmatpush1.msra.mxu0 0.0
    %1656 = vmatprep.subr.mxu0 0.0
    %1657 = vmatpush1.msra.mxu0 0.0
    %1658 = vmatprep.subr.mxu0 0.0
    %1659 = vmatpush1.msra.mxu0 0.0
    %1660 = vmatprep.subr.mxu0 0.0
    %1661 = vmatpush1.msra.mxu0 0.0
    %1662 = vmatprep.subr.mxu0 0.0
    %1663 = vmatpush1.msra.mxu0 0.0
    %1664 = vmatprep.subr.mxu0 0.0
    %1665 = vmatpush1.msra.mxu0 0.0
    %1666 = vmatprep.subr.mxu0 0.0
    %1667 = vmatpush1.msra.mxu0 %v1627
    %1668 = vmatprep.subr.mxu0 0.0
    %1669 = vmatpush1.msra.mxu0 %v1626
    %1670 = vmatprep.subr.mxu0 0.0
    %1671 = vmatpush1.msra.mxu0 %v1625
    %1672 = vmatprep.subr.mxu0 0.0
    %1673 = vmatpush1.msra.mxu0 %v1624
    %1674 = vmatprep.subr.mxu0 0.0
    %1675 = vmatpush2.msra.mxu0 0.0
    %1676 = vmatprep.subr.mxu0 0.0
    %1677 = vmatpush2.msra.mxu0 0.0
    %1678 = vmatprep.subr.mxu0 0.0
    %1679 = vmatpush2.msra.mxu0 0.0
    %1680 = vmatprep.subr.mxu0 0.0
    %1681 = vmatpush2.msra.mxu0 0.0
    %1682 = vmatprep.subr.mxu0 0.0
    %1683 = vmatpush2.msra.mxu0 0.0
    %1684 = vmatprep.subr.mxu0 0.0
    %1685 = vmatpush2.msra.mxu0 0.0
    %1686 = vmatprep.subr.mxu0 0.0
    %1687 = vmatpush2.msra.mxu0 0.0
    %1688 = vmatprep.subr.mxu0 0.0
    %1689 = vmatpush2.msra.mxu0 0.0
    %1690 = vmatprep.subr.mxu0 0.0
    %1691 = vmatpush2.msra.mxu0 0.0
    %1692 = vmatprep.subr.mxu0 0.0
    %1693 = vmatpush2.msra.mxu0 0.0
    %1694 = vmatprep.subr.mxu0 0.0
    %1695 = vmatpush2.msra.mxu0 0.0
    %1696 = vmatprep.subr.mxu0 0.0
    %1697 = vmatpush2.msra.mxu0 0.0
    %1698 = vmatprep.subr.mxu0 0.0
    %1699 = vmatpush2.msra.mxu0 0.0
    %1700 = vmatprep.subr.mxu0 0.0
    %1701 = vmatpush2.msra.mxu0 0.0
    %1702 = vmatprep.subr.mxu0 0.0
    %1703 = vmatpush2.msra.mxu0 0.0
    %1704 = vmatprep.subr.mxu0 0.0
    %1705 = vmatpush2.msra.mxu0 0.0
    %1706 = vmatprep.mubr.f32.mxu0 0.0
    %1707 = vmatmul.mubr.f32.gmra.mxu0 %v1637
    %v1708 = vpop.f32.mrf.mxu0
    %v1709 = vadd.f32 %v1634, %v1708
    %v1710 = vpop.f32.mrf.mxu0
    %1711 = vmatprep.mubr.f32.mxu0 0.0
    %1712 = vmatmul.mubr.f32.gmra.mxu0 %v1640
    %v1713 = vpop.f32.mrf.mxu0
    %v1714 = vadd.f32 %v1634, %v1713
    %v1715 = vpop.f32.mrf.mxu0
    %1716 = vdwg.mxu0
    %v1717 = vmax.f32 %v1709, 0.0
    %v1718 = vmax.f32 %v1714, 0.0
    %s1719 = scalar_lea.vmem %s11, 48
    %1720 = vst.msk [vmem:[%s1719] sm:$0xff] %vm273, %v1717
    %1721 = vst.msk [vmem:[%s1719 + $0x8] sm:$0xff] %vm273, %v1718
    %s1722 = scalar_lea.vmem %s4, 4
    %v1723 = vld [vmem:[%s1722] sm:$0x1]
    %v1725 = vlaneseq
    %v1726 = vshrl.u32 %v1725, 7
    %v1727 = vsub.s32 0, %v1726
    %v1728 = vrot.slane %v1723, %v1727
    %v1730 = vmul.f32 %v133, %v1728
    %v1731 = vmul.f32 %v138, %v1728
    %v1732 = vmul.f32 %v143, %v1728
    %v1733 = vmul.f32 %v148, %v1728
    %s1734 = scalar_lea.vmem %s5, 4
    %v1735 = vld [vmem:[%s1734] sm:$0x1]
    %v1737 = vlaneseq
    %v1738 = vshrl.u32 %v1737, 7
    %v1739 = vsub.s32 0, %v1738
    %v1740 = vrot.slane %v1735, %v1739
    %v1742 = vadd.f32 %v1730, %v1740
    %v1743 = vadd.f32 %v1731, %v1740
    %v1744 = vadd.f32 %v1732, %v1740
    %v1745 = vadd.f32 %v1733, %v1740
    %1746 = vmatprep.subr.mxu0 0.0
    %1747 = vmatpush1.msra.mxu0 0.0
    %1748 = vmatprep.subr.mxu0 0.0
    %1749 = vmatpush1.msra.mxu0 0.0
    %1750 = vmatprep.subr.mxu0 0.0
    %1751 = vmatpush1.msra.mxu0 0.0
    %1752 = vmatprep.subr.mxu0 0.0
    %1753 = vmatpush1.msra.mxu0 0.0
    %1754 = vmatprep.subr.mxu0 0.0
    %1755 = vmatpush1.msra.mxu0 0.0
    %1756 = vmatprep.subr.mxu0 0.0
    %1757 = vmatpush1.msra.mxu0 0.0
    %1758 = vmatprep.subr.mxu0 0.0
    %1759 = vmatpush1.msra.mxu0 0.0
    %1760 = vmatprep.subr.mxu0 0.0
    %1761 = vmatpush1.msra.mxu0 0.0
    %1762 = vmatprep.subr.mxu0 0.0
    %1763 = vmatpush1.msra.mxu0 0.0
    %1764 = vmatprep.subr.mxu0 0.0
    %1765 = vmatpush1.msra.mxu0 0.0
    %1766 = vmatprep.subr.mxu0 0.0
    %1767 = vmatpush1.msra.mxu0 0.0
    %1768 = vmatprep.subr.mxu0 0.0
    %1769 = vmatpush1.msra.mxu0 0.0
    %1770 = vmatprep.subr.mxu0 0.0
    %1771 = vmatpush1.msra.mxu0 0.0
    %1772 = vmatprep.subr.mxu0 0.0
    %1773 = vmatpush1.msra.mxu0 0.0
    %1774 = vmatprep.subr.mxu0 0.0
    %1775 = vmatpush1.msra.mxu0 %v1718
    %1776 = vmatprep.subr.mxu0 0.0
    %1777 = vmatpush1.msra.mxu0 %v1717
    %1778 = vmatprep.subr.mxu0 0.0
    %1779 = vmatpush2.msra.mxu0 0.0
    %1780 = vmatprep.subr.mxu0 0.0
    %1781 = vmatpush2.msra.mxu0 0.0
    %1782 = vmatprep.subr.mxu0 0.0
    %1783 = vmatpush2.msra.mxu0 0.0
    %1784 = vmatprep.subr.mxu0 0.0
    %1785 = vmatpush2.msra.mxu0 0.0
    %1786 = vmatprep.subr.mxu0 0.0
    %1787 = vmatpush2.msra.mxu0 0.0
    %1788 = vmatprep.subr.mxu0 0.0
    %1789 = vmatpush2.msra.mxu0 0.0
    %1790 = vmatprep.subr.mxu0 0.0
    %1791 = vmatpush2.msra.mxu0 0.0
    %1792 = vmatprep.subr.mxu0 0.0
    %1793 = vmatpush2.msra.mxu0 0.0
    %1794 = vmatprep.subr.mxu0 0.0
    %1795 = vmatpush2.msra.mxu0 0.0
    %1796 = vmatprep.subr.mxu0 0.0
    %1797 = vmatpush2.msra.mxu0 0.0
    %1798 = vmatprep.subr.mxu0 0.0
    %1799 = vmatpush2.msra.mxu0 0.0
    %1800 = vmatprep.subr.mxu0 0.0
    %1801 = vmatpush2.msra.mxu0 0.0
    %1802 = vmatprep.subr.mxu0 0.0
    %1803 = vmatpush2.msra.mxu0 0.0
    %1804 = vmatprep.subr.mxu0 0.0
    %1805 = vmatpush2.msra.mxu0 0.0
    %1806 = vmatprep.subr.mxu0 0.0
    %1807 = vmatpush2.msra.mxu0 0.0
    %1808 = vmatprep.subr.mxu0 0.0
    %1809 = vmatpush2.msra.mxu0 0.0
    %1810 = vmatprep.mubr.f32.mxu0 0.0
    %1811 = vmatmul.mubr.f32.gmra.mxu0 %v173
    %v1812 = vpop.f32.mrf.mxu0
    %v1813 = vadd.f32 %v1742, %v1812
    %v1814 = vpop.f32.mrf.mxu0
    %1815 = vmatprep.mubr.f32.mxu0 0.0
    %1816 = vmatmul.mubr.f32.gmra.mxu0 %v176
    %v1817 = vpop.f32.mrf.mxu0
    %v1818 = vadd.f32 %v1743, %v1817
    %v1819 = vpop.f32.mrf.mxu0
    %1820 = vmatprep.mubr.f32.mxu0 0.0
    %1821 = vmatmul.mubr.f32.gmra.mxu0 %v179
    %v1822 = vpop.f32.mrf.mxu0
    %v1823 = vadd.f32 %v1744, %v1822
    %v1824 = vpop.f32.mrf.mxu0
    %1825 = vmatprep.mubr.f32.mxu0 0.0
    %1826 = vmatmul.mubr.f32.gmra.mxu0 %v182
    %v1827 = vpop.f32.mrf.mxu0
    %v1828 = vadd.f32 %v1745, %v1827
    %v1829 = vpop.f32.mrf.mxu0
    %1830 = vdwg.mxu0
    %v1831 = vmax.f32 %v1813, 0.0
    %v1832 = vmax.f32 %v1818, 0.0
    %v1833 = vmax.f32 %v1823, 0.0
    %v1834 = vmax.f32 %v1828, 0.0
    %1835 = vmatprep.subr.mxu0 0.0
    %1836 = vmatpush1.msra.mxu0 0.0
    %1837 = vmatprep.subr.mxu0 0.0
    %1838 = vmatpush1.msra.mxu0 0.0
    %1839 = vmatprep.subr.mxu0 0.0
    %1840 = vmatpush1.msra.mxu0 0.0
    %1841 = vmatprep.subr.mxu0 0.0
    %1842 = vmatpush1.msra.mxu0 0.0
    %1843 = vmatprep.subr.mxu0 0.0
    %1844 = vmatpush1.msra.mxu0 0.0
    %1845 = vmatprep.subr.mxu0 0.0
    %1846 = vmatpush1.msra.mxu0 0.0
    %1847 = vmatprep.subr.mxu0 0.0
    %1848 = vmatpush1.msra.mxu0 0.0
    %1849 = vmatprep.subr.mxu0 0.0
    %1850 = vmatpush1.msra.mxu0 0.0
    %1851 = vmatprep.subr.mxu0 0.0
    %1852 = vmatpush1.msra.mxu0 0.0
    %1853 = vmatprep.subr.mxu0 0.0
    %1854 = vmatpush1.msra.mxu0 0.0
    %1855 = vmatprep.subr.mxu0 0.0
    %1856 = vmatpush1.msra.mxu0 0.0
    %1857 = vmatprep.subr.mxu0 0.0
    %1858 = vmatpush1.msra.mxu0 0.0
    %1859 = vmatprep.subr.mxu0 0.0
    %1860 = vmatpush1.msra.mxu0 %v1834
    %1861 = vmatprep.subr.mxu0 0.0
    %1862 = vmatpush1.msra.mxu0 %v1833
    %1863 = vmatprep.subr.mxu0 0.0
    %1864 = vmatpush1.msra.mxu0 %v1832
    %1865 = vmatprep.subr.mxu0 0.0
    %1866 = vmatpush1.msra.mxu0 %v1831
    %1867 = vmatprep.subr.mxu0 0.0
    %1868 = vmatpush2.msra.mxu0 0.0
    %1869 = vmatprep.subr.mxu0 0.0
    %1870 = vmatpush2.msra.mxu0 0.0
    %1871 = vmatprep.subr.mxu0 0.0
    %1872 = vmatpush2.msra.mxu0 0.0
    %1873 = vmatprep.subr.mxu0 0.0
    %1874 = vmatpush2.msra.mxu0 0.0
    %1875 = vmatprep.subr.mxu0 0.0
    %1876 = vmatpush2.msra.mxu0 0.0
    %1877 = vmatprep.subr.mxu0 0.0
    %1878 = vmatpush2.msra.mxu0 0.0
    %1879 = vmatprep.subr.mxu0 0.0
    %1880 = vmatpush2.msra.mxu0 0.0
    %1881 = vmatprep.subr.mxu0 0.0
    %1882 = vmatpush2.msra.mxu0 0.0
    %1883 = vmatprep.subr.mxu0 0.0
    %1884 = vmatpush2.msra.mxu0 0.0
    %1885 = vmatprep.subr.mxu0 0.0
    %1886 = vmatpush2.msra.mxu0 0.0
    %1887 = vmatprep.subr.mxu0 0.0
    %1888 = vmatpush2.msra.mxu0 0.0
    %1889 = vmatprep.subr.mxu0 0.0
    %1890 = vmatpush2.msra.mxu0 0.0
    %1891 = vmatprep.subr.mxu0 0.0
    %1892 = vmatpush2.msra.mxu0 0.0
    %1893 = vmatprep.subr.mxu0 0.0
    %1894 = vmatpush2.msra.mxu0 0.0
    %1895 = vmatprep.subr.mxu0 0.0
    %1896 = vmatpush2.msra.mxu0 0.0
    %1897 = vmatprep.subr.mxu0 0.0
    %1898 = vmatpush2.msra.mxu0 0.0
    %1899 = vmatprep.mubr.f32.mxu0 0.0
    %1900 = vmatmul.mubr.f32.gmra.mxu0 %v275
    %v1901 = vpop.f32.mrf.mxu0
    %v1902 = vadd.f32 0.0, %v1901
    %v1903 = vpop.f32.mrf.mxu0
    %1904 = vmatprep.mubr.f32.mxu0 0.0
    %1905 = vmatmul.mubr.f32.gmra.mxu0 %v278
    %v1906 = vpop.f32.mrf.mxu0
    %v1907 = vadd.f32 0.0, %v1906
    %v1908 = vpop.f32.mrf.mxu0
    %1909 = vdwg.mxu0
    %s1910 = sld [smem:[#allocation7 + $0x4]]
    %s1911 = sadd.f32 %s1910, 1.0
    %v1912 = vstv %s1911
    %v1913 = vmul.f32 %v1912, %v1717
    %v1914 = vmul.f32 %v1912, %v1718
    %v1915 = vadd.f32 %v1913, %v1902
    %v1916 = vadd.f32 %v1914, %v1907
    %s1917 = scalar_lea.vmem [#allocation2], 128
    %v1918 = vld [vmem:[%s1917] sm:$0xff]
    %v1919 = vld [vmem:[%s1917 + $0x8] sm:$0xff]
    %v1920 = vld [vmem:[%s1917 + $0x10] sm:$0xff]
    %v1921 = vld [vmem:[%s1917 + $0x18] sm:$0xff]
    %s1922 = scalar_lea.vmem %s7, 4
    %v1923 = vld [vmem:[%s1922] sm:$0x1]
    %v1925 = vlaneseq
    %v1926 = vshrl.u32 %v1925, 7
    %v1927 = vsub.s32 0, %v1926
    %v1928 = vrot.slane %v1923, %v1927
    %v1931 = vsel %vm273, %v1915, 0
    %v1934 = vsel %vm273, %v1916, 0
    %1936 = vmatprep.subr.mxu0 0.0
    %1937 = vmatpush1.msra.mxu0 0.0
    %1938 = vmatprep.subr.mxu0 0.0
    %1939 = vmatpush1.msra.mxu0 0.0
    %1940 = vmatprep.subr.mxu0 0.0
    %1941 = vmatpush1.msra.mxu0 0.0
    %1942 = vmatprep.subr.mxu0 0.0
    %1943 = vmatpush1.msra.mxu0 0.0
    %1944 = vmatprep.subr.mxu0 0.0
    %1945 = vmatpush1.msra.mxu0 0.0
    %1946 = vmatprep.subr.mxu0 0.0
    %1947 = vmatpush1.msra.mxu0 0.0
    %1948 = vmatprep.subr.mxu0 0.0
    %1949 = vmatpush1.msra.mxu0 0.0
    %1950 = vmatprep.subr.mxu0 0.0
    %1951 = vmatpush1.msra.mxu0 0.0
    %1952 = vmatprep.subr.mxu0 0.0
    %1953 = vmatpush1.msra.mxu0 0.0
    %1954 = vmatprep.subr.mxu0 0.0
    %1955 = vmatpush1.msra.mxu0 0.0
    %1956 = vmatprep.subr.mxu0 0.0
    %1957 = vmatpush1.msra.mxu0 0.0
    %1958 = vmatprep.subr.mxu0 0.0
    %1959 = vmatpush1.msra.mxu0 0.0
    %1960 = vmatprep.subr.mxu0 0.0
    %1961 = vmatpush1.msra.mxu0 %v1921
    %1962 = vmatprep.subr.mxu0 0.0
    %1963 = vmatpush1.msra.mxu0 %v1920
    %1964 = vmatprep.subr.mxu0 0.0
    %1965 = vmatpush1.msra.mxu0 %v1919
    %1966 = vmatprep.subr.mxu0 0.0
    %1967 = vmatpush1.msra.mxu0 %v1918
    %1968 = vmatprep.subr.mxu0 0.0
    %1969 = vmatpush2.msra.mxu0 0.0
    %1970 = vmatprep.subr.mxu0 0.0
    %1971 = vmatpush2.msra.mxu0 0.0
    %1972 = vmatprep.subr.mxu0 0.0
    %1973 = vmatpush2.msra.mxu0 0.0
    %1974 = vmatprep.subr.mxu0 0.0
    %1975 = vmatpush2.msra.mxu0 0.0
    %1976 = vmatprep.subr.mxu0 0.0
    %1977 = vmatpush2.msra.mxu0 0.0
    %1978 = vmatprep.subr.mxu0 0.0
    %1979 = vmatpush2.msra.mxu0 0.0
    %1980 = vmatprep.subr.mxu0 0.0
    %1981 = vmatpush2.msra.mxu0 0.0
    %1982 = vmatprep.subr.mxu0 0.0
    %1983 = vmatpush2.msra.mxu0 0.0
    %1984 = vmatprep.subr.mxu0 0.0
    %1985 = vmatpush2.msra.mxu0 0.0
    %1986 = vmatprep.subr.mxu0 0.0
    %1987 = vmatpush2.msra.mxu0 0.0
    %1988 = vmatprep.subr.mxu0 0.0
    %1989 = vmatpush2.msra.mxu0 0.0
    %1990 = vmatprep.subr.mxu0 0.0
    %1991 = vmatpush2.msra.mxu0 0.0
    %1992 = vmatprep.subr.mxu0 0.0
    %1993 = vmatpush2.msra.mxu0 0.0
    %1994 = vmatprep.subr.mxu0 0.0
    %1995 = vmatpush2.msra.mxu0 0.0
    %1996 = vmatprep.subr.mxu0 0.0
    %1997 = vmatpush2.msra.mxu0 0.0
    %1998 = vmatprep.subr.mxu0 0.0
    %1999 = vmatpush2.msra.mxu0 0.0
    %2000 = vmatprep.mubr.f32.mxu0 0.0
    %2001 = vmatmul.mubr.f32.gmra.mxu0 %v1931
    %v2002 = vpop.f32.mrf.mxu0
    %v2003 = vadd.f32 %v1928, %v2002
    %v2004 = vpop.f32.mrf.mxu0
    %2005 = vmatprep.mubr.f32.mxu0 0.0
    %2006 = vmatmul.mubr.f32.gmra.mxu0 %v1934
    %v2007 = vpop.f32.mrf.mxu0
    %v2008 = vadd.f32 %v1928, %v2007
    %v2009 = vpop.f32.mrf.mxu0
    %2010 = vdwg.mxu0
    %v2011 = vmax.f32 %v2003, 0.0
    %v2012 = vmax.f32 %v2008, 0.0
    %s2013 = scalar_lea.vmem [#allocation5], 128
    %v2014 = vld [vmem:[%s2013] sm:$0xff]
    %v2015 = vld [vmem:[%s2013 + $0x8] sm:$0xff]
    %v2016 = vld [vmem:[%s2013 + $0x10] sm:$0xff]
    %v2017 = vld [vmem:[%s2013 + $0x18] sm:$0xff]
    %s2018 = scalar_lea.vmem %s9, 4
    %v2019 = vld [vmem:[%s2018] sm:$0x1]
    %v2021 = vlaneseq
    %v2022 = vshrl.u32 %v2021, 7
    %v2023 = vsub.s32 0, %v2022
    %v2024 = vrot.slane %v2019, %v2023
    %v2027 = vsel %vm273, %v2011, 0
    %v2030 = vsel %vm273, %v2012, 0
    %2032 = vmatprep.subr.mxu0 0.0
    %2033 = vmatpush1.msra.mxu0 0.0
    %2034 = vmatprep.subr.mxu0 0.0
    %2035 = vmatpush1.msra.mxu0 0.0
    %2036 = vmatprep.subr.mxu0 0.0
    %2037 = vmatpush1.msra.mxu0 0.0
    %2038 = vmatprep.subr.mxu0 0.0
    %2039 = vmatpush1.msra.mxu0 0.0
    %2040 = vmatprep.subr.mxu0 0.0
    %2041 = vmatpush1.msra.mxu0 0.0
    %2042 = vmatprep.subr.mxu0 0.0
    %2043 = vmatpush1.msra.mxu0 0.0
    %2044 = vmatprep.subr.mxu0 0.0
    %2045 = vmatpush1.msra.mxu0 0.0
    %2046 = vmatprep.subr.mxu0 0.0
    %2047 = vmatpush1.msra.mxu0 0.0
    %2048 = vmatprep.subr.mxu0 0.0
    %2049 = vmatpush1.msra.mxu0 0.0
    %2050 = vmatprep.subr.mxu0 0.0
    %2051 = vmatpush1.msra.mxu0 0.0
    %2052 = vmatprep.subr.mxu0 0.0
    %2053 = vmatpush1.msra.mxu0 0.0
    %2054 = vmatprep.subr.mxu0 0.0
    %2055 = vmatpush1.msra.mxu0 0.0
    %2056 = vmatprep.subr.mxu0 0.0
    %2057 = vmatpush1.msra.mxu0 %v2017
    %2058 = vmatprep.subr.mxu0 0.0
    %2059 = vmatpush1.msra.mxu0 %v2016
    %2060 = vmatprep.subr.mxu0 0.0
    %2061 = vmatpush1.msra.mxu0 %v2015
    %2062 = vmatprep.subr.mxu0 0.0
    %2063 = vmatpush1.msra.mxu0 %v2014
    %2064 = vmatprep.subr.mxu0 0.0
    %2065 = vmatpush2.msra.mxu0 0.0
    %2066 = vmatprep.subr.mxu0 0.0
    %2067 = vmatpush2.msra.mxu0 0.0
    %2068 = vmatprep.subr.mxu0 0.0
    %2069 = vmatpush2.msra.mxu0 0.0
    %2070 = vmatprep.subr.mxu0 0.0
    %2071 = vmatpush2.msra.mxu0 0.0
    %2072 = vmatprep.subr.mxu0 0.0
    %2073 = vmatpush2.msra.mxu0 0.0
    %2074 = vmatprep.subr.mxu0 0.0
    %2075 = vmatpush2.msra.mxu0 0.0
    %2076 = vmatprep.subr.mxu0 0.0
    %2077 = vmatpush2.msra.mxu0 0.0
    %2078 = vmatprep.subr.mxu0 0.0
    %2079 = vmatpush2.msra.mxu0 0.0
    %2080 = vmatprep.subr.mxu0 0.0
    %2081 = vmatpush2.msra.mxu0 0.0
    %2082 = vmatprep.subr.mxu0 0.0
    %2083 = vmatpush2.msra.mxu0 0.0
    %2084 = vmatprep.subr.mxu0 0.0
    %2085 = vmatpush2.msra.mxu0 0.0
    %2086 = vmatprep.subr.mxu0 0.0
    %2087 = vmatpush2.msra.mxu0 0.0
    %2088 = vmatprep.subr.mxu0 0.0
    %2089 = vmatpush2.msra.mxu0 0.0
    %2090 = vmatprep.subr.mxu0 0.0
    %2091 = vmatpush2.msra.mxu0 0.0
    %2092 = vmatprep.subr.mxu0 0.0
    %2093 = vmatpush2.msra.mxu0 0.0
    %2094 = vmatprep.subr.mxu0 0.0
    %2095 = vmatpush2.msra.mxu0 0.0
    %2096 = vmatprep.mubr.f32.mxu0 0.0
    %2097 = vmatmul.mubr.f32.gmra.mxu0 %v2027
    %v2098 = vpop.f32.mrf.mxu0
    %v2099 = vadd.f32 %v2024, %v2098
    %v2100 = vpop.f32.mrf.mxu0
    %2101 = vmatprep.mubr.f32.mxu0 0.0
    %2102 = vmatmul.mubr.f32.gmra.mxu0 %v2030
    %v2103 = vpop.f32.mrf.mxu0
    %v2104 = vadd.f32 %v2024, %v2103
    %v2105 = vpop.f32.mrf.mxu0
    %2106 = vdwg.mxu0
    %v2107 = vmax.f32 %v2099, 0.0
    %v2108 = vmax.f32 %v2104, 0.0
    %s2109 = scalar_lea.vmem %s11, 64
    %2110 = vst.msk [vmem:[%s2109] sm:$0xff] %vm273, %v2107
    %2111 = vst.msk [vmem:[%s2109 + $0x8] sm:$0xff] %vm273, %v2108
    // Predicated region
    $region58: #{gine_forward.2} parent=1 // pred_check
      _
    $region59: #{gine_forward.2} parent=1 // pred_check_branch
      %2113 = sbr.rel (0) target = $region61
    $region60: #{gine_forward.2} parent=1 // pred_region
      _
    $region61: #{gine_forward.2} parent=1 // pred_fallthru
      _
    // Predicated region
    $region62: #{gine_forward.2} parent=1 // pred_check
      _
    $region63: #{gine_forward.2} parent=1 // pred_check_branch
      %2115 = sbr.rel (0) target = $region65
    $region64: #{gine_forward.2} parent=1 // pred_region
      _
    $region65: #{gine_forward.2} parent=1 // pred_fallthru
      _
    %2116 = vsyncpa [#allocation3], 1
    %2117 = vsyncpa [#allocation6], 1
    %2118 = vsyncpa [#allocation4], 1

</llo_original>
